<compile_context>
chip_gen: v6e
topology: v6e:2x2x1
jax: 0.10.0
libtpu: 0.0.40
codegen_flags: <defaults>
</compile_context>

<pallas_src>
import functools

import jax
import jax.numpy as jnp
from jax import lax
from jax.experimental import pallas as pl
from jax.experimental.pallas import tpu as pltpu


def _round_up(x, m):
    return ((x + m - 1) // m) * m


def _lstm_stack_kernel(emb_ref, wih0_ref, wih_ref, whh_ref, bias_ref,
                       hN_ref, cN_ref,
                       gx_buf, x_buf,
                       *, hidden_pad, seq_len, batch_block, chunk_steps):
    """Grid = (batch_block_idx, layer).  One grid step == one LSTM layer for
    one batch block.  Layer axis is sequential ("arbitrary"); batch-block axis
    is "parallel" (rows are independent -> v7x two-TC split).

    emb_ref  : (1, S*Bc, Ep)  bf16  embedded source sequence for this block
    wih0_ref : (Ep, 4Hp)      bf16  layer-0 W_ih^T   (gate order [i, f, o, g])
    wih_ref  : (1, Hp, 4Hp)   bf16  layer-l W_ih^T (l>=1; block l-1 of stack)
    whh_ref  : (1, Hp, 4Hp)   bf16  layer-l W_hh^T
    bias_ref : (1, 1, 4Hp)    f32   layer-l (b_ih + b_hh)
    hN_ref   : (1, Bc, Hp)    f32   final hidden state of this layer/block
    cN_ref   : (1, Bc, Hp)    f32   final cell state of this layer/block
    gx_buf   : VMEM (2, T*Bc, 4Hp) f32  double-buffered chunk input projection
    x_buf    : VMEM (S*Bc, Hp) bf16 this layer's outputs (next layer's input)
    """
    layer = pl.program_id(1)
    Hp = hidden_pad
    Bc = batch_block
    T = chunk_steps
    n_chunks = seq_len // T
    rows = T * Bc                       # rows per chunk (time-major, B-contig)

    def project_chunk(c_idx, slot):
        """Time-independent input projection of one chunk (pure MXU work)."""
        base = pl.multiple_of(c_idx * rows, rows)
        bias = bias_ref[0]              # (1, 4Hp) f32

        @pl.when(layer == 0)
        def _():
            xin = emb_ref[0, pl.ds(base, rows), :]                 # (rows, Ep)
            gx_buf[slot] = jnp.dot(
                xin, wih0_ref[...],
                preferred_element_type=jnp.float32) + bias

        @pl.when(layer > 0)
        def _():
            xin = x_buf[pl.ds(base, rows), :]                      # (rows, Hp)
            gx_buf[slot] = jnp.dot(
                xin, wih_ref[0],
                preferred_element_type=jnp.float32) + bias

    project_chunk(0, 0)                 # prologue: chunk 0 -> slot 0

    def chunk_body(c_idx, carry):
        h, c = carry
        slot = c_idx % 2

        # Look-ahead: project the NEXT chunk into the other half of gx_buf.
        # It depends only on the previous layer's activations, so its MXU work
        # can interleave with this chunk's latency-bound recurrence.
        @pl.when(c_idx + 1 < n_chunks)
        def _():
            project_chunk(c_idx + 1, 1 - slot)

        def step(t, hc):
            h, c = hc
            row = pl.multiple_of(t * Bc, Bc)
            g = gx_buf[slot, pl.ds(row, Bc), :] + jnp.dot(
                h.astype(jnp.bfloat16), whh_ref[0],
                preferred_element_type=jnp.float32)                # (Bc, 4Hp)
            # Gates permuted wrapper-side to [i, f, o, g]: one sigmoid over the
            # contiguous (Bc, 3Hp) slice, one tanh over the last Hp columns;
            # every slice boundary is 128-lane aligned (Hp % 128 == 0).
            sg = jax.nn.sigmoid(g[:, :3 * Hp])
            i_g = sg[:, 0 * Hp:1 * Hp]
            f_g = sg[:, 1 * Hp:2 * Hp]
            o_g = sg[:, 2 * Hp:3 * Hp]
            g_g = jnp.tanh(g[:, 3 * Hp:])
            c_new = f_g * c + i_g * g_g
            h_new = o_g * jnp.tanh(c_new)
            off = pl.multiple_of(c_idx * rows + t * Bc, Bc)
            x_buf[pl.ds(off, Bc), :] = h_new.astype(jnp.bfloat16)
            return (h_new, c_new)

        # Modest unroll: serial h/c dependence means more buys nothing but
        # vreg pressure and compile time.
        return lax.fori_loop(0, T, step, (h, c), unroll=min(T, 4))

    h0 = jnp.zeros((Bc, Hp), jnp.float32)   # PyTorch default: zero init states
    c0 = jnp.zeros((Bc, Hp), jnp.float32)
    h_f, c_f = lax.fori_loop(0, n_chunks, chunk_body, (h0, c0))

    hN_ref[0] = h_f
    cN_ref[0] = c_f


def _prep_gate_matrix(w_t, H, H_pad, in_pad):
    """(in_feat, 4H) gate order [i,f,g,o] -> (in_pad, 4*H_pad) order [i,f,o,g],
    zero-padded (padded gate columns produce i=f=o=0.5, g=0 -> padded h/c stay
    exactly 0 and never contaminate real columns)."""
    in_feat = w_t.shape[0]
    gi, gf, gg, go = jnp.split(w_t, 4, axis=1)
    blocks = [jnp.pad(b, ((0, 0), (0, H_pad - H))) for b in (gi, gf, go, gg)]
    w = jnp.concatenate(blocks, axis=1)
    return jnp.pad(w, ((0, in_pad - in_feat), (0, 0)))


def _prep_gate_bias(b, H, H_pad):
    """(4H,) [i,f,g,o] -> (1, 4*H_pad) [i,f,o,g], zero-padded."""
    bi, bf, bg, bo = jnp.split(b, 4)
    return jnp.concatenate(
        [jnp.pad(x, (0, H_pad - H)) for x in (bi, bf, bo, bg)])[None, :]


def init_encoder_params(key, nwords, emb_size, hidden_size, nlayers):
    """Deterministic parameter init mirroring the PyTorch module shapes."""
    params = {}
    key, k_emb = jax.random.split(key)
    # torch.nn.init.uniform_(emb.weight, -0.25, 0.25)
    params["embedding"] = jax.random.uniform(
        k_emb, (nwords, emb_size), jnp.float32, minval=-0.25, maxval=0.25)

    stdv = 1.0 / (hidden_size ** 0.5)
    layers = []
    for _ in range(nlayers):
        in_feat = emb_size if not layers else hidden_size
        key, k1, k2, k3, k4 = jax.random.split(key, 5)
        w_ih = jax.random.uniform(k1, (4 * hidden_size, in_feat), jnp.float32,
                                  minval=-stdv, maxval=stdv)
        w_hh = jax.random.uniform(k2, (4 * hidden_size, hidden_size),
                                  jnp.float32, minval=-stdv, maxval=stdv)
        b_ih = jax.random.uniform(k3, (4 * hidden_size,), jnp.float32,
                                  minval=-stdv, maxval=stdv)
        b_hh = jax.random.uniform(k4, (4 * hidden_size,), jnp.float32,
                                  minval=-stdv, maxval=stdv)
        layers.append({
            "w_ih_t": w_ih.T,        # (in_feat, 4H), gate order [i, f, g, o]
            "w_hh_t": w_hh.T,        # (H, 4H)
            "bias": b_ih + b_hh,     # (4H,)  b_ih + b_hh pre-summed
        })
    params["lstm_layers"] = layers
    return params


def encoder_reference(params, src_words, hidden_size):
    """Pure-JAX f32 reference (PyTorch nn.LSTM semantics, eval mode)."""
    H = hidden_size
    x = jnp.take(params["embedding"], src_words, axis=0)          # (S, B, E)
    B = x.shape[1]
    hs, cs = [], []
    for lp in params["lstm_layers"]:
        w_ih_t, w_hh_t, bias = lp["w_ih_t"], lp["w_hh_t"], lp["bias"]

        def step(carry, x_t, w_ih_t=w_ih_t, w_hh_t=w_hh_t, bias=bias):
            h, c = carry
            g = x_t @ w_ih_t + h @ w_hh_t + bias
            i = jax.nn.sigmoid(g[:, 0 * H:1 * H])
            f = jax.nn.sigmoid(g[:, 1 * H:2 * H])
            gg = jnp.tanh(g[:, 2 * H:3 * H])
            o = jax.nn.sigmoid(g[:, 3 * H:4 * H])
            c = f * c + i * gg
            h = o * jnp.tanh(c)
            return (h, c), h

        (h, c), ys = lax.scan(
            step, (jnp.zeros((B, H), jnp.float32),
                   jnp.zeros((B, H), jnp.float32)), x)
        hs.append(h)
        cs.append(c)
        x = ys
    return jnp.stack(hs), jnp.stack(cs)


def encoder_forward(params, src_words, hidden_size, *,
                    num_batch_blocks=1, chunk_steps=None):
    """src_words: (S, B) int32 -> (enc_hidden, enc_cell), each (nlayers, B, H).

    num_batch_blocks: split the (padded) batch into this many independent
      blocks handled by a "parallel" grid axis (use 2 on v7x to occupy both
      TensorCores; harmless on single-TC v5e/v6e).
    chunk_steps: time-chunk size for the input projection (must divide S).
    """
    S, B = src_words.shape
    H = hidden_size
    E = params["embedding"].shape[1]
    layers = params["lstm_layers"]
    nlayers = len(layers)

    H_pad = _round_up(H, 128)           # lane-aligned gate slices
    E_pad = _round_up(E, 128)

    n_bb = max(1, int(num_batch_blocks))
    B_blk = _round_up(max(pl.cdiv(B, n_bb), 1), 16)   # 16 = bf16 sublane tile
    B_pad = n_bb * B_blk

    if chunk_steps is None:
        chunk_steps = next(c for c in (8, 4, 2, 1) if S % c == 0)
    assert S % chunk_steps == 0, "chunk_steps must divide the sequence length"

    # ---- embedding lookup + layout prep (plain-XLA glue) --------------------
    emb = jnp.take(params["embedding"], src_words, axis=0)        # (S, B, E)
    # nn.Dropout in eval mode == identity.
    emb = jnp.pad(emb, ((0, 0), (0, B_pad - B), (0, E_pad - E)))
    emb = emb.astype(jnp.bfloat16)
    # (n_bb, S*B_blk, E_pad): each batch block is a contiguous, time-major,
    # sublane-aligned 2-D slab (no in-kernel reshapes needed).
    emb = emb.reshape(S, n_bb, B_blk, E_pad).transpose(1, 0, 2, 3)
    emb = emb.reshape(n_bb, S * B_blk, E_pad)

    # ---- weights: gate-permuted [i,f,o,g], lane-padded, bf16 ----------------
    wih0 = _prep_gate_matrix(layers[0]["w_ih_t"], H, H_pad,
                             E_pad).astype(jnp.bfloat16)          # (Ep, 4Hp)
    whh_stack = jnp.stack(
        [_prep_gate_matrix(lp["w_hh_t"], H, H_pad, H_pad) for lp in layers]
    ).astype(jnp.bfloat16)                                        # (L, Hp, 4Hp)
    if nlayers > 1:
        wih_stack = jnp.stack(
            [_prep_gate_matrix(lp["w_ih_t"], H, H_pad, H_pad)
             for lp in layers[1:]]).astype(jnp.bfloat16)          # (L-1, Hp, 4Hp)
    else:
        wih_stack = jnp.zeros((1, H_pad, 4 * H_pad), jnp.bfloat16)
    bias_stack = jnp.stack(
        [_prep_gate_bias(lp["bias"], H, H_pad) for lp in layers]
    ).astype(jnp.float32)                                         # (L, 1, 4Hp)

    # ---- VMEM budget (double-buffered operands + scratch) -------------------
    f32b, bf16b = 4, 2
    footprint = (
        2 * S * B_blk * E_pad * bf16b                 # emb block
        + 2 * E_pad * 4 * H_pad * bf16b               # wih0 (resident)
        + 2 * 2 * H_pad * 4 * H_pad * bf16b           # wih[l], whh[l]
        + 2 * 4 * H_pad * f32b                        # bias[l]
        + 2 * 2 * B_blk * H_pad * f32b                # hN, cN blocks
        + 2 * chunk_steps * B_blk * 4 * H_pad * f32b  # gx_buf
        + S * B_blk * H_pad * bf16b                   # x_buf
    )
    try:
        vmem_cap = int(pltpu.get_tpu_info().vmem_capacity_bytes)
    except Exception:   # conservative fallback (v7x per-core VMEM)
        vmem_cap = 64 * 1024 * 1024
    vmem_limit = int(min(vmem_cap, max(2 * footprint + (4 << 20), 16 << 20)))

    kernel = functools.partial(
        _lstm_stack_kernel, hidden_pad=H_pad, seq_len=S,
        batch_block=B_blk, chunk_steps=chunk_steps)

    grid_spec = pltpu.PrefetchScalarGridSpec(
        num_scalar_prefetch=0,
        grid=(n_bb, nlayers),
        in_specs=[
            # Embedded sequence: re-fetched only when the batch block changes.
            pl.BlockSpec((1, S * B_blk, E_pad), lambda bb, l: (bb, 0, 0)),
            # Layer-0 input weights: resident for the whole call.
            pl.BlockSpec((E_pad, 4 * H_pad), lambda bb, l: (0, 0)),
            # Layer-l (l>=1) input weights: block l-1; at l==0 this simply
            # prefetches layer 1's block (reused at l==1) -> no dummy DMA.
            pl.BlockSpec((1, H_pad, 4 * H_pad),
                         lambda bb, l: (jnp.maximum(l - 1, 0), 0, 0)),
            pl.BlockSpec((1, H_pad, 4 * H_pad), lambda bb, l: (l, 0, 0)),
            pl.BlockSpec((1, 1, 4 * H_pad), lambda bb, l: (l, 0, 0)),
        ],
        out_specs=[
            pl.BlockSpec((1, B_blk, H_pad), lambda bb, l: (l, bb, 0)),
            pl.BlockSpec((1, B_blk, H_pad), lambda bb, l: (l, bb, 0)),
        ],
        scratch_shapes=[
            pltpu.VMEM((2, chunk_steps * B_blk, 4 * H_pad), jnp.float32),
            pltpu.VMEM((S * B_blk, H_pad), jnp.bfloat16),
        ],
    )

    h_all, c_all = pl.pallas_call(
        kernel,
        out_shape=(jax.ShapeDtypeStruct((nlayers, B_pad, H_pad), jnp.float32),
                   jax.ShapeDtypeStruct((nlayers, B_pad, H_pad), jnp.float32)),
        grid_spec=grid_spec,
        compiler_params=pltpu.CompilerParams(
            dimension_semantics=("parallel", "arbitrary"),
            vmem_limit_bytes=vmem_limit),
    )(emb, wih0, wih_stack, whh_stack, bias_stack)

    # Strip batch / hidden padding.
    return h_all[:, :B, :H], c_all[:, :B, :H]


if __name__ == "__main__":
    # Small, deterministic example consistent with the module's forward.
    nwords, emb_size, hidden_size, nlayers = 50, 32, 32, 2
    seq_len, batch = 8, 2

    key = jax.random.PRNGKey(0)
    key, k_words = jax.random.split(key)
    src_words = jax.random.randint(k_words, (seq_len, batch), 0, nwords,
                                   dtype=jnp.int32)
    params = init_encoder_params(key, nwords, emb_size, hidden_size, nlayers)

    # num_batch_blocks=2 exercises the "parallel" batch-block axis (v7x two-TC
    # split); chunk_steps=4 exercises the double-buffered chunked projection.
    enc_hidden, enc_cell = encoder_forward(params, src_words, hidden_size,
                                           num_batch_blocks=2, chunk_steps=4)
    jax.block_until_ready((enc_hidden, enc_cell))

    assert enc_hidden.shape == (nlayers, batch, hidden_size)
    assert enc_cell.shape == (nlayers, batch, hidden_size)

    # Check against a pure-JAX f32 reference (bf16 weights -> small drift).
    ref_h, ref_c = encoder_reference(params, src_words, hidden_size)
    err = max(float(jnp.max(jnp.abs(enc_hidden - ref_h))),
              float(jnp.max(jnp.abs(enc_cell - ref_c))))
    assert err < 5e-2, f"kernel deviates from f32 reference: max abs err {err}"
    print("KERNEL_OK")
</pallas_src>

<mosaic_0001>
module attributes {stable_mosaic.version = 11 : i64} {
  func.func @_lstm_stack_kernel(%arg0: i32, %arg1: i32, %arg2: memref<1x128x128xbf16, #tpu.memory_space<vmem>>, %arg3: memref<128x512xbf16, #tpu.memory_space<vmem>>, %arg4: memref<1x128x512xbf16, #tpu.memory_space<vmem>>, %arg5: memref<1x128x512xbf16, #tpu.memory_space<vmem>>, %arg6: memref<1x1x512xf32, #tpu.memory_space<vmem>>, %arg7: memref<1x16x128xf32, #tpu.memory_space<vmem>>, %arg8: memref<1x16x128xf32, #tpu.memory_space<vmem>>, %arg9: memref<2x64x512xf32, #tpu.memory_space<vmem>>, %arg10: memref<128x128xbf16, #tpu.memory_space<vmem>>) attributes {dimension_semantics = [#tpu.dimension_semantics<parallel>, #tpu.dimension_semantics<arbitrary>], iteration_bounds = array<i64: 2, 2>, scalar_prefetch = 0 : i64, scratch_operands = 2 : i64, tpu.core_type = #tpu.core_type<tc>, window_params = [{transform_indices = @transform_0, window_bounds = array<i64: 1, 128, 128>}, {pipeline_mode = #tpu.pipeline_mode<synchronous>, transform_indices = @transform_1, window_bounds = array<i64: 128, 512>}, {transform_indices = @transform_2, window_bounds = array<i64: 1, 128, 512>}, {transform_indices = @transform_3, window_bounds = array<i64: 1, 128, 512>}, {transform_indices = @transform_4, window_bounds = array<i64: 1, 1, 512>}, {transform_indices = @transform_5, window_bounds = array<i64: 1, 16, 128>}, {transform_indices = @transform_6, window_bounds = array<i64: 1, 16, 128>}]} {
    %c0_i32 = arith.constant 0 : i32
    %0 = tpu.assume_multiple %c0_i32, 64 : i32
    %c0 = arith.constant 0 : index
    %c0_0 = arith.constant 0 : index
    %c0_1 = arith.constant 0 : index
    %1 = vector.load %arg6[%c0, %c0_0, %c0_1] : memref<1x1x512xf32, #tpu.memory_space<vmem>>, vector<1x1x512xf32>
    %2 = vector.shape_cast %1 : vector<1x1x512xf32> to vector<1x512xf32>
    %c0_i32_2 = arith.constant 0 : i32
    %3 = arith.cmpi eq, %arg1, %c0_i32_2 : i32
    %4 = arith.extui %3 : i1 to i32
    %c0_i32_3 = arith.constant 0 : i32
    %5 = arith.cmpi ne, %4, %c0_i32_3 : i32
    scf.if %5 {
      %c0_15 = arith.constant 0 : index
      %19 = arith.index_cast %0 : i32 to index
      %c0_16 = arith.constant 0 : index
      %20 = vector.load %arg2[%c0_15, %19, %c0_16] : memref<1x128x128xbf16, #tpu.memory_space<vmem>>, vector<1x64x128xbf16>
      %21 = vector.shape_cast %20 : vector<1x64x128xbf16> to vector<64x128xbf16>
      %c0_17 = arith.constant 0 : index
      %c0_18 = arith.constant 0 : index
      %22 = vector.load %arg3[%c0_17, %c0_18] : memref<128x512xbf16, #tpu.memory_space<vmem>>, vector<128x512xbf16>
      %cst_19 = arith.constant dense<0.000000e+00> : vector<64x512xf32>
      %23 = tpu.matmul %21, %22, %cst_19 {dimension_numbers = #tpu.dot_dimension_numbers<[1], [0], [0], [1], [0, 0, 1, 1], [], []>} : vector<64x128xbf16>, vector<128x512xbf16>, vector<64x512xf32> -> vector<64x512xf32>
      %24 = vector.broadcast %2 : vector<1x512xf32> to vector<64x512xf32>
      %25 = arith.addf %23, %24 : vector<64x512xf32>
      %c0_20 = arith.constant 0 : index
      %c0_21 = arith.constant 0 : index
      %c0_22 = arith.constant 0 : index
      %26 = vector.load %arg9[%c0_20, %c0_21, %c0_22] : memref<2x64x512xf32, #tpu.memory_space<vmem>>, vector<1x64x512xf32>
      %27 = vector.shape_cast %26 : vector<1x64x512xf32> to vector<64x512xf32>
      %28 = vector.shape_cast %25 : vector<64x512xf32> to vector<1x64x512xf32>
      tpu.vector_store %arg9[%c0_20, %c0_21, %c0_22], %28 {strides = array<i32>} : memref<2x64x512xf32, #tpu.memory_space<vmem>>, vector<1x64x512xf32>,
    } else {
    }
    %c0_i32_4 = arith.constant 0 : i32
    %6 = arith.cmpi sgt, %arg1, %c0_i32_4 : i32
    %7 = arith.extui %6 : i1 to i32
    %c0_i32_5 = arith.constant 0 : i32
    %8 = arith.cmpi ne, %7, %c0_i32_5 : i32
    scf.if %8 {
      %19 = arith.index_cast %0 : i32 to index
      %c0_15 = arith.constant 0 : index
      %20 = vector.load %arg10[%19, %c0_15] : memref<128x128xbf16, #tpu.memory_space<vmem>>, vector<64x128xbf16>
      %c0_16 = arith.constant 0 : index
      %c0_17 = arith.constant 0 : index
      %c0_18 = arith.constant 0 : index
      %21 = vector.load %arg4[%c0_16, %c0_17, %c0_18] : memref<1x128x512xbf16, #tpu.memory_space<vmem>>, vector<1x128x512xbf16>
      %22 = vector.shape_cast %21 : vector<1x128x512xbf16> to vector<128x512xbf16>
      %cst_19 = arith.constant dense<0.000000e+00> : vector<64x512xf32>
      %23 = tpu.matmul %20, %22, %cst_19 {dimension_numbers = #tpu.dot_dimension_numbers<[1], [0], [0], [1], [0, 0, 1, 1], [], []>} : vector<64x128xbf16>, vector<128x512xbf16>, vector<64x512xf32> -> vector<64x512xf32>
      %24 = vector.broadcast %2 : vector<1x512xf32> to vector<64x512xf32>
      %25 = arith.addf %23, %24 : vector<64x512xf32>
      %c0_20 = arith.constant 0 : index
      %c0_21 = arith.constant 0 : index
      %c0_22 = arith.constant 0 : index
      %26 = vector.load %arg9[%c0_20, %c0_21, %c0_22] : memref<2x64x512xf32, #tpu.memory_space<vmem>>, vector<1x64x512xf32>
      %27 = vector.shape_cast %26 : vector<1x64x512xf32> to vector<64x512xf32>
      %28 = vector.shape_cast %25 : vector<64x512xf32> to vector<1x64x512xf32>
      tpu.vector_store %arg9[%c0_20, %c0_21, %c0_22], %28 {strides = array<i32>} : memref<2x64x512xf32, #tpu.memory_space<vmem>>, vector<1x64x512xf32>,
    } else {
    }
    %cst = arith.constant 0.000000e+00 : f32
    %9 = vector.broadcast %cst : f32 to vector<16x128xf32>
    %cst_6 = arith.constant 0.000000e+00 : f32
    %10 = vector.broadcast %cst_6 : f32 to vector<16x128xf32>
    %c0_i32_7 = arith.constant 0 : i32
    %c2_i32 = arith.constant 2 : i32
    %11 = arith.addi %c0_i32_7, %c2_i32 : i32
    %c1_i32 = arith.constant 1 : i32
    %12:2 = scf.for %arg11 = %c0_i32_7 to %11 step %c1_i32 iter_args(%arg12 = %9, %arg13 = %10) -> (vector<16x128xf32>, vector<16x128xf32>)  : i32 {
      %c2_i32_15 = arith.constant 2 : i32
      %c0_i32_16 = arith.constant 0 : i32
      %19 = arith.cmpi eq, %c2_i32_15, %c0_i32_16 : i32
      %c1_i32_17 = arith.constant 1 : i32
      %20 = arith.select %19, %c1_i32_17, %c2_i32_15 : i32
      %21 = arith.remsi %arg11, %20 : i32
      %c0_i32_18 = arith.constant 0 : i32
      %22 = arith.cmpi ne, %21, %c0_i32_18 : i32
      %c0_i32_19 = arith.constant 0 : i32
      %23 = arith.cmpi slt, %21, %c0_i32_19 : i32
      %c0_i32_20 = arith.constant 0 : i32
      %24 = arith.cmpi slt, %20, %c0_i32_20 : i32
      %25 = arith.xori %23, %24 : i1
      %26 = arith.andi %25, %22 : i1
      %27 = arith.addi %21, %20 : i32
      %28 = arith.select %26, %27, %21 : i32
      %c1_i32_21 = arith.constant 1 : i32
      %29 = arith.addi %arg11, %c1_i32_21 : i32
      %c2_i32_22 = arith.constant 2 : i32
      %30 = arith.cmpi slt, %29, %c2_i32_22 : i32
      %31 = arith.extui %30 : i1 to i32
      %c0_i32_23 = arith.constant 0 : i32
      %32 = arith.cmpi ne, %31, %c0_i32_23 : i32
      scf.if %32 {
        %c1_i32_65 = arith.constant 1 : i32
        %169 = arith.addi %arg11, %c1_i32_65 : i32
        %c1_i32_66 = arith.constant 1 : i32
        %170 = arith.subi %c1_i32_66, %28 : i32
        %c64_i32_67 = arith.constant 64 : i32
        %171 = arith.muli %169, %c64_i32_67 : i32
        %172 = tpu.assume_multiple %171, 64 : i32
        %c0_68 = arith.constant 0 : index
        %c0_69 = arith.constant 0 : index
        %c0_70 = arith.constant 0 : index
        %173 = vector.load %arg6[%c0_68, %c0_69, %c0_70] : memref<1x1x512xf32, #tpu.memory_space<vmem>>, vector<1x1x512xf32>
        %174 = vector.shape_cast %173 : vector<1x1x512xf32> to vector<1x512xf32>
        %c0_i32_71 = arith.constant 0 : i32
        %175 = arith.cmpi eq, %arg1, %c0_i32_71 : i32
        %176 = arith.extui %175 : i1 to i32
        %c0_i32_72 = arith.constant 0 : i32
        %177 = arith.cmpi ne, %176, %c0_i32_72 : i32
        scf.if %177 {
          %c0_75 = arith.constant 0 : index
          %181 = arith.index_cast %172 : i32 to index
          %c0_76 = arith.constant 0 : index
          %182 = vector.load %arg2[%c0_75, %181, %c0_76] : memref<1x128x128xbf16, #tpu.memory_space<vmem>>, vector<1x64x128xbf16>
          %183 = vector.shape_cast %182 : vector<1x64x128xbf16> to vector<64x128xbf16>
          %c0_77 = arith.constant 0 : index
          %c0_78 = arith.constant 0 : index
          %184 = vector.load %arg3[%c0_77, %c0_78] : memref<128x512xbf16, #tpu.memory_space<vmem>>, vector<128x512xbf16>
          %cst_79 = arith.constant dense<0.000000e+00> : vector<64x512xf32>
          %185 = tpu.matmul %183, %184, %cst_79 {dimension_numbers = #tpu.dot_dimension_numbers<[1], [0], [0], [1], [0, 0, 1, 1], [], []>} : vector<64x128xbf16>, vector<128x512xbf16>, vector<64x512xf32> -> vector<64x512xf32>
          %186 = vector.broadcast %174 : vector<1x512xf32> to vector<64x512xf32>
          %187 = arith.addf %185, %186 : vector<64x512xf32>
          %188 = arith.index_cast %170 : i32 to index
          %c0_80 = arith.constant 0 : index
          %c0_81 = arith.constant 0 : index
          %189 = vector.load %arg9[%188, %c0_80, %c0_81] : memref<2x64x512xf32, #tpu.memory_space<vmem>>, vector<1x64x512xf32>
          %190 = vector.shape_cast %189 : vector<1x64x512xf32> to vector<64x512xf32>
          %191 = vector.shape_cast %187 : vector<64x512xf32> to vector<1x64x512xf32>
          tpu.vector_store %arg9[%188, %c0_80, %c0_81], %191 {strides = array<i32>} : memref<2x64x512xf32, #tpu.memory_space<vmem>>, vector<1x64x512xf32>,
        } else {
        }
        %c0_i32_73 = arith.constant 0 : i32
        %178 = arith.cmpi sgt, %arg1, %c0_i32_73 : i32
        %179 = arith.extui %178 : i1 to i32
        %c0_i32_74 = arith.constant 0 : i32
        %180 = arith.cmpi ne, %179, %c0_i32_74 : i32
        scf.if %180 {
          %181 = arith.index_cast %172 : i32 to index
          %c0_75 = arith.constant 0 : index
          %182 = vector.load %arg10[%181, %c0_75] : memref<128x128xbf16, #tpu.memory_space<vmem>>, vector<64x128xbf16>
          %c0_76 = arith.constant 0 : index
          %c0_77 = arith.constant 0 : index
          %c0_78 = arith.constant 0 : index
          %183 = vector.load %arg4[%c0_76, %c0_77, %c0_78] : memref<1x128x512xbf16, #tpu.memory_space<vmem>>, vector<1x128x512xbf16>
          %184 = vector.shape_cast %183 : vector<1x128x512xbf16> to vector<128x512xbf16>
          %cst_79 = arith.constant dense<0.000000e+00> : vector<64x512xf32>
          %185 = tpu.matmul %182, %184, %cst_79 {dimension_numbers = #tpu.dot_dimension_numbers<[1], [0], [0], [1], [0, 0, 1, 1], [], []>} : vector<64x128xbf16>, vector<128x512xbf16>, vector<64x512xf32> -> vector<64x512xf32>
          %186 = vector.broadcast %174 : vector<1x512xf32> to vector<64x512xf32>
          %187 = arith.addf %185, %186 : vector<64x512xf32>
          %188 = arith.index_cast %170 : i32 to index
          %c0_80 = arith.constant 0 : index
          %c0_81 = arith.constant 0 : index
          %189 = vector.load %arg9[%188, %c0_80, %c0_81] : memref<2x64x512xf32, #tpu.memory_space<vmem>>, vector<1x64x512xf32>
          %190 = vector.shape_cast %189 : vector<1x64x512xf32> to vector<64x512xf32>
          %191 = vector.shape_cast %187 : vector<64x512xf32> to vector<1x64x512xf32>
          tpu.vector_store %arg9[%188, %c0_80, %c0_81], %191 {strides = array<i32>} : memref<2x64x512xf32, #tpu.memory_space<vmem>>, vector<1x64x512xf32>,
        } else {
        }
      } else {
      }
      %c0_i32_24 = arith.constant 0 : i32
      %c16_i32 = arith.constant 16 : i32
      %33 = arith.muli %c0_i32_24, %c16_i32 : i32
      %34 = tpu.assume_multiple %33, 16 : i32
      %35 = arith.index_cast %28 : i32 to index
      %36 = arith.index_cast %34 : i32 to index
      %c0_25 = arith.constant 0 : index
      %37 = vector.load %arg9[%35, %36, %c0_25] : memref<2x64x512xf32, #tpu.memory_space<vmem>>, vector<1x16x512xf32>
      %38 = vector.shape_cast %37 : vector<1x16x512xf32> to vector<16x512xf32>
      %39 = arith.truncf %arg12 : vector<16x128xf32> to vector<16x128xbf16>
      %c0_26 = arith.constant 0 : index
      %c0_27 = arith.constant 0 : index
      %c0_28 = arith.constant 0 : index
      %40 = vector.load %arg5[%c0_26, %c0_27, %c0_28] : memref<1x128x512xbf16, #tpu.memory_space<vmem>>, vector<1x128x512xbf16>
      %41 = vector.shape_cast %40 : vector<1x128x512xbf16> to vector<128x512xbf16>
      %cst_29 = arith.constant dense<0.000000e+00> : vector<16x512xf32>
      %42 = tpu.matmul %39, %41, %cst_29 {dimension_numbers = #tpu.dot_dimension_numbers<[1], [0], [0], [1], [0, 0, 1, 1], [], []>} : vector<16x128xbf16>, vector<128x512xbf16>, vector<16x512xf32> -> vector<16x512xf32>
      %43 = arith.addf %38, %42 : vector<16x512xf32>
      %44 = vector.extract_strided_slice %43 {offsets = [0, 0], sizes = [16, 384], strides = [1, 1]} : vector<16x512xf32> to vector<16x384xf32>
      %45 = arith.negf %44 : vector<16x384xf32>
      %46 = math.exp %45 : vector<16x384xf32>
      %cst_30 = arith.constant 1.000000e+00 : f32
      %47 = vector.broadcast %cst_30 : f32 to vector<16x384xf32>
      %48 = arith.addf %47, %46 : vector<16x384xf32>
      %49 = arith.divf %47, %48 : vector<16x384xf32>
      %50 = vector.extract_strided_slice %49 {offsets = [0, 0], sizes = [16, 128], strides = [1, 1]} : vector<16x384xf32> to vector<16x128xf32>
      %51 = vector.extract_strided_slice %49 {offsets = [0, 128], sizes = [16, 128], strides = [1, 1]} : vector<16x384xf32> to vector<16x128xf32>
      %52 = vector.extract_strided_slice %49 {offsets = [0, 256], sizes = [16, 128], strides = [1, 1]} : vector<16x384xf32> to vector<16x128xf32>
      %53 = vector.extract_strided_slice %43 {offsets = [0, 384], sizes = [16, 128], strides = [1, 1]} : vector<16x512xf32> to vector<16x128xf32>
      %54 = math.tanh %53 : vector<16x128xf32>
      %55 = arith.mulf %51, %arg13 : vector<16x128xf32>
      %56 = arith.mulf %50, %54 : vector<16x128xf32>
      %57 = arith.addf %55, %56 : vector<16x128xf32>
      %58 = math.tanh %57 : vector<16x128xf32>
      %59 = arith.mulf %52, %58 : vector<16x128xf32>
      %c64_i32 = arith.constant 64 : i32
      %60 = arith.muli %arg11, %c64_i32 : i32
      %c16_i32_31 = arith.constant 16 : i32
      %61 = arith.muli %c0_i32_24, %c16_i32_31 : i32
      %62 = arith.addi %60, %61 : i32
      %63 = tpu.assume_multiple %62, 16 : i32
      %64 = arith.truncf %59 : vector<16x128xf32> to vector<16x128xbf16>
      %65 = arith.index_cast %63 : i32 to index
      %c0_32 = arith.constant 0 : index
      %66 = vector.load %arg10[%65, %c0_32] : memref<128x128xbf16, #tpu.memory_space<vmem>>, vector<16x128xbf16>
      tpu.vector_store %arg10[%65, %c0_32], %64 {strides = array<i32>} : memref<128x128xbf16, #tpu.memory_space<vmem>>, vector<16x128xbf16>,
      %c1_i32_33 = arith.constant 1 : i32
      %c16_i32_34 = arith.constant 16 : i32
      %67 = arith.muli %c1_i32_33, %c16_i32_34 : i32
      %68 = tpu.assume_multiple %67, 16 : i32
      %69 = arith.index_cast %28 : i32 to index
      %70 = arith.index_cast %68 : i32 to index
      %c0_35 = arith.constant 0 : index
      %71 = vector.load %arg9[%69, %70, %c0_35] : memref<2x64x512xf32, #tpu.memory_space<vmem>>, vector<1x16x512xf32>
      %72 = vector.shape_cast %71 : vector<1x16x512xf32> to vector<16x512xf32>
      %73 = arith.truncf %59 : vector<16x128xf32> to vector<16x128xbf16>
      %c0_36 = arith.constant 0 : index
      %c0_37 = arith.constant 0 : index
      %c0_38 = arith.constant 0 : index
      %74 = vector.load %arg5[%c0_36, %c0_37, %c0_38] : memref<1x128x512xbf16, #tpu.memory_space<vmem>>, vector<1x128x512xbf16>
      %75 = vector.shape_cast %74 : vector<1x128x512xbf16> to vector<128x512xbf16>
      %cst_39 = arith.constant dense<0.000000e+00> : vector<16x512xf32>
      %76 = tpu.matmul %73, %75, %cst_39 {dimension_numbers = #tpu.dot_dimension_numbers<[1], [0], [0], [1], [0, 0, 1, 1], [], []>} : vector<16x128xbf16>, vector<128x512xbf16>, vector<16x512xf32> -> vector<16x512xf32>
      %77 = arith.addf %72, %76 : vector<16x512xf32>
      %78 = vector.extract_strided_slice %77 {offsets = [0, 0], sizes = [16, 384], strides = [1, 1]} : vector<16x512xf32> to vector<16x384xf32>
      %79 = arith.negf %78 : vector<16x384xf32>
      %80 = math.exp %79 : vector<16x384xf32>
      %cst_40 = arith.constant 1.000000e+00 : f32
      %81 = vector.broadcast %cst_40 : f32 to vector<16x384xf32>
      %82 = arith.addf %81, %80 : vector<16x384xf32>
      %83 = arith.divf %81, %82 : vector<16x384xf32>
      %84 = vector.extract_strided_slice %83 {offsets = [0, 0], sizes = [16, 128], strides = [1, 1]} : vector<16x384xf32> to vector<16x128xf32>
      %85 = vector.extract_strided_slice %83 {offsets = [0, 128], sizes = [16, 128], strides = [1, 1]} : vector<16x384xf32> to vector<16x128xf32>
      %86 = vector.extract_strided_slice %83 {offsets = [0, 256], sizes = [16, 128], strides = [1, 1]} : vector<16x384xf32> to vector<16x128xf32>
      %87 = vector.extract_strided_slice %77 {offsets = [0, 384], sizes = [16, 128], strides = [1, 1]} : vector<16x512xf32> to vector<16x128xf32>
      %88 = math.tanh %87 : vector<16x128xf32>
      %89 = arith.mulf %85, %57 : vector<16x128xf32>
      %90 = arith.mulf %84, %88 : vector<16x128xf32>
      %91 = arith.addf %89, %90 : vector<16x128xf32>
      %92 = math.tanh %91 : vector<16x128xf32>
      %93 = arith.mulf %86, %92 : vector<16x128xf32>
      %c64_i32_41 = arith.constant 64 : i32
      %94 = arith.muli %arg11, %c64_i32_41 : i32
      %c16_i32_42 = arith.constant 16 : i32
      %95 = arith.muli %c1_i32_33, %c16_i32_42 : i32
      %96 = arith.addi %94, %95 : i32
      %97 = tpu.assume_multiple %96, 16 : i32
      %98 = arith.truncf %93 : vector<16x128xf32> to vector<16x128xbf16>
      %99 = arith.index_cast %97 : i32 to index
      %c0_43 = arith.constant 0 : index
      %100 = vector.load %arg10[%99, %c0_43] : memref<128x128xbf16, #tpu.memory_space<vmem>>, vector<16x128xbf16>
      tpu.vector_store %arg10[%99, %c0_43], %98 {strides = array<i32>} : memref<128x128xbf16, #tpu.memory_space<vmem>>, vector<16x128xbf16>,
      %c2_i32_44 = arith.constant 2 : i32
      %c16_i32_45 = arith.constant 16 : i32
      %101 = arith.muli %c2_i32_44, %c16_i32_45 : i32
      %102 = tpu.assume_multiple %101, 16 : i32
      %103 = arith.index_cast %28 : i32 to index
      %104 = arith.index_cast %102 : i32 to index
      %c0_46 = arith.constant 0 : index
      %105 = vector.load %arg9[%103, %104, %c0_46] : memref<2x64x512xf32, #tpu.memory_space<vmem>>, vector<1x16x512xf32>
      %106 = vector.shape_cast %105 : vector<1x16x512xf32> to vector<16x512xf32>
      %107 = arith.truncf %93 : vector<16x128xf32> to vector<16x128xbf16>
      %c0_47 = arith.constant 0 : index
      %c0_48 = arith.constant 0 : index
      %c0_49 = arith.constant 0 : index
      %108 = vector.load %arg5[%c0_47, %c0_48, %c0_49] : memref<1x128x512xbf16, #tpu.memory_space<vmem>>, vector<1x128x512xbf16>
      %109 = vector.shape_cast %108 : vector<1x128x512xbf16> to vector<128x512xbf16>
      %cst_50 = arith.constant dense<0.000000e+00> : vector<16x512xf32>
      %110 = tpu.matmul %107, %109, %cst_50 {dimension_numbers = #tpu.dot_dimension_numbers<[1], [0], [0], [1], [0, 0, 1, 1], [], []>} : vector<16x128xbf16>, vector<128x512xbf16>, vector<16x512xf32> -> vector<16x512xf32>
      %111 = arith.addf %106, %110 : vector<16x512xf32>
      %112 = vector.extract_strided_slice %111 {offsets = [0, 0], sizes = [16, 384], strides = [1, 1]} : vector<16x512xf32> to vector<16x384xf32>
      %113 = arith.negf %112 : vector<16x384xf32>
      %114 = math.exp %113 : vector<16x384xf32>
      %cst_51 = arith.constant 1.000000e+00 : f32
      %115 = vector.broadcast %cst_51 : f32 to vector<16x384xf32>
      %116 = arith.addf %115, %114 : vector<16x384xf32>
      %117 = arith.divf %115, %116 : vector<16x384xf32>
      %118 = vector.extract_strided_slice %117 {offsets = [0, 0], sizes = [16, 128], strides = [1, 1]} : vector<16x384xf32> to vector<16x128xf32>
      %119 = vector.extract_strided_slice %117 {offsets = [0, 128], sizes = [16, 128], strides = [1, 1]} : vector<16x384xf32> to vector<16x128xf32>
      %120 = vector.extract_strided_slice %117 {offsets = [0, 256], sizes = [16, 128], strides = [1, 1]} : vector<16x384xf32> to vector<16x128xf32>
      %121 = vector.extract_strided_slice %111 {offsets = [0, 384], sizes = [16, 128], strides = [1, 1]} : vector<16x512xf32> to vector<16x128xf32>
      %122 = math.tanh %121 : vector<16x128xf32>
      %123 = arith.mulf %119, %91 : vector<16x128xf32>
      %124 = arith.mulf %118, %122 : vector<16x128xf32>
      %125 = arith.addf %123, %124 : vector<16x128xf32>
      %126 = math.tanh %125 : vector<16x128xf32>
      %127 = arith.mulf %120, %126 : vector<16x128xf32>
      %c64_i32_52 = arith.constant 64 : i32
      %128 = arith.muli %arg11, %c64_i32_52 : i32
      %c16_i32_53 = arith.constant 16 : i32
      %129 = arith.muli %c2_i32_44, %c16_i32_53 : i32
      %130 = arith.addi %128, %129 : i32
      %131 = tpu.assume_multiple %130, 16 : i32
      %132 = arith.truncf %127 : vector<16x128xf32> to vector<16x128xbf16>
      %133 = arith.index_cast %131 : i32 to index
      %c0_54 = arith.constant 0 : index
      %134 = vector.load %arg10[%133, %c0_54] : memref<128x128xbf16, #tpu.memory_space<vmem>>, vector<16x128xbf16>
      tpu.vector_store %arg10[%133, %c0_54], %132 {strides = array<i32>} : memref<128x128xbf16, #tpu.memory_space<vmem>>, vector<16x128xbf16>,
      %c3_i32 = arith.constant 3 : i32
      %c16_i32_55 = arith.constant 16 : i32
      %135 = arith.muli %c3_i32, %c16_i32_55 : i32
      %136 = tpu.assume_multiple %135, 16 : i32
      %137 = arith.index_cast %28 : i32 to index
      %138 = arith.index_cast %136 : i32 to index
      %c0_56 = arith.constant 0 : index
      %139 = vector.load %arg9[%137, %138, %c0_56] : memref<2x64x512xf32, #tpu.memory_space<vmem>>, vector<1x16x512xf32>
      %140 = vector.shape_cast %139 : vector<1x16x512xf32> to vector<16x512xf32>
      %141 = arith.truncf %127 : vector<16x128xf32> to vector<16x128xbf16>
      %c0_57 = arith.constant 0 : index
      %c0_58 = arith.constant 0 : index
      %c0_59 = arith.constant 0 : index
      %142 = vector.load %arg5[%c0_57, %c0_58, %c0_59] : memref<1x128x512xbf16, #tpu.memory_space<vmem>>, vector<1x128x512xbf16>
      %143 = vector.shape_cast %142 : vector<1x128x512xbf16> to vector<128x512xbf16>
      %cst_60 = arith.constant dense<0.000000e+00> : vector<16x512xf32>
      %144 = tpu.matmul %141, %143, %cst_60 {dimension_numbers = #tpu.dot_dimension_numbers<[1], [0], [0], [1], [0, 0, 1, 1], [], []>} : vector<16x128xbf16>, vector<128x512xbf16>, vector<16x512xf32> -> vector<16x512xf32>
      %145 = arith.addf %140, %144 : vector<16x512xf32>
      %146 = vector.extract_strided_slice %145 {offsets = [0, 0], sizes = [16, 384], strides = [1, 1]} : vector<16x512xf32> to vector<16x384xf32>
      %147 = arith.negf %146 : vector<16x384xf32>
      %148 = math.exp %147 : vector<16x384xf32>
      %cst_61 = arith.constant 1.000000e+00 : f32
      %149 = vector.broadcast %cst_61 : f32 to vector<16x384xf32>
      %150 = arith.addf %149, %148 : vector<16x384xf32>
      %151 = arith.divf %149, %150 : vector<16x384xf32>
      %152 = vector.extract_strided_slice %151 {offsets = [0, 0], sizes = [16, 128], strides = [1, 1]} : vector<16x384xf32> to vector<16x128xf32>
      %153 = vector.extract_strided_slice %151 {offsets = [0, 128], sizes = [16, 128], strides = [1, 1]} : vector<16x384xf32> to vector<16x128xf32>
      %154 = vector.extract_strided_slice %151 {offsets = [0, 256], sizes = [16, 128], strides = [1, 1]} : vector<16x384xf32> to vector<16x128xf32>
      %155 = vector.extract_strided_slice %145 {offsets = [0, 384], sizes = [16, 128], strides = [1, 1]} : vector<16x512xf32> to vector<16x128xf32>
      %156 = math.tanh %155 : vector<16x128xf32>
      %157 = arith.mulf %153, %125 : vector<16x128xf32>
      %158 = arith.mulf %152, %156 : vector<16x128xf32>
      %159 = arith.addf %157, %158 : vector<16x128xf32>
      %160 = math.tanh %159 : vector<16x128xf32>
      %161 = arith.mulf %154, %160 : vector<16x128xf32>
      %c64_i32_62 = arith.constant 64 : i32
      %162 = arith.muli %arg11, %c64_i32_62 : i32
      %c16_i32_63 = arith.constant 16 : i32
      %163 = arith.muli %c3_i32, %c16_i32_63 : i32
      %164 = arith.addi %162, %163 : i32
      %165 = tpu.assume_multiple %164, 16 : i32
      %166 = arith.truncf %161 : vector<16x128xf32> to vector<16x128xbf16>
      %167 = arith.index_cast %165 : i32 to index
      %c0_64 = arith.constant 0 : index
      %168 = vector.load %arg10[%167, %c0_64] : memref<128x128xbf16, #tpu.memory_space<vmem>>, vector<16x128xbf16>
      tpu.vector_store %arg10[%167, %c0_64], %166 {strides = array<i32>} : memref<128x128xbf16, #tpu.memory_space<vmem>>, vector<16x128xbf16>,
      %c4_i32 = arith.constant 4 : i32
      scf.yield %161, %159 : vector<16x128xf32>, vector<16x128xf32>
    }
    %c2_i32_8 = arith.constant 2 : i32
    %c0_9 = arith.constant 0 : index
    %c0_10 = arith.constant 0 : index
    %c0_11 = arith.constant 0 : index
    %13 = vector.load %arg7[%c0_9, %c0_10, %c0_11] : memref<1x16x128xf32, #tpu.memory_space<vmem>>, vector<1x16x128xf32>
    %14 = vector.shape_cast %13 : vector<1x16x128xf32> to vector<16x128xf32>
    %15 = vector.shape_cast %12#0 : vector<16x128xf32> to vector<1x16x128xf32>
    tpu.vector_store %arg7[%c0_9, %c0_10, %c0_11], %15 {strides = array<i32>} : memref<1x16x128xf32, #tpu.memory_space<vmem>>, vector<1x16x128xf32>,
    %c0_12 = arith.constant 0 : index
    %c0_13 = arith.constant 0 : index
    %c0_14 = arith.constant 0 : index
    %16 = vector.load %arg8[%c0_12, %c0_13, %c0_14] : memref<1x16x128xf32, #tpu.memory_space<vmem>>, vector<1x16x128xf32>
    %17 = vector.shape_cast %16 : vector<1x16x128xf32> to vector<16x128xf32>
    %18 = vector.shape_cast %12#1 : vector<16x128xf32> to vector<1x16x128xf32>
    tpu.vector_store %arg8[%c0_12, %c0_13, %c0_14], %18 {strides = array<i32>} : memref<1x16x128xf32, #tpu.memory_space<vmem>>, vector<1x16x128xf32>,
    return
  }
  func.func @transform_0(%arg0: i32, %arg1: i32) -> (i32, i32, i32) {
    %c0_i32 = arith.constant 0 : i32
    %c0_i32_0 = arith.constant 0 : i32
    %c0_i32_1 = arith.constant 0 : i32
    return %arg0, %c0_i32, %c0_i32_0 : i32, i32, i32
  }
  func.func @transform_1(%arg0: i32, %arg1: i32) -> (i32, i32) {
    %c0_i32 = arith.constant 0 : i32
    %c0_i32_0 = arith.constant 0 : i32
    %c0_i32_1 = arith.constant 0 : i32
    return %c0_i32, %c0_i32_0 : i32, i32
  }
  func.func @transform_2(%arg0: i32, %arg1: i32) -> (i32, i32, i32) {
    %c1_i32 = arith.constant 1 : i32
    %0 = arith.subi %arg1, %c1_i32 : i32
    %c0_i32 = arith.constant 0 : i32
    %1 = arith.maxsi %0, %c0_i32 : i32
    %c0_i32_0 = arith.constant 0 : i32
    %c0_i32_1 = arith.constant 0 : i32
    %c0_i32_2 = arith.constant 0 : i32
    return %1, %c0_i32_0, %c0_i32_1 : i32, i32, i32
  }
  func.func @transform_3(%arg0: i32, %arg1: i32) -> (i32, i32, i32) {
    %c0_i32 = arith.constant 0 : i32
    %c0_i32_0 = arith.constant 0 : i32
    %c0_i32_1 = arith.constant 0 : i32
    return %arg1, %c0_i32, %c0_i32_0 : i32, i32, i32
  }
  func.func @transform_4(%arg0: i32, %arg1: i32) -> (i32, i32, i32) {
    %c0_i32 = arith.constant 0 : i32
    %c0_i32_0 = arith.constant 0 : i32
    %c0_i32_1 = arith.constant 0 : i32
    return %arg1, %c0_i32, %c0_i32_0 : i32, i32, i32
  }
  func.func @transform_5(%arg0: i32, %arg1: i32) -> (i32, i32, i32) {
    %c0_i32 = arith.constant 0 : i32
    %c0_i32_0 = arith.constant 0 : i32
    return %arg1, %arg0, %c0_i32 : i32, i32, i32
  }
  func.func @transform_6(%arg0: i32, %arg1: i32) -> (i32, i32, i32) {
    %c0_i32 = arith.constant 0 : i32
    %c0_i32_0 = arith.constant 0 : i32
    return %arg1, %arg0, %c0_i32 : i32, i32, i32
  }
}

</mosaic_0001>

<llo_original>
// kernel: tpu_custom_call.1
$region0: #{tpu_custom_call.1}
  #allocation0 [shape = 'u32[]', space=smem, size = 0x4, offset = 0x4, fixed_abs, tag = 'smem constant byte address 0x4 - core index']
  #allocation1 [shape = 'u32[144,128]{1,0:T(1,128)}', space=vmem, size = 0x12000, scoped, tag = 'internal scratch']
  #allocation2 [shape = 'f32[2,64,512]{2,1,0:T(8,128)}', space=vmem, size = 0x40000, scoped, tag = 'scratch operand']
  #allocation3 [shape = 'bf16[128,128]{1,0:T(8,128)(2,1)}', space=vmem, size = 0x8000, scoped, tag = 'scratch operand']
  %s0 = inlined_call_operand.hbm [shape: bf16[2,128,128], index: 0, kind: input, shape index: {}]
  %s1 = inlined_call_operand.hbm [shape: bf16[128,512], index: 1, kind: input, shape index: {}]
  %s2 = inlined_call_operand.hbm [shape: bf16[1,128,512], index: 2, kind: input, shape index: {}]
  %s3 = inlined_call_operand.hbm [shape: bf16[2,128,512], index: 3, kind: input, shape index: {}]
  %s4 = inlined_call_operand.hbm [shape: f32[2,1,512], index: 4, kind: input, shape index: {}]
  %s5 = inlined_call_operand.hbm [shape: f32[2,32,128], index: 5, kind: output, shape index: {0}]
  %s6 = inlined_call_operand.hbm [shape: f32[2,32,128], index: 6, kind: output, shape index: {1}]
  %7 = xla_tuple %s5, %s6
  %s8 = sld [smem:[#allocation0]]
  $region108: #{tpu_custom_call.1} parent=0
    _
  %s10 = ssub.s32 1, %s8
  %s11 = scalar_select 0, %s10, %s8
  $region1: #{tpu_custom_call.1} parent=0
    #allocation4 [shape = 'u8[65536]{0}', space=vmem, size = 0x10000, scoped, tag = 'input window, operand 0']
    #allocation5 [shape = 's32[2]{0}', space=sflag, size = 0x8, scoped, tag = 'scoped memory for tpu_custom_call.1']
    #allocation6 [shape = 's32[2]{0}', space=sflag, size = 0x8, scoped, tag = 'scoped memory for tpu_custom_call.1']
    #allocation7 [shape = 'u8[131072]{0}', space=vmem, size = 0x20000, scoped, tag = 'input window, operand 1, single buffered']
    #allocation8 [shape = 's32[1]{0}', space=sflag, size = 0x4, scoped, tag = 'scoped memory for tpu_custom_call.1']
    #allocation9 [shape = 'u8[262144]{0}', space=vmem, size = 0x40000, scoped, tag = 'input window, operand 2']
    #allocation10 [shape = 'u8[262144]{0}', space=vmem, size = 0x40000, scoped, tag = 'input window, operand 3']
    #allocation11 [shape = 'u8[4096]{0}', space=vmem, size = 0x1000, scoped, tag = 'input window, operand 4']
    #allocation12 [shape = 'u8[16384]{0}', space=vmem, size = 0x4000, scoped, tag = 'output window, operand 0']
    #allocation13 [shape = 'u8[16384]{0}', space=vmem, size = 0x4000, scoped, tag = 'output window, operand 1']
    #allocation14 [shape = 's32[2]{0}', space=sflag, size = 0x8, scoped, tag = 'scoped memory for tpu_custom_call.1']
    %12 = vsyncpa [#allocation5], 0
    %s13 = scalar_lea.sflag [#allocation5], 1
    %14 = vsyncpa %s13, 0
    %15 = vsyncpa [#allocation8], 0
    %16 = vsyncpa [#allocation6], 0
    %s17 = scalar_lea.sflag [#allocation6], 1
    %18 = vsyncpa %s17, 0
    %19 = vsyncpa [#allocation14], 0
    %s20 = scalar_lea.sflag [#allocation14], 1
    %21 = vsyncpa %s20, 0
    loop: start=0, step=1, limit=6
    $region2: #{tpu_custom_call.1} parent=1 // loop_pre_header
      _
    $region3: #{tpu_custom_call.1} parent=1 // loop_header
      %s23 = sphi 0, %s27
      %p24 = scmp.ge.s32.totalorder %s23, 6
      %s30 = sphi 0, %s42
      %s31 = sphi 0, %s38
      %s32 = sphi 0, %s30
      %s33 = sphi 0, %s31
      %s34 = sphi 0, %s32
      %s35 = sphi 0, %s33
      %s45 = sphi 0, %s47
      %s48 = sphi 0, %s45
      %s49 = sphi 0, %s48
      %s65 = sphi 0, %s49
      %s69 = sphi 0, %s69
      %s71 = sphi 0, %s69
      %s72 = sphi 0, %s71
      %s86 = sphi 0, %s72
      %s98 = sphi 0, %s100
      %s101 = sphi 0, %s98
      %s102 = sphi 0, %s101
      %s118 = sphi 0, %s102
      %s124 = sphi 0, %s126
      %s127 = sphi 0, %s124
      %s128 = sphi 0, %s127
      %s144 = sphi 0, %s128
      %s150 = sphi 0, %s152
      %s153 = sphi 0, %s150
      %s154 = sphi 0, %s153
      %s170 = sphi 0, %s154
      %s178 = sphi 0, %s180
      %s181 = sphi 0, %s178
      %s182 = sphi 0, %s181
      %s198 = sphi 0, %s182
      %s206 = sphi 0, %s208
      %s209 = sphi 0, %s206
      %s210 = sphi 0, %s209
      %s226 = sphi 0, %s210
    $region4: #{tpu_custom_call.1} parent=1 // loop_header_branch
      %26 = sbr.rel (%p24) target = $region8
    $region5: #{tpu_custom_call.1} parent=1 // loop_body
      %s28 = ssub.s32 %s23, 1
      %s29 = ssub.s32 %s23, 2
      %s36 = sadd.s32 1, %s31
      %p37 = scmp.ge.s32.totalorder %s36, 2
      %s38 = scalar_select %p37, 0, %s36
      %s39 = sadd.s32 1, %s30
      %s40 = scalar_select %p37, %s39, %s30
      %p41 = scmp.ge.s32.totalorder %s40, 2
      %s42 = scalar_select %p41, 0, %s40
      %s43 = ssub.s32 %s30, %s42
      %p44 = scmp.eq.s32.totalorder %s43, 0
      %s46 = sadd.s32 %s45, 1
      %s47 = scalar_select %p44, %s45, %s46
      %p50 = pneg %p44
      %p51 = scmp.eq.s32.totalorder %s23, 3
      %p52 = por %p50, %p51
      %p53 = scmp.ne.s32.totalorder %s45, %s48
      %p54 = scmp.eq.s32.totalorder %s23, 0
      %p55 = por %p53, %p54
      %p56 = scmp.ne.s32.totalorder %s45, %s48
      %p57 = scmp.eq.s32.totalorder %s28, 3
      %p58 = por %p56, %p57
      %p59 = scmp.ne.s32.totalorder %s48, %s49
      %p60 = scmp.eq.s32.totalorder %s28, 0
      %p61 = por %p59, %p60
      %p62 = scmp.ne.s32.totalorder %s48, %s49
      %p63 = scmp.eq.s32.totalorder %s29, 3
      %p64 = por %p62, %p63
      %p66 = scmp.ne.s32.totalorder %s49, %s65
      %p67 = scmp.eq.s32.totalorder %s29, 0
      %p68 = por %p66, %p67
      %s70 = sadd.s32 %s69, 1
      %p73 = scmp.eq.s32.totalorder %s23, 3
      %p74 = scmp.ne.s32.totalorder %s69, %s71
      %p75 = scmp.eq.s32.totalorder %s23, 0
      %p76 = por %p74, %p75
      %p77 = scmp.ne.s32.totalorder %s69, %s71
      %p78 = scmp.eq.s32.totalorder %s28, 3
      %p79 = por %p77, %p78
      %p80 = scmp.ne.s32.totalorder %s71, %s72
      %p81 = scmp.eq.s32.totalorder %s28, 0
      %p82 = por %p80, %p81
      %p83 = scmp.ne.s32.totalorder %s71, %s72
      %p84 = scmp.eq.s32.totalorder %s29, 3
      %p85 = por %p83, %p84
      %p87 = scmp.ne.s32.totalorder %s72, %s86
      %p88 = scmp.eq.s32.totalorder %s29, 0
      %p89 = por %p87, %p88
      %s90 = ssub.s32 %s31, 1
      %p91 = scmp.gt.s32.totalorder %s90, 0
      %s92 = scalar_select %p91, %s90, 0
      %s93 = ssub.s32 %s38, 1
      %p94 = scmp.gt.s32.totalorder %s93, 0
      %s95 = scalar_select %p94, %s93, 0
      %s96 = ssub.s32 %s92, %s95
      %p97 = scmp.eq.s32.totalorder %s96, 0
      %s99 = sadd.s32 %s98, 1
      %s100 = scalar_select %p97, %s98, %s99
      %p103 = pneg %p97
      %p104 = scmp.eq.s32.totalorder %s23, 3
      %p105 = por %p103, %p104
      %p106 = scmp.ne.s32.totalorder %s98, %s101
      %p107 = scmp.eq.s32.totalorder %s23, 0
      %p108 = por %p106, %p107
      %p109 = scmp.ne.s32.totalorder %s98, %s101
      %p110 = scmp.eq.s32.totalorder %s28, 3
      %p111 = por %p109, %p110
      %p112 = scmp.ne.s32.totalorder %s101, %s102
      %p113 = scmp.eq.s32.totalorder %s28, 0
      %p114 = por %p112, %p113
      %p115 = scmp.ne.s32.totalorder %s101, %s102
      %p116 = scmp.eq.s32.totalorder %s29, 3
      %p117 = por %p115, %p116
      %p119 = scmp.ne.s32.totalorder %s102, %s118
      %p120 = scmp.eq.s32.totalorder %s29, 0
      %p121 = por %p119, %p120
      %s122 = ssub.s32 %s31, %s38
      %p123 = scmp.eq.s32.totalorder %s122, 0
      %s125 = sadd.s32 %s124, 1
      %s126 = scalar_select %p123, %s124, %s125
      %p129 = pneg %p123
      %p130 = scmp.eq.s32.totalorder %s23, 3
      %p131 = por %p129, %p130
      %p132 = scmp.ne.s32.totalorder %s124, %s127
      %p133 = scmp.eq.s32.totalorder %s23, 0
      %p134 = por %p132, %p133
      %p135 = scmp.ne.s32.totalorder %s124, %s127
      %p136 = scmp.eq.s32.totalorder %s28, 3
      %p137 = por %p135, %p136
      %p138 = scmp.ne.s32.totalorder %s127, %s128
      %p139 = scmp.eq.s32.totalorder %s28, 0
      %p140 = por %p138, %p139
      %p141 = scmp.ne.s32.totalorder %s127, %s128
      %p142 = scmp.eq.s32.totalorder %s29, 3
      %p143 = por %p141, %p142
      %p145 = scmp.ne.s32.totalorder %s128, %s144
      %p146 = scmp.eq.s32.totalorder %s29, 0
      %p147 = por %p145, %p146
      %s148 = ssub.s32 %s31, %s38
      %p149 = scmp.eq.s32.totalorder %s148, 0
      %s151 = sadd.s32 %s150, 1
      %s152 = scalar_select %p149, %s150, %s151
      %p155 = pneg %p149
      %p156 = scmp.eq.s32.totalorder %s23, 3
      %p157 = por %p155, %p156
      %p158 = scmp.ne.s32.totalorder %s150, %s153
      %p159 = scmp.eq.s32.totalorder %s23, 0
      %p160 = por %p158, %p159
      %p161 = scmp.ne.s32.totalorder %s150, %s153
      %p162 = scmp.eq.s32.totalorder %s28, 3
      %p163 = por %p161, %p162
      %p164 = scmp.ne.s32.totalorder %s153, %s154
      %p165 = scmp.eq.s32.totalorder %s28, 0
      %p166 = por %p164, %p165
      %p167 = scmp.ne.s32.totalorder %s153, %s154
      %p168 = scmp.eq.s32.totalorder %s29, 3
      %p169 = por %p167, %p168
      %p171 = scmp.ne.s32.totalorder %s154, %s170
      %p172 = scmp.eq.s32.totalorder %s29, 0
      %p173 = por %p171, %p172
      %s174 = ssub.s32 %s31, %s38
      %s175 = ssub.s32 %s30, %s42
      %s176 = sor.u32 %s174, %s175
      %p177 = scmp.eq.s32.totalorder %s176, 0
      %s179 = sadd.s32 %s178, 1
      %s180 = scalar_select %p177, %s178, %s179
      %p183 = pneg %p177
      %p184 = scmp.eq.s32.totalorder %s23, 3
      %p185 = por %p183, %p184
      %p186 = scmp.ne.s32.totalorder %s178, %s181
      %p187 = scmp.eq.s32.totalorder %s23, 0
      %p188 = por %p186, %p187
      %p189 = scmp.ne.s32.totalorder %s178, %s181
      %p190 = scmp.eq.s32.totalorder %s28, 3
      %p191 = por %p189, %p190
      %p192 = scmp.ne.s32.totalorder %s181, %s182
      %p193 = scmp.eq.s32.totalorder %s28, 0
      %p194 = por %p192, %p193
      %p195 = scmp.ne.s32.totalorder %s181, %s182
      %p196 = scmp.eq.s32.totalorder %s29, 3
      %p197 = por %p195, %p196
      %p199 = scmp.ne.s32.totalorder %s182, %s198
      %p200 = scmp.eq.s32.totalorder %s29, 0
      %p201 = por %p199, %p200
      %s202 = ssub.s32 %s31, %s38
      %s203 = ssub.s32 %s30, %s42
      %s204 = sor.u32 %s202, %s203
      %p205 = scmp.eq.s32.totalorder %s204, 0
      %s207 = sadd.s32 %s206, 1
      %s208 = scalar_select %p205, %s206, %s207
      %p211 = pneg %p205
      %p212 = scmp.eq.s32.totalorder %s23, 3
      %p213 = por %p211, %p212
      %p214 = scmp.ne.s32.totalorder %s206, %s209
      %p215 = scmp.eq.s32.totalorder %s23, 0
      %p216 = por %p214, %p215
      %p217 = scmp.ne.s32.totalorder %s206, %s209
      %p218 = scmp.eq.s32.totalorder %s28, 3
      %p219 = por %p217, %p218
      %p220 = scmp.ne.s32.totalorder %s209, %s210
      %p221 = scmp.eq.s32.totalorder %s28, 0
      %p222 = por %p220, %p221
      %p223 = scmp.ne.s32.totalorder %s209, %s210
      %p224 = scmp.eq.s32.totalorder %s29, 3
      %p225 = por %p223, %p224
      %p227 = scmp.ne.s32.totalorder %s210, %s226
      %p228 = scmp.eq.s32.totalorder %s29, 0
      %p229 = por %p227, %p228
      %p230 = scmp.le.s32.totalorder 1, %s23
      %p231 = scmp.lt.s32.totalorder %s23, 5
      %p232 = pnand %p230, %p231
      %p233 = pneg %p232
      // Predicated region
      $region9: #{tpu_custom_call.1} parent=5 // pred_check
        _
      $region10: #{tpu_custom_call.1} parent=5 // pred_check_branch
        %235 = sbr.rel (%p232) target = $region12
      $region11: #{tpu_custom_call.1} parent=5 // pred_region
        %s236 = ssub.s32 %s23, 1
        // Predicated region
        $region13: #{tpu_custom_call.1} parent=11 // pred_check
          %p237 = pneg %p82
        $region14: #{tpu_custom_call.1} parent=11 // pred_check_branch
          %239 = sbr.rel (%p237) target = $region16
        $region15: #{tpu_custom_call.1} parent=11 // pred_region
          %s241 = ssub.s32 4096, 4096
          %242 = vsyncadd [#allocation8], %s241
          %s243 = sshll.u32 [#allocation7], 4
          %s244 = int_to_ptr.vmem [resolvable:$true] %s243
          %249 = dma.hbm_to_vmem [thread:$0]  %s1, 4096, %s244, [#allocation8], 256, 256, 16
        $region16: #{tpu_custom_call.1} parent=11 // pred_fallthru
          _
      $region12: #{tpu_custom_call.1} parent=5 // pred_fallthru
        _
      %p250 = scmp.lt.s32.totalorder %s23, 4
      // Predicated region
      $region17: #{tpu_custom_call.1} parent=5 // pred_check
        %p251 = pneg %p250
      $region18: #{tpu_custom_call.1} parent=5 // pred_check_branch
        %253 = sbr.rel (%p251) target = $region20
      $region19: #{tpu_custom_call.1} parent=5 // pred_region
        // Predicated region
        $region21: #{tpu_custom_call.1} parent=19 // pred_check
          %p254 = pneg %p55
        $region22: #{tpu_custom_call.1} parent=19 // pred_check_branch
          %256 = sbr.rel (%p254) target = $region24
        $region23: #{tpu_custom_call.1} parent=19 // pred_region
          %s257 = sand.u32 %s23, 1
          %s258 = scalar_lea.sflag [#allocation5], %s257
          %s259 = sand.u32 %s45, 1
          %s260 = smul.addr %s259, 64
          %s261 = scalar_lea.vmem [#allocation4], %s260
          %s263 = ssub.s32 1024, 1024
          %264 = vsyncadd %s258, %s263
          %s265 = smul.addr %s30, 16
          %s266 = smul.addr %s265, 64
          %s267 = scalar_lea.hbm %s0, %s266
          %s268 = sshll.u32 %s261, 4
          %s269 = int_to_ptr.vmem [resolvable:$true] %s268
          %274 = dma.hbm_to_vmem [thread:$0]  %s267, 1024, %s269, %s258, 64, 64, 4
        $region24: #{tpu_custom_call.1} parent=19 // pred_fallthru
          _
        // Predicated region
        $region25: #{tpu_custom_call.1} parent=19 // pred_check
          %p275 = pneg %p108
        $region26: #{tpu_custom_call.1} parent=19 // pred_check_branch
          %277 = sbr.rel (%p275) target = $region28
        $region27: #{tpu_custom_call.1} parent=19 // pred_region
          %s278 = sand.u32 %s23, 1
          %s279 = scalar_lea.sflag [#allocation5], %s278
          %s280 = sand.u32 %s98, 1
          %s281 = smul.addr %s280, 256
          %s282 = scalar_lea.vmem [#allocation9], %s281
          %s283 = ssub.s32 %s31, 1
          %p284 = scmp.gt.s32.totalorder %s283, 0
          %s285 = scalar_select %p284, %s283, 0
          %s287 = ssub.s32 4096, 4096
          %288 = vsyncadd %s279, %s287
          %s289 = smul.addr %s285, 64
          %s290 = smul.addr %s289, 64
          %s291 = scalar_lea.hbm %s2, %s290
          %s292 = sshll.u32 %s282, 4
          %s293 = int_to_ptr.vmem [resolvable:$true] %s292
          %298 = dma.hbm_to_vmem [thread:$0]  %s291, 4096, %s293, %s279, 256, 256, 16
        $region28: #{tpu_custom_call.1} parent=19 // pred_fallthru
          _
        // Predicated region
        $region29: #{tpu_custom_call.1} parent=19 // pred_check
          %p299 = pneg %p134
        $region30: #{tpu_custom_call.1} parent=19 // pred_check_branch
          %301 = sbr.rel (%p299) target = $region32
        $region31: #{tpu_custom_call.1} parent=19 // pred_region
          %s302 = sand.u32 %s23, 1
          %s303 = scalar_lea.sflag [#allocation5], %s302
          %s304 = sand.u32 %s124, 1
          %s305 = smul.addr %s304, 256
          %s306 = scalar_lea.vmem [#allocation10], %s305
          %s308 = ssub.s32 4096, 4096
          %309 = vsyncadd %s303, %s308
          %s310 = smul.addr %s31, 64
          %s311 = smul.addr %s310, 64
          %s312 = scalar_lea.hbm %s3, %s311
          %s313 = sshll.u32 %s306, 4
          %s314 = int_to_ptr.vmem [resolvable:$true] %s313
          %319 = dma.hbm_to_vmem [thread:$0]  %s312, 4096, %s314, %s303, 256, 256, 16
        $region32: #{tpu_custom_call.1} parent=19 // pred_fallthru
          _
        // Predicated region
        $region33: #{tpu_custom_call.1} parent=19 // pred_check
          %p320 = pneg %p160
        $region34: #{tpu_custom_call.1} parent=19 // pred_check_branch
          %322 = sbr.rel (%p320) target = $region36
        $region35: #{tpu_custom_call.1} parent=19 // pred_region
          %s323 = sand.u32 %s23, 1
          %s324 = scalar_lea.sflag [#allocation5], %s323
          %s325 = sand.u32 %s150, 1
          %s326 = smul.addr %s325, 4
          %s327 = scalar_lea.vmem [#allocation11], %s326
          %s329 = ssub.s32 64, 64
          %330 = vsyncadd %s324, %s329
          %s331 = smul.addr %s31, 4
          %s332 = smul.addr %s331, 16
          %s333 = scalar_lea.hbm %s4, %s332
          %s335 = sshll.u32 %s327, 4
          %s336 = int_to_ptr.vmem [resolvable:$true] %s335
          %338 = dma.hbm_to_vmem [thread:$0]  %s333, 64, %s336, %s324
        $region36: #{tpu_custom_call.1} parent=19 // pred_fallthru
          _
      $region20: #{tpu_custom_call.1} parent=5 // pred_fallthru
        _
      %p339 = scmp.le.s32.totalorder 1, %s23
      %p340 = scmp.lt.s32.totalorder %s23, 5
      %p341 = pnand %p339, %p340
      %p342 = pneg %p341
      // Predicated region
      $region37: #{tpu_custom_call.1} parent=5 // pred_check
        _
      $region38: #{tpu_custom_call.1} parent=5 // pred_check_branch
        %344 = sbr.rel (%p341) target = $region40
      $region39: #{tpu_custom_call.1} parent=5 // pred_region
        %s345 = ssub.s32 %s23, 1
        %s346 = sand.u32 %s28, 1
        %s347 = scalar_lea.sflag [#allocation5], %s346
        %s348 = sand.u32 %s48, 1
        %s349 = smul.addr %s348, 64
        %s350 = scalar_lea.vmem [#allocation4], %s349
        // Predicated region
        $region41: #{tpu_custom_call.1} parent=39 // pred_check
          %p351 = pneg %p61
        $region42: #{tpu_custom_call.1} parent=39 // pred_check_branch
          %353 = sbr.rel (%p351) target = $region44
        $region43: #{tpu_custom_call.1} parent=39 // pred_region
          %354 = dma.done %s347, 1024
        $region44: #{tpu_custom_call.1} parent=39 // pred_fallthru
          _
        // Predicated region
        $region45: #{tpu_custom_call.1} parent=39 // pred_check
          %p355 = pneg %p82
        $region46: #{tpu_custom_call.1} parent=39 // pred_check_branch
          %357 = sbr.rel (%p355) target = $region48
        $region47: #{tpu_custom_call.1} parent=39 // pred_region
          %358 = dma.done [#allocation8], 4096
        $region48: #{tpu_custom_call.1} parent=39 // pred_fallthru
          _
        %s359 = sand.u32 %s28, 1
        %s360 = scalar_lea.sflag [#allocation5], %s359
        %s361 = sand.u32 %s101, 1
        %s362 = smul.addr %s361, 256
        %s363 = scalar_lea.vmem [#allocation9], %s362
        // Predicated region
        $region49: #{tpu_custom_call.1} parent=39 // pred_check
          %p364 = pneg %p114
        $region50: #{tpu_custom_call.1} parent=39 // pred_check_branch
          %366 = sbr.rel (%p364) target = $region52
        $region51: #{tpu_custom_call.1} parent=39 // pred_region
          %367 = dma.done %s360, 4096
        $region52: #{tpu_custom_call.1} parent=39 // pred_fallthru
          _
        %s368 = sand.u32 %s28, 1
        %s369 = scalar_lea.sflag [#allocation5], %s368
        %s370 = sand.u32 %s127, 1
        %s371 = smul.addr %s370, 256
        %s372 = scalar_lea.vmem [#allocation10], %s371
        // Predicated region
        $region53: #{tpu_custom_call.1} parent=39 // pred_check
          %p373 = pneg %p140
        $region54: #{tpu_custom_call.1} parent=39 // pred_check_branch
          %375 = sbr.rel (%p373) target = $region56
        $region55: #{tpu_custom_call.1} parent=39 // pred_region
          %376 = dma.done %s369, 4096
        $region56: #{tpu_custom_call.1} parent=39 // pred_fallthru
          _
        %s377 = sand.u32 %s28, 1
        %s378 = scalar_lea.sflag [#allocation5], %s377
        %s379 = sand.u32 %s153, 1
        %s380 = smul.addr %s379, 4
        %s381 = scalar_lea.vmem [#allocation11], %s380
        // Predicated region
        $region57: #{tpu_custom_call.1} parent=39 // pred_check
          %p382 = pneg %p166
        $region58: #{tpu_custom_call.1} parent=39 // pred_check_branch
          %384 = sbr.rel (%p382) target = $region60
        $region59: #{tpu_custom_call.1} parent=39 // pred_region
          %385 = dma.done %s378, 64
        $region60: #{tpu_custom_call.1} parent=39 // pred_fallthru
          _
        %s386 = sand.u32 %s28, 1
        %s387 = scalar_lea.sflag [#allocation5], %s386
        %s388 = sand.u32 %s48, 1
        %s389 = smul.addr %s388, 64
        %s390 = scalar_lea.vmem [#allocation4], %s389
        %p391 = pneg %p61
        %p392 = pneg %p58
        %p393 = pneg %p82
        %p394 = pneg %p79
        %s395 = sand.u32 %s28, 1
        %s396 = scalar_lea.sflag [#allocation5], %s395
        %s397 = sand.u32 %s101, 1
        %s398 = smul.addr %s397, 256
        %s399 = scalar_lea.vmem [#allocation9], %s398
        %p400 = pneg %p114
        %p401 = pneg %p111
        %s402 = sand.u32 %s28, 1
        %s403 = scalar_lea.sflag [#allocation5], %s402
        %s404 = sand.u32 %s127, 1
        %s405 = smul.addr %s404, 256
        %s406 = scalar_lea.vmem [#allocation10], %s405
        %p407 = pneg %p140
        %p408 = pneg %p137
        %s409 = sand.u32 %s28, 1
        %s410 = scalar_lea.sflag [#allocation5], %s409
        %s411 = sand.u32 %s153, 1
        %s412 = smul.addr %s411, 4
        %s413 = scalar_lea.vmem [#allocation11], %s412
        %p414 = pneg %p166
        %p415 = pneg %p163
        %p416 = pneg %p194
        %p417 = pneg %p191
        %s418 = sand.u32 %s181, 1
        %s419 = scalar_lea.sflag [#allocation6], %s418
        %s420 = sand.u32 %s181, 1
        %s421 = smul.addr %s420, 16
        %s422 = scalar_lea.vmem [#allocation12], %s421
        %p423 = pneg %p222
        %p424 = pneg %p219
        %s425 = sand.u32 %s209, 1
        %s426 = scalar_lea.sflag [#allocation14], %s425
        %s427 = sand.u32 %s209, 1
        %s428 = smul.addr %s427, 16
        %s429 = scalar_lea.vmem [#allocation13], %s428
        %s430 = ssub.s32 %s33, 1
        %p431 = scmp.gt.s32.totalorder %s430, 0
        %s432 = scalar_select %p431, %s430, 0
        %s433 = smul.u32 2, %s32
        %s434 = smul.u32 2, %s32
        %v436 = vld [vmem:[%s381] sm:$0xf]
        %p437 = scmp.eq.s32.totalorder %s33, 0
        // Predicated region
        $region61: #{tpu_custom_call.1} parent=39 // pred_check
          %p438 = pneg %p437
        $region62: #{tpu_custom_call.1} parent=39 // pred_check_branch
          %440 = sbr.rel (%p438) target = $region64
        $region63: #{tpu_custom_call.1} parent=39 // pred_region
          %v441 = vld [vmem:[%s350] sm:$0xf]
          %v442 = vld [vmem:[%s350 + $0x4] sm:$0xf]
          %v443 = vld [vmem:[%s350 + $0x8] sm:$0xf]
          %v444 = vld [vmem:[%s350 + $0xc] sm:$0xf]
          %v445 = vld [vmem:[%s350 + $0x10] sm:$0xf]
          %v446 = vld [vmem:[%s350 + $0x14] sm:$0xf]
          %v447 = vld [vmem:[%s350 + $0x18] sm:$0xf]
          %v448 = vld [vmem:[%s350 + $0x1c] sm:$0xf]
          %v449 = vld [vmem:[#allocation7] sm:$0xff]
          %v450 = vld [vmem:[#allocation7 + $0x8] sm:$0xff]
          %v451 = vld [vmem:[#allocation7 + $0x10] sm:$0xff]
          %v452 = vld [vmem:[#allocation7 + $0x18] sm:$0xff]
          %v453 = vld [vmem:[#allocation7 + $0x20] sm:$0xff]
          %v454 = vld [vmem:[#allocation7 + $0x28] sm:$0xff]
          %v455 = vld [vmem:[#allocation7 + $0x30] sm:$0xff]
          %v456 = vld [vmem:[#allocation7 + $0x38] sm:$0xff]
          %v457 = vld [vmem:[#allocation7 + $0x40] sm:$0xff]
          %v458 = vld [vmem:[#allocation7 + $0x48] sm:$0xff]
          %v459 = vld [vmem:[#allocation7 + $0x50] sm:$0xff]
          %v460 = vld [vmem:[#allocation7 + $0x58] sm:$0xff]
          %v461 = vld [vmem:[#allocation7 + $0x60] sm:$0xff]
          %v462 = vld [vmem:[#allocation7 + $0x68] sm:$0xff]
          %v463 = vld [vmem:[#allocation7 + $0x70] sm:$0xff]
          %v464 = vld [vmem:[#allocation7 + $0x78] sm:$0xff]
          %v465 = vld [vmem:[#allocation7 + $0x80] sm:$0xff]
          %v466 = vld [vmem:[#allocation7 + $0x88] sm:$0xff]
          %v467 = vld [vmem:[#allocation7 + $0x90] sm:$0xff]
          %v468 = vld [vmem:[#allocation7 + $0x98] sm:$0xff]
          %v469 = vld [vmem:[#allocation7 + $0xa0] sm:$0xff]
          %v470 = vld [vmem:[#allocation7 + $0xa8] sm:$0xff]
          %v471 = vld [vmem:[#allocation7 + $0xb0] sm:$0xff]
          %v472 = vld [vmem:[#allocation7 + $0xb8] sm:$0xff]
          %v473 = vld [vmem:[#allocation7 + $0xc0] sm:$0xff]
          %v474 = vld [vmem:[#allocation7 + $0xc8] sm:$0xff]
          %v475 = vld [vmem:[#allocation7 + $0xd0] sm:$0xff]
          %v476 = vld [vmem:[#allocation7 + $0xd8] sm:$0xff]
          %v477 = vld [vmem:[#allocation7 + $0xe0] sm:$0xff]
          %v478 = vld [vmem:[#allocation7 + $0xe8] sm:$0xff]
          %v479 = vld [vmem:[#allocation7 + $0xf0] sm:$0xff]
          %v480 = vld [vmem:[#allocation7 + $0xf8] sm:$0xff]
          %v482 = vlaneseq
          %v483 = vshrl.u32 %v482, 7
          %v484 = vsub.s32 0, %v483
          %v485 = vrot.slane %v436, %v484
          %v486 = vlaneseq
          %v487 = vshrl.u32 %v486, 7
          %v488 = vsub.s32 1, %v487
          %v489 = vrot.slane %v436, %v488
          %v490 = vlaneseq
          %v491 = vshrl.u32 %v490, 7
          %v492 = vsub.s32 2, %v491
          %v493 = vrot.slane %v436, %v492
          %v494 = vlaneseq
          %v495 = vshrl.u32 %v494, 7
          %v496 = vsub.s32 3, %v495
          %v497 = vrot.slane %v436, %v496
          %v510 = vunpack.c.l.b16 %v441
          %v511 = vunpack.c.l.b16 %v442
          %v512 = vunpack.c.l.b16 %v443
          %v513 = vunpack.c.l.b16 %v444
          %v514 = vunpack.c.l.b16 %v445
          %v515 = vunpack.c.l.b16 %v446
          %v516 = vunpack.c.l.b16 %v447
          %v517 = vunpack.c.l.b16 %v448
          %v518 = vpack.c.b16 %v511, %v510
          %v519 = vpack.c.b16 %v513, %v512
          %v520 = vpack.c.b16 %v515, %v514
          %v521 = vpack.c.b16 %v517, %v516
          %v558 = vunpack.c.l.b16 %v449
          %v559 = vunpack.c.h.b16 %v449
          %v560 = vunpack.c.l.b16 %v450
          %v561 = vunpack.c.h.b16 %v450
          %v562 = vunpack.c.l.b16 %v451
          %v563 = vunpack.c.h.b16 %v451
          %v564 = vunpack.c.l.b16 %v452
          %v565 = vunpack.c.h.b16 %v452
          %v566 = vunpack.c.l.b16 %v453
          %v567 = vunpack.c.h.b16 %v453
          %v568 = vunpack.c.l.b16 %v454
          %v569 = vunpack.c.h.b16 %v454
          %v570 = vunpack.c.l.b16 %v455
          %v571 = vunpack.c.h.b16 %v455
          %v572 = vunpack.c.l.b16 %v456
          %v573 = vunpack.c.h.b16 %v456
          %v574 = vunpack.c.l.b16 %v457
          %v575 = vunpack.c.h.b16 %v457
          %v576 = vunpack.c.l.b16 %v458
          %v577 = vunpack.c.h.b16 %v458
          %v578 = vunpack.c.l.b16 %v459
          %v579 = vunpack.c.h.b16 %v459
          %v580 = vunpack.c.l.b16 %v460
          %v581 = vunpack.c.h.b16 %v460
          %v582 = vunpack.c.l.b16 %v461
          %v583 = vunpack.c.h.b16 %v461
          %v584 = vunpack.c.l.b16 %v462
          %v585 = vunpack.c.h.b16 %v462
          %v586 = vunpack.c.l.b16 %v463
          %v587 = vunpack.c.h.b16 %v463
          %v588 = vunpack.c.l.b16 %v464
          %v589 = vunpack.c.h.b16 %v464
          %v590 = vunpack.c.l.b16 %v465
          %v591 = vunpack.c.h.b16 %v465
          %v592 = vunpack.c.l.b16 %v466
          %v593 = vunpack.c.h.b16 %v466
          %v594 = vunpack.c.l.b16 %v467
          %v595 = vunpack.c.h.b16 %v467
          %v596 = vunpack.c.l.b16 %v468
          %v597 = vunpack.c.h.b16 %v468
          %v598 = vunpack.c.l.b16 %v469
          %v599 = vunpack.c.h.b16 %v469
          %v600 = vunpack.c.l.b16 %v470
          %v601 = vunpack.c.h.b16 %v470
          %v602 = vunpack.c.l.b16 %v471
          %v603 = vunpack.c.h.b16 %v471
          %v604 = vunpack.c.l.b16 %v472
          %v605 = vunpack.c.h.b16 %v472
          %v606 = vunpack.c.l.b16 %v473
          %v607 = vunpack.c.h.b16 %v473
          %v608 = vunpack.c.l.b16 %v474
          %v609 = vunpack.c.h.b16 %v474
          %v610 = vunpack.c.l.b16 %v475
          %v611 = vunpack.c.h.b16 %v475
          %v612 = vunpack.c.l.b16 %v476
          %v613 = vunpack.c.h.b16 %v476
          %v614 = vunpack.c.l.b16 %v477
          %v615 = vunpack.c.h.b16 %v477
          %v616 = vunpack.c.l.b16 %v478
          %v617 = vunpack.c.h.b16 %v478
          %v618 = vunpack.c.l.b16 %v479
          %v619 = vunpack.c.h.b16 %v479
          %v620 = vunpack.c.l.b16 %v480
          %v621 = vunpack.c.h.b16 %v480
          %v622 = vpack.c.b16 %v562, %v558
          %v623 = vpack.c.b16 %v563, %v559
          %v624 = vpack.c.b16 %v564, %v560
          %v625 = vpack.c.b16 %v565, %v561
          %v626 = vpack.c.b16 %v570, %v566
          %v627 = vpack.c.b16 %v571, %v567
          %v628 = vpack.c.b16 %v572, %v568
          %v629 = vpack.c.b16 %v573, %v569
          %v630 = vpack.c.b16 %v578, %v574
          %v631 = vpack.c.b16 %v579, %v575
          %v632 = vpack.c.b16 %v580, %v576
          %v633 = vpack.c.b16 %v581, %v577
          %v634 = vpack.c.b16 %v586, %v582
          %v635 = vpack.c.b16 %v587, %v583
          %v636 = vpack.c.b16 %v588, %v584
          %v637 = vpack.c.b16 %v589, %v585
          %v638 = vpack.c.b16 %v594, %v590
          %v639 = vpack.c.b16 %v595, %v591
          %v640 = vpack.c.b16 %v596, %v592
          %v641 = vpack.c.b16 %v597, %v593
          %v642 = vpack.c.b16 %v602, %v598
          %v643 = vpack.c.b16 %v603, %v599
          %v644 = vpack.c.b16 %v604, %v600
          %v645 = vpack.c.b16 %v605, %v601
          %v646 = vpack.c.b16 %v610, %v606
          %v647 = vpack.c.b16 %v611, %v607
          %v648 = vpack.c.b16 %v612, %v608
          %v649 = vpack.c.b16 %v613, %v609
          %v650 = vpack.c.b16 %v618, %v614
          %v651 = vpack.c.b16 %v619, %v615
          %v652 = vpack.c.b16 %v620, %v616
          %v653 = vpack.c.b16 %v621, %v617
          %686 = vmatprep.subr.bf16.mxu0 %v651
          %687 = vmatpush1.bf16.msra.mxu0 %v650
          %688 = vmatprep.subr.bf16.mxu0 %v647
          %689 = vmatpush1.bf16.msra.mxu0 %v646
          %690 = vmatprep.subr.bf16.mxu0 %v643
          %691 = vmatpush1.bf16.msra.mxu0 %v642
          %692 = vmatprep.subr.bf16.mxu0 %v639
          %693 = vmatpush1.bf16.msra.mxu0 %v638
          %694 = vmatprep.subr.bf16.mxu0 %v635
          %695 = vmatpush1.bf16.msra.mxu0 %v634
          %696 = vmatprep.subr.bf16.mxu0 %v631
          %697 = vmatpush1.bf16.msra.mxu0 %v630
          %698 = vmatprep.subr.bf16.mxu0 %v627
          %699 = vmatpush1.bf16.msra.mxu0 %v626
          %700 = vmatprep.subr.bf16.mxu0 %v623
          %701 = vmatpush1.bf16.msra.mxu0 %v622
          %702 = vmatprep.subr.bf16.mxu0 0
          %703 = vmatpush2.bf16.msra.mxu0 0
          %704 = vmatprep.subr.bf16.mxu0 0
          %705 = vmatpush2.bf16.msra.mxu0 0
          %706 = vmatprep.subr.bf16.mxu0 0
          %707 = vmatpush2.bf16.msra.mxu0 0
          %708 = vmatprep.subr.bf16.mxu0 0
          %709 = vmatpush2.bf16.msra.mxu0 0
          %710 = vmatprep.subr.bf16.mxu0 0
          %711 = vmatpush2.bf16.msra.mxu0 0
          %712 = vmatprep.subr.bf16.mxu0 0
          %713 = vmatpush2.bf16.msra.mxu0 0
          %714 = vmatprep.subr.bf16.mxu0 0
          %715 = vmatpush2.bf16.msra.mxu0 0
          %716 = vmatprep.subr.bf16.mxu0 0
          %717 = vmatpush2.bf16.msra.mxu0 0
          %718 = vmatprep.mubr.bf16.mxu0 0
          %719 = vmatmul.mubr.bf16.gmra.mxu0 %v518
          %v720 = vpop.f32.mrf.mxu0
          %v721 = vadd.f32 %v485, %v720
          %v722 = vpop.f32.mrf.mxu0
          %v723 = vadd.f32 %v489, %v722
          %v724 = vpop.f32.mrf.mxu0
          %v725 = vadd.f32 %v485, %v724
          %v726 = vpop.f32.mrf.mxu0
          %v727 = vadd.f32 %v489, %v726
          %728 = vmatprep.mubr.bf16.mxu0 0
          %729 = vmatmul.mubr.bf16.gmra.mxu0 %v519
          %v730 = vpop.f32.mrf.mxu0
          %v731 = vadd.f32 %v485, %v730
          %v732 = vpop.f32.mrf.mxu0
          %v733 = vadd.f32 %v489, %v732
          %v734 = vpop.f32.mrf.mxu0
          %v735 = vadd.f32 %v485, %v734
          %v736 = vpop.f32.mrf.mxu0
          %v737 = vadd.f32 %v489, %v736
          %738 = vmatprep.mubr.bf16.mxu0 0
          %739 = vmatmul.mubr.bf16.gmra.mxu0 %v520
          %v740 = vpop.f32.mrf.mxu0
          %v741 = vadd.f32 %v485, %v740
          %v742 = vpop.f32.mrf.mxu0
          %v743 = vadd.f32 %v489, %v742
          %v744 = vpop.f32.mrf.mxu0
          %v745 = vadd.f32 %v485, %v744
          %v746 = vpop.f32.mrf.mxu0
          %v747 = vadd.f32 %v489, %v746
          %748 = vmatprep.mubr.bf16.mxu0 0
          %749 = vmatmul.mubr.bf16.gmra.mxu0 %v521
          %v750 = vpop.f32.mrf.mxu0
          %v751 = vadd.f32 %v485, %v750
          %v752 = vpop.f32.mrf.mxu0
          %v753 = vadd.f32 %v489, %v752
          %v754 = vpop.f32.mrf.mxu0
          %v755 = vadd.f32 %v485, %v754
          %v756 = vpop.f32.mrf.mxu0
          %v757 = vadd.f32 %v489, %v756
          %758 = vdwg.mxu0
          %759 = vmatprep.subr.bf16.mxu0 %v653
          %760 = vmatpush1.bf16.msra.mxu0 %v652
          %761 = vmatprep.subr.bf16.mxu0 %v649
          %762 = vmatpush1.bf16.msra.mxu0 %v648
          %763 = vmatprep.subr.bf16.mxu0 %v645
          %764 = vmatpush1.bf16.msra.mxu0 %v644
          %765 = vmatprep.subr.bf16.mxu0 %v641
          %766 = vmatpush1.bf16.msra.mxu0 %v640
          %767 = vmatprep.subr.bf16.mxu0 %v637
          %768 = vmatpush1.bf16.msra.mxu0 %v636
          %769 = vmatprep.subr.bf16.mxu0 %v633
          %770 = vmatpush1.bf16.msra.mxu0 %v632
          %771 = vmatprep.subr.bf16.mxu0 %v629
          %772 = vmatpush1.bf16.msra.mxu0 %v628
          %773 = vmatprep.subr.bf16.mxu0 %v625
          %774 = vmatpush1.bf16.msra.mxu0 %v624
          %775 = vmatprep.subr.bf16.mxu0 0
          %776 = vmatpush2.bf16.msra.mxu0 0
          %777 = vmatprep.subr.bf16.mxu0 0
          %778 = vmatpush2.bf16.msra.mxu0 0
          %779 = vmatprep.subr.bf16.mxu0 0
          %780 = vmatpush2.bf16.msra.mxu0 0
          %781 = vmatprep.subr.bf16.mxu0 0
          %782 = vmatpush2.bf16.msra.mxu0 0
          %783 = vmatprep.subr.bf16.mxu0 0
          %784 = vmatpush2.bf16.msra.mxu0 0
          %785 = vmatprep.subr.bf16.mxu0 0
          %786 = vmatpush2.bf16.msra.mxu0 0
          %787 = vmatprep.subr.bf16.mxu0 0
          %788 = vmatpush2.bf16.msra.mxu0 0
          %789 = vmatprep.subr.bf16.mxu0 0
          %790 = vmatpush2.bf16.msra.mxu0 0
          %791 = vmatprep.mubr.bf16.mxu0 0
          %792 = vmatmul.mubr.bf16.gmra.mxu0 %v518
          %v793 = vpop.f32.mrf.mxu0
          %v794 = vadd.f32 %v493, %v793
          %v795 = vpop.f32.mrf.mxu0
          %v796 = vadd.f32 %v497, %v795
          %v797 = vpop.f32.mrf.mxu0
          %v798 = vadd.f32 %v493, %v797
          %v799 = vpop.f32.mrf.mxu0
          %v800 = vadd.f32 %v497, %v799
          %801 = vmatprep.mubr.bf16.mxu0 0
          %802 = vmatmul.mubr.bf16.gmra.mxu0 %v519
          %v803 = vpop.f32.mrf.mxu0
          %v804 = vadd.f32 %v493, %v803
          %v805 = vpop.f32.mrf.mxu0
          %v806 = vadd.f32 %v497, %v805
          %v807 = vpop.f32.mrf.mxu0
          %v808 = vadd.f32 %v493, %v807
          %v809 = vpop.f32.mrf.mxu0
          %v810 = vadd.f32 %v497, %v809
          %811 = vmatprep.mubr.bf16.mxu0 0
          %812 = vmatmul.mubr.bf16.gmra.mxu0 %v520
          %v813 = vpop.f32.mrf.mxu0
          %v814 = vadd.f32 %v493, %v813
          %v815 = vpop.f32.mrf.mxu0
          %v816 = vadd.f32 %v497, %v815
          %v817 = vpop.f32.mrf.mxu0
          %v818 = vadd.f32 %v493, %v817
          %v819 = vpop.f32.mrf.mxu0
          %v820 = vadd.f32 %v497, %v819
          %821 = vmatprep.mubr.bf16.mxu0 0
          %822 = vmatmul.mubr.bf16.gmra.mxu0 %v521
          %v823 = vpop.f32.mrf.mxu0
          %v824 = vadd.f32 %v493, %v823
          %v825 = vpop.f32.mrf.mxu0
          %v826 = vadd.f32 %v497, %v825
          %v827 = vpop.f32.mrf.mxu0
          %v828 = vadd.f32 %v493, %v827
          %v829 = vpop.f32.mrf.mxu0
          %v830 = vadd.f32 %v497, %v829
          %831 = vdwg.mxu0
          %832 = vst [vmem:[#allocation2] sm:$0xff] %v721
          %833 = vst [vmem:[#allocation2 + $0x8] sm:$0xff] %v723
          %834 = vst [vmem:[#allocation2 + $0x10] sm:$0xff] %v794
          %835 = vst [vmem:[#allocation2 + $0x18] sm:$0xff] %v796
          %836 = vst [vmem:[#allocation2 + $0x20] sm:$0xff] %v725
          %837 = vst [vmem:[#allocation2 + $0x28] sm:$0xff] %v727
          %838 = vst [vmem:[#allocation2 + $0x30] sm:$0xff] %v798
          %839 = vst [vmem:[#allocation2 + $0x38] sm:$0xff] %v800
          %840 = vst [vmem:[#allocation2 + $0x40] sm:$0xff] %v731
          %841 = vst [vmem:[#allocation2 + $0x48] sm:$0xff] %v733
          %842 = vst [vmem:[#allocation2 + $0x50] sm:$0xff] %v804
          %843 = vst [vmem:[#allocation2 + $0x58] sm:$0xff] %v806
          %844 = vst [vmem:[#allocation2 + $0x60] sm:$0xff] %v735
          %845 = vst [vmem:[#allocation2 + $0x68] sm:$0xff] %v737
          %846 = vst [vmem:[#allocation2 + $0x70] sm:$0xff] %v808
          %847 = vst [vmem:[#allocation2 + $0x78] sm:$0xff] %v810
          %848 = vst [vmem:[#allocation2 + $0x80] sm:$0xff] %v741
          %849 = vst [vmem:[#allocation2 + $0x88] sm:$0xff] %v743
          %850 = vst [vmem:[#allocation2 + $0x90] sm:$0xff] %v814
          %851 = vst [vmem:[#allocation2 + $0x98] sm:$0xff] %v816
          %852 = vst [vmem:[#allocation2 + $0xa0] sm:$0xff] %v745
          %853 = vst [vmem:[#allocation2 + $0xa8] sm:$0xff] %v747
          %854 = vst [vmem:[#allocation2 + $0xb0] sm:$0xff] %v818
          %855 = vst [vmem:[#allocation2 + $0xb8] sm:$0xff] %v820
          %856 = vst [vmem:[#allocation2 + $0xc0] sm:$0xff] %v751
          %857 = vst [vmem:[#allocation2 + $0xc8] sm:$0xff] %v753
          %858 = vst [vmem:[#allocation2 + $0xd0] sm:$0xff] %v824
          %859 = vst [vmem:[#allocation2 + $0xd8] sm:$0xff] %v826
          %860 = vst [vmem:[#allocation2 + $0xe0] sm:$0xff] %v755
          %861 = vst [vmem:[#allocation2 + $0xe8] sm:$0xff] %v757
          %862 = vst [vmem:[#allocation2 + $0xf0] sm:$0xff] %v828
          %863 = vst [vmem:[#allocation2 + $0xf8] sm:$0xff] %v830
        $region64: #{tpu_custom_call.1} parent=39 // pred_fallthru
          _
        %p864 = scmp.gt.s32.totalorder %s33, 0
        // Predicated region
        $region65: #{tpu_custom_call.1} parent=39 // pred_check
          %p865 = pneg %p864
        $region66: #{tpu_custom_call.1} parent=39 // pred_check_branch
          %867 = sbr.rel (%p865) target = $region68
        $region67: #{tpu_custom_call.1} parent=39 // pred_region
          %v868 = vld [vmem:[#allocation3] sm:$0xf]
          %v869 = vld [vmem:[#allocation3 + $0x4] sm:$0xf]
          %v870 = vld [vmem:[#allocation3 + $0x8] sm:$0xf]
          %v871 = vld [vmem:[#allocation3 + $0xc] sm:$0xf]
          %v872 = vld [vmem:[#allocation3 + $0x10] sm:$0xf]
          %v873 = vld [vmem:[#allocation3 + $0x14] sm:$0xf]
          %v874 = vld [vmem:[#allocation3 + $0x18] sm:$0xf]
          %v875 = vld [vmem:[#allocation3 + $0x1c] sm:$0xf]
          %v876 = vld [vmem:[%s363] sm:$0xff]
          %v877 = vld [vmem:[%s363 + $0x8] sm:$0xff]
          %v878 = vld [vmem:[%s363 + $0x10] sm:$0xff]
          %v879 = vld [vmem:[%s363 + $0x18] sm:$0xff]
          %v880 = vld [vmem:[%s363 + $0x20] sm:$0xff]
          %v881 = vld [vmem:[%s363 + $0x28] sm:$0xff]
          %v882 = vld [vmem:[%s363 + $0x30] sm:$0xff]
          %v883 = vld [vmem:[%s363 + $0x38] sm:$0xff]
          %v884 = vld [vmem:[%s363 + $0x40] sm:$0xff]
          %v885 = vld [vmem:[%s363 + $0x48] sm:$0xff]
          %v886 = vld [vmem:[%s363 + $0x50] sm:$0xff]
          %v887 = vld [vmem:[%s363 + $0x58] sm:$0xff]
          %v888 = vld [vmem:[%s363 + $0x60] sm:$0xff]
          %v889 = vld [vmem:[%s363 + $0x68] sm:$0xff]
          %v890 = vld [vmem:[%s363 + $0x70] sm:$0xff]
          %v891 = vld [vmem:[%s363 + $0x78] sm:$0xff]
          %v892 = vld [vmem:[%s363 + $0x80] sm:$0xff]
          %v893 = vld [vmem:[%s363 + $0x88] sm:$0xff]
          %v894 = vld [vmem:[%s363 + $0x90] sm:$0xff]
          %v895 = vld [vmem:[%s363 + $0x98] sm:$0xff]
          %v896 = vld [vmem:[%s363 + $0xa0] sm:$0xff]
          %v897 = vld [vmem:[%s363 + $0xa8] sm:$0xff]
          %v898 = vld [vmem:[%s363 + $0xb0] sm:$0xff]
          %v899 = vld [vmem:[%s363 + $0xb8] sm:$0xff]
          %v900 = vld [vmem:[%s363 + $0xc0] sm:$0xff]
          %v901 = vld [vmem:[%s363 + $0xc8] sm:$0xff]
          %v902 = vld [vmem:[%s363 + $0xd0] sm:$0xff]
          %v903 = vld [vmem:[%s363 + $0xd8] sm:$0xff]
          %v904 = vld [vmem:[%s363 + $0xe0] sm:$0xff]
          %v905 = vld [vmem:[%s363 + $0xe8] sm:$0xff]
          %v906 = vld [vmem:[%s363 + $0xf0] sm:$0xff]
          %v907 = vld [vmem:[%s363 + $0xf8] sm:$0xff]
          %v909 = vlaneseq
          %v910 = vshrl.u32 %v909, 7
          %v911 = vsub.s32 0, %v910
          %v912 = vrot.slane %v436, %v911
          %v913 = vlaneseq
          %v914 = vshrl.u32 %v913, 7
          %v915 = vsub.s32 1, %v914
          %v916 = vrot.slane %v436, %v915
          %v917 = vlaneseq
          %v918 = vshrl.u32 %v917, 7
          %v919 = vsub.s32 2, %v918
          %v920 = vrot.slane %v436, %v919
          %v921 = vlaneseq
          %v922 = vshrl.u32 %v921, 7
          %v923 = vsub.s32 3, %v922
          %v924 = vrot.slane %v436, %v923
          %v937 = vunpack.c.l.b16 %v868
          %v938 = vunpack.c.l.b16 %v869
          %v939 = vunpack.c.l.b16 %v870
          %v940 = vunpack.c.l.b16 %v871
          %v941 = vunpack.c.l.b16 %v872
          %v942 = vunpack.c.l.b16 %v873
          %v943 = vunpack.c.l.b16 %v874
          %v944 = vunpack.c.l.b16 %v875
          %v945 = vpack.c.b16 %v938, %v937
          %v946 = vpack.c.b16 %v940, %v939
          %v947 = vpack.c.b16 %v942, %v941
          %v948 = vpack.c.b16 %v944, %v943
          %v985 = vunpack.c.l.b16 %v876
          %v986 = vunpack.c.h.b16 %v876
          %v987 = vunpack.c.l.b16 %v877
          %v988 = vunpack.c.h.b16 %v877
          %v989 = vunpack.c.l.b16 %v878
          %v990 = vunpack.c.h.b16 %v878
          %v991 = vunpack.c.l.b16 %v879
          %v992 = vunpack.c.h.b16 %v879
          %v993 = vunpack.c.l.b16 %v880
          %v994 = vunpack.c.h.b16 %v880
          %v995 = vunpack.c.l.b16 %v881
          %v996 = vunpack.c.h.b16 %v881
          %v997 = vunpack.c.l.b16 %v882
          %v998 = vunpack.c.h.b16 %v882
          %v999 = vunpack.c.l.b16 %v883
          %v1000 = vunpack.c.h.b16 %v883
          %v1001 = vunpack.c.l.b16 %v884
          %v1002 = vunpack.c.h.b16 %v884
          %v1003 = vunpack.c.l.b16 %v885
          %v1004 = vunpack.c.h.b16 %v885
          %v1005 = vunpack.c.l.b16 %v886
          %v1006 = vunpack.c.h.b16 %v886
          %v1007 = vunpack.c.l.b16 %v887
          %v1008 = vunpack.c.h.b16 %v887
          %v1009 = vunpack.c.l.b16 %v888
          %v1010 = vunpack.c.h.b16 %v888
          %v1011 = vunpack.c.l.b16 %v889
          %v1012 = vunpack.c.h.b16 %v889
          %v1013 = vunpack.c.l.b16 %v890
          %v1014 = vunpack.c.h.b16 %v890
          %v1015 = vunpack.c.l.b16 %v891
          %v1016 = vunpack.c.h.b16 %v891
          %v1017 = vunpack.c.l.b16 %v892
          %v1018 = vunpack.c.h.b16 %v892
          %v1019 = vunpack.c.l.b16 %v893
          %v1020 = vunpack.c.h.b16 %v893
          %v1021 = vunpack.c.l.b16 %v894
          %v1022 = vunpack.c.h.b16 %v894
          %v1023 = vunpack.c.l.b16 %v895
          %v1024 = vunpack.c.h.b16 %v895
          %v1025 = vunpack.c.l.b16 %v896
          %v1026 = vunpack.c.h.b16 %v896
          %v1027 = vunpack.c.l.b16 %v897
          %v1028 = vunpack.c.h.b16 %v897
          %v1029 = vunpack.c.l.b16 %v898
          %v1030 = vunpack.c.h.b16 %v898
          %v1031 = vunpack.c.l.b16 %v899
          %v1032 = vunpack.c.h.b16 %v899
          %v1033 = vunpack.c.l.b16 %v900
          %v1034 = vunpack.c.h.b16 %v900
          %v1035 = vunpack.c.l.b16 %v901
          %v1036 = vunpack.c.h.b16 %v901
          %v1037 = vunpack.c.l.b16 %v902
          %v1038 = vunpack.c.h.b16 %v902
          %v1039 = vunpack.c.l.b16 %v903
          %v1040 = vunpack.c.h.b16 %v903
          %v1041 = vunpack.c.l.b16 %v904
          %v1042 = vunpack.c.h.b16 %v904
          %v1043 = vunpack.c.l.b16 %v905
          %v1044 = vunpack.c.h.b16 %v905
          %v1045 = vunpack.c.l.b16 %v906
          %v1046 = vunpack.c.h.b16 %v906
          %v1047 = vunpack.c.l.b16 %v907
          %v1048 = vunpack.c.h.b16 %v907
          %v1049 = vpack.c.b16 %v989, %v985
          %v1050 = vpack.c.b16 %v990, %v986
          %v1051 = vpack.c.b16 %v991, %v987
          %v1052 = vpack.c.b16 %v992, %v988
          %v1053 = vpack.c.b16 %v997, %v993
          %v1054 = vpack.c.b16 %v998, %v994
          %v1055 = vpack.c.b16 %v999, %v995
          %v1056 = vpack.c.b16 %v1000, %v996
          %v1057 = vpack.c.b16 %v1005, %v1001
          %v1058 = vpack.c.b16 %v1006, %v1002
          %v1059 = vpack.c.b16 %v1007, %v1003
          %v1060 = vpack.c.b16 %v1008, %v1004
          %v1061 = vpack.c.b16 %v1013, %v1009
          %v1062 = vpack.c.b16 %v1014, %v1010
          %v1063 = vpack.c.b16 %v1015, %v1011
          %v1064 = vpack.c.b16 %v1016, %v1012
          %v1065 = vpack.c.b16 %v1021, %v1017
          %v1066 = vpack.c.b16 %v1022, %v1018
          %v1067 = vpack.c.b16 %v1023, %v1019
          %v1068 = vpack.c.b16 %v1024, %v1020
          %v1069 = vpack.c.b16 %v1029, %v1025
          %v1070 = vpack.c.b16 %v1030, %v1026
          %v1071 = vpack.c.b16 %v1031, %v1027
          %v1072 = vpack.c.b16 %v1032, %v1028
          %v1073 = vpack.c.b16 %v1037, %v1033
          %v1074 = vpack.c.b16 %v1038, %v1034
          %v1075 = vpack.c.b16 %v1039, %v1035
          %v1076 = vpack.c.b16 %v1040, %v1036
          %v1077 = vpack.c.b16 %v1045, %v1041
          %v1078 = vpack.c.b16 %v1046, %v1042
          %v1079 = vpack.c.b16 %v1047, %v1043
          %v1080 = vpack.c.b16 %v1048, %v1044
          %1113 = vmatprep.subr.bf16.mxu0 %v1078
          %1114 = vmatpush1.bf16.msra.mxu0 %v1077
          %1115 = vmatprep.subr.bf16.mxu0 %v1074
          %1116 = vmatpush1.bf16.msra.mxu0 %v1073
          %1117 = vmatprep.subr.bf16.mxu0 %v1070
          %1118 = vmatpush1.bf16.msra.mxu0 %v1069
          %1119 = vmatprep.subr.bf16.mxu0 %v1066
          %1120 = vmatpush1.bf16.msra.mxu0 %v1065
          %1121 = vmatprep.subr.bf16.mxu0 %v1062
          %1122 = vmatpush1.bf16.msra.mxu0 %v1061
          %1123 = vmatprep.subr.bf16.mxu0 %v1058
          %1124 = vmatpush1.bf16.msra.mxu0 %v1057
          %1125 = vmatprep.subr.bf16.mxu0 %v1054
          %1126 = vmatpush1.bf16.msra.mxu0 %v1053
          %1127 = vmatprep.subr.bf16.mxu0 %v1050
          %1128 = vmatpush1.bf16.msra.mxu0 %v1049
          %1129 = vmatprep.subr.bf16.mxu0 0
          %1130 = vmatpush2.bf16.msra.mxu0 0
          %1131 = vmatprep.subr.bf16.mxu0 0
          %1132 = vmatpush2.bf16.msra.mxu0 0
          %1133 = vmatprep.subr.bf16.mxu0 0
          %1134 = vmatpush2.bf16.msra.mxu0 0
          %1135 = vmatprep.subr.bf16.mxu0 0
          %1136 = vmatpush2.bf16.msra.mxu0 0
          %1137 = vmatprep.subr.bf16.mxu0 0
          %1138 = vmatpush2.bf16.msra.mxu0 0
          %1139 = vmatprep.subr.bf16.mxu0 0
          %1140 = vmatpush2.bf16.msra.mxu0 0
          %1141 = vmatprep.subr.bf16.mxu0 0
          %1142 = vmatpush2.bf16.msra.mxu0 0
          %1143 = vmatprep.subr.bf16.mxu0 0
          %1144 = vmatpush2.bf16.msra.mxu0 0
          %1145 = vmatprep.mubr.bf16.mxu0 0
          %1146 = vmatmul.mubr.bf16.gmra.mxu0 %v945
          %v1147 = vpop.f32.mrf.mxu0
          %v1148 = vadd.f32 %v912, %v1147
          %v1149 = vpop.f32.mrf.mxu0
          %v1150 = vadd.f32 %v916, %v1149
          %v1151 = vpop.f32.mrf.mxu0
          %v1152 = vadd.f32 %v912, %v1151
          %v1153 = vpop.f32.mrf.mxu0
          %v1154 = vadd.f32 %v916, %v1153
          %1155 = vmatprep.mubr.bf16.mxu0 0
          %1156 = vmatmul.mubr.bf16.gmra.mxu0 %v946
          %v1157 = vpop.f32.mrf.mxu0
          %v1158 = vadd.f32 %v912, %v1157
          %v1159 = vpop.f32.mrf.mxu0
          %v1160 = vadd.f32 %v916, %v1159
          %v1161 = vpop.f32.mrf.mxu0
          %v1162 = vadd.f32 %v912, %v1161
          %v1163 = vpop.f32.mrf.mxu0
          %v1164 = vadd.f32 %v916, %v1163
          %1165 = vmatprep.mubr.bf16.mxu0 0
          %1166 = vmatmul.mubr.bf16.gmra.mxu0 %v947
          %v1167 = vpop.f32.mrf.mxu0
          %v1168 = vadd.f32 %v912, %v1167
          %v1169 = vpop.f32.mrf.mxu0
          %v1170 = vadd.f32 %v916, %v1169
          %v1171 = vpop.f32.mrf.mxu0
          %v1172 = vadd.f32 %v912, %v1171
          %v1173 = vpop.f32.mrf.mxu0
          %v1174 = vadd.f32 %v916, %v1173
          %1175 = vmatprep.mubr.bf16.mxu0 0
          %1176 = vmatmul.mubr.bf16.gmra.mxu0 %v948
          %v1177 = vpop.f32.mrf.mxu0
          %v1178 = vadd.f32 %v912, %v1177
          %v1179 = vpop.f32.mrf.mxu0
          %v1180 = vadd.f32 %v916, %v1179
          %v1181 = vpop.f32.mrf.mxu0
          %v1182 = vadd.f32 %v912, %v1181
          %v1183 = vpop.f32.mrf.mxu0
          %v1184 = vadd.f32 %v916, %v1183
          %1185 = vdwg.mxu0
          %1186 = vmatprep.subr.bf16.mxu0 %v1080
          %1187 = vmatpush1.bf16.msra.mxu0 %v1079
          %1188 = vmatprep.subr.bf16.mxu0 %v1076
          %1189 = vmatpush1.bf16.msra.mxu0 %v1075
          %1190 = vmatprep.subr.bf16.mxu0 %v1072
          %1191 = vmatpush1.bf16.msra.mxu0 %v1071
          %1192 = vmatprep.subr.bf16.mxu0 %v1068
          %1193 = vmatpush1.bf16.msra.mxu0 %v1067
          %1194 = vmatprep.subr.bf16.mxu0 %v1064
          %1195 = vmatpush1.bf16.msra.mxu0 %v1063
          %1196 = vmatprep.subr.bf16.mxu0 %v1060
          %1197 = vmatpush1.bf16.msra.mxu0 %v1059
          %1198 = vmatprep.subr.bf16.mxu0 %v1056
          %1199 = vmatpush1.bf16.msra.mxu0 %v1055
          %1200 = vmatprep.subr.bf16.mxu0 %v1052
          %1201 = vmatpush1.bf16.msra.mxu0 %v1051
          %1202 = vmatprep.subr.bf16.mxu0 0
          %1203 = vmatpush2.bf16.msra.mxu0 0
          %1204 = vmatprep.subr.bf16.mxu0 0
          %1205 = vmatpush2.bf16.msra.mxu0 0
          %1206 = vmatprep.subr.bf16.mxu0 0
          %1207 = vmatpush2.bf16.msra.mxu0 0
          %1208 = vmatprep.subr.bf16.mxu0 0
          %1209 = vmatpush2.bf16.msra.mxu0 0
          %1210 = vmatprep.subr.bf16.mxu0 0
          %1211 = vmatpush2.bf16.msra.mxu0 0
          %1212 = vmatprep.subr.bf16.mxu0 0
          %1213 = vmatpush2.bf16.msra.mxu0 0
          %1214 = vmatprep.subr.bf16.mxu0 0
          %1215 = vmatpush2.bf16.msra.mxu0 0
          %1216 = vmatprep.subr.bf16.mxu0 0
          %1217 = vmatpush2.bf16.msra.mxu0 0
          %1218 = vmatprep.mubr.bf16.mxu0 0
          %1219 = vmatmul.mubr.bf16.gmra.mxu0 %v945
          %v1220 = vpop.f32.mrf.mxu0
          %v1221 = vadd.f32 %v920, %v1220
          %v1222 = vpop.f32.mrf.mxu0
          %v1223 = vadd.f32 %v924, %v1222
          %v1224 = vpop.f32.mrf.mxu0
          %v1225 = vadd.f32 %v920, %v1224
          %v1226 = vpop.f32.mrf.mxu0
          %v1227 = vadd.f32 %v924, %v1226
          %1228 = vmatprep.mubr.bf16.mxu0 0
          %1229 = vmatmul.mubr.bf16.gmra.mxu0 %v946
          %v1230 = vpop.f32.mrf.mxu0
          %v1231 = vadd.f32 %v920, %v1230
          %v1232 = vpop.f32.mrf.mxu0
          %v1233 = vadd.f32 %v924, %v1232
          %v1234 = vpop.f32.mrf.mxu0
          %v1235 = vadd.f32 %v920, %v1234
          %v1236 = vpop.f32.mrf.mxu0
          %v1237 = vadd.f32 %v924, %v1236
          %1238 = vmatprep.mubr.bf16.mxu0 0
          %1239 = vmatmul.mubr.bf16.gmra.mxu0 %v947
          %v1240 = vpop.f32.mrf.mxu0
          %v1241 = vadd.f32 %v920, %v1240
          %v1242 = vpop.f32.mrf.mxu0
          %v1243 = vadd.f32 %v924, %v1242
          %v1244 = vpop.f32.mrf.mxu0
          %v1245 = vadd.f32 %v920, %v1244
          %v1246 = vpop.f32.mrf.mxu0
          %v1247 = vadd.f32 %v924, %v1246
          %1248 = vmatprep.mubr.bf16.mxu0 0
          %1249 = vmatmul.mubr.bf16.gmra.mxu0 %v948
          %v1250 = vpop.f32.mrf.mxu0
          %v1251 = vadd.f32 %v920, %v1250
          %v1252 = vpop.f32.mrf.mxu0
          %v1253 = vadd.f32 %v924, %v1252
          %v1254 = vpop.f32.mrf.mxu0
          %v1255 = vadd.f32 %v920, %v1254
          %v1256 = vpop.f32.mrf.mxu0
          %v1257 = vadd.f32 %v924, %v1256
          %1258 = vdwg.mxu0
          %1259 = vst [vmem:[#allocation2] sm:$0xff] %v1148
          %1260 = vst [vmem:[#allocation2 + $0x8] sm:$0xff] %v1150
          %1261 = vst [vmem:[#allocation2 + $0x10] sm:$0xff] %v1221
          %1262 = vst [vmem:[#allocation2 + $0x18] sm:$0xff] %v1223
          %1263 = vst [vmem:[#allocation2 + $0x20] sm:$0xff] %v1152
          %1264 = vst [vmem:[#allocation2 + $0x28] sm:$0xff] %v1154
          %1265 = vst [vmem:[#allocation2 + $0x30] sm:$0xff] %v1225
          %1266 = vst [vmem:[#allocation2 + $0x38] sm:$0xff] %v1227
          %1267 = vst [vmem:[#allocation2 + $0x40] sm:$0xff] %v1158
          %1268 = vst [vmem:[#allocation2 + $0x48] sm:$0xff] %v1160
          %1269 = vst [vmem:[#allocation2 + $0x50] sm:$0xff] %v1231
          %1270 = vst [vmem:[#allocation2 + $0x58] sm:$0xff] %v1233
          %1271 = vst [vmem:[#allocation2 + $0x60] sm:$0xff] %v1162
          %1272 = vst [vmem:[#allocation2 + $0x68] sm:$0xff] %v1164
          %1273 = vst [vmem:[#allocation2 + $0x70] sm:$0xff] %v1235
          %1274 = vst [vmem:[#allocation2 + $0x78] sm:$0xff] %v1237
          %1275 = vst [vmem:[#allocation2 + $0x80] sm:$0xff] %v1168
          %1276 = vst [vmem:[#allocation2 + $0x88] sm:$0xff] %v1170
          %1277 = vst [vmem:[#allocation2 + $0x90] sm:$0xff] %v1241
          %1278 = vst [vmem:[#allocation2 + $0x98] sm:$0xff] %v1243
          %1279 = vst [vmem:[#allocation2 + $0xa0] sm:$0xff] %v1172
          %1280 = vst [vmem:[#allocation2 + $0xa8] sm:$0xff] %v1174
          %1281 = vst [vmem:[#allocation2 + $0xb0] sm:$0xff] %v1245
          %1282 = vst [vmem:[#allocation2 + $0xb8] sm:$0xff] %v1247
          %1283 = vst [vmem:[#allocation2 + $0xc0] sm:$0xff] %v1178
          %1284 = vst [vmem:[#allocation2 + $0xc8] sm:$0xff] %v1180
          %1285 = vst [vmem:[#allocation2 + $0xd0] sm:$0xff] %v1251
          %1286 = vst [vmem:[#allocation2 + $0xd8] sm:$0xff] %v1253
          %1287 = vst [vmem:[#allocation2 + $0xe0] sm:$0xff] %v1182
          %1288 = vst [vmem:[#allocation2 + $0xe8] sm:$0xff] %v1184
          %1289 = vst [vmem:[#allocation2 + $0xf0] sm:$0xff] %v1255
          %1290 = vst [vmem:[#allocation2 + $0xf8] sm:$0xff] %v1257
        $region68: #{tpu_custom_call.1} parent=39 // pred_fallthru
          _
        loop: start=0, step=1, limit=2
        $region69: #{tpu_custom_call.1} parent=39 // loop_pre_header
          _
        $region70: #{tpu_custom_call.1} parent=39 // loop_header
          %s1292 = sphi 0, %s1296
          %p1293 = scmp.ge.s32.totalorder %s1292, 2
          %v1297 = vphi 0.0, %v3616
          %v1298 = vphi 0.0, %v3617
          %v1299 = vphi 0.0, %v3612
          %v1300 = vphi 0.0, %v3613
        $region71: #{tpu_custom_call.1} parent=39 // loop_header_branch
          %1295 = sbr.rel (%p1293) target = $region75
        $region72: #{tpu_custom_call.1} parent=39 // loop_body
          %p1301 = scmp.lt.s32.totalorder %s1292, 0
          %s1302 = ssub.s32 0, %s1292
          %s1303 = scalar_select %p1301, %s1302, %s1292
          %s1304 = sand.u32 %s1303, 1
          %s1305 = ssub.s32 0, %s1304
          %s1306 = scalar_select %p1301, %s1305, %s1304
          %p1307 = scmp.ne.s32.totalorder %s1306, 0
          %p1308 = scmp.lt.s32.totalorder %s1306, 0
          %p1309 = pnand %p1308, %p1307
          %p1310 = pneg %p1309
          %s1311 = sadd.s32 %s1306, 2
          %s1312 = scalar_select %p1310, %s1311, %s1306
          %s1313 = sadd.s32 %s1292, 1
          %p1314 = scmp.lt.s32.totalorder %s1313, 2
          // Predicated region
          $region76: #{tpu_custom_call.1} parent=72 // pred_check
            %p1315 = pneg %p1314
          $region77: #{tpu_custom_call.1} parent=72 // pred_check_branch
            %1317 = sbr.rel (%p1315) target = $region79
          $region78: #{tpu_custom_call.1} parent=72 // pred_region
            %s1318 = ssub.s32 1, %s1312
            %s1319 = smul.u32 %s1313, 64
            %v1320 = vld [vmem:[%s381] sm:$0xf]
            // Predicated region
            $region80: #{tpu_custom_call.1} parent=78 // pred_check
              %p1321 = pneg %p437
            $region81: #{tpu_custom_call.1} parent=78 // pred_check_branch
              %1323 = sbr.rel (%p1321) target = $region83
            $region82: #{tpu_custom_call.1} parent=78 // pred_region
              %s1324 = sshra.s32 %s1319, 3
              %s1325 = sand.u32 %s1319, 7
              %s1326 = smul.addr %s1324, 4
              %s1327 = scalar_lea.vmem %s350, %s1326 [#allocation4]
              %v1328 = vld [vmem:[%s1327] sm:$0xf]
              %v1329 = vld [vmem:[%s1327 + $0x4] sm:$0xf]
              %v1330 = vld [vmem:[%s1327 + $0x8] sm:$0xf]
              %v1331 = vld [vmem:[%s1327 + $0xc] sm:$0xf]
              %v1332 = vld [vmem:[%s1327 + $0x10] sm:$0xf]
              %v1333 = vld [vmem:[%s1327 + $0x14] sm:$0xf]
              %v1334 = vld [vmem:[%s1327 + $0x18] sm:$0xf]
              %v1335 = vld [vmem:[%s1327 + $0x1c] sm:$0xf]
              %v1336 = vld [vmem:[#allocation7] sm:$0xff]
              %v1337 = vld [vmem:[#allocation7 + $0x8] sm:$0xff]
              %v1338 = vld [vmem:[#allocation7 + $0x10] sm:$0xff]
              %v1339 = vld [vmem:[#allocation7 + $0x18] sm:$0xff]
              %v1340 = vld [vmem:[#allocation7 + $0x20] sm:$0xff]
              %v1341 = vld [vmem:[#allocation7 + $0x28] sm:$0xff]
              %v1342 = vld [vmem:[#allocation7 + $0x30] sm:$0xff]
              %v1343 = vld [vmem:[#allocation7 + $0x38] sm:$0xff]
              %v1344 = vld [vmem:[#allocation7 + $0x40] sm:$0xff]
              %v1345 = vld [vmem:[#allocation7 + $0x48] sm:$0xff]
              %v1346 = vld [vmem:[#allocation7 + $0x50] sm:$0xff]
              %v1347 = vld [vmem:[#allocation7 + $0x58] sm:$0xff]
              %v1348 = vld [vmem:[#allocation7 + $0x60] sm:$0xff]
              %v1349 = vld [vmem:[#allocation7 + $0x68] sm:$0xff]
              %v1350 = vld [vmem:[#allocation7 + $0x70] sm:$0xff]
              %v1351 = vld [vmem:[#allocation7 + $0x78] sm:$0xff]
              %v1352 = vld [vmem:[#allocation7 + $0x80] sm:$0xff]
              %v1353 = vld [vmem:[#allocation7 + $0x88] sm:$0xff]
              %v1354 = vld [vmem:[#allocation7 + $0x90] sm:$0xff]
              %v1355 = vld [vmem:[#allocation7 + $0x98] sm:$0xff]
              %v1356 = vld [vmem:[#allocation7 + $0xa0] sm:$0xff]
              %v1357 = vld [vmem:[#allocation7 + $0xa8] sm:$0xff]
              %v1358 = vld [vmem:[#allocation7 + $0xb0] sm:$0xff]
              %v1359 = vld [vmem:[#allocation7 + $0xb8] sm:$0xff]
              %v1360 = vld [vmem:[#allocation7 + $0xc0] sm:$0xff]
              %v1361 = vld [vmem:[#allocation7 + $0xc8] sm:$0xff]
              %v1362 = vld [vmem:[#allocation7 + $0xd0] sm:$0xff]
              %v1363 = vld [vmem:[#allocation7 + $0xd8] sm:$0xff]
              %v1364 = vld [vmem:[#allocation7 + $0xe0] sm:$0xff]
              %v1365 = vld [vmem:[#allocation7 + $0xe8] sm:$0xff]
              %v1366 = vld [vmem:[#allocation7 + $0xf0] sm:$0xff]
              %v1367 = vld [vmem:[#allocation7 + $0xf8] sm:$0xff]
              %v1369 = vlaneseq
              %v1370 = vshrl.u32 %v1369, 7
              %v1371 = vsub.s32 0, %v1370
              %v1372 = vrot.slane %v1320, %v1371
              %v1373 = vlaneseq
              %v1374 = vshrl.u32 %v1373, 7
              %v1375 = vsub.s32 1, %v1374
              %v1376 = vrot.slane %v1320, %v1375
              %v1377 = vlaneseq
              %v1378 = vshrl.u32 %v1377, 7
              %v1379 = vsub.s32 2, %v1378
              %v1380 = vrot.slane %v1320, %v1379
              %v1381 = vlaneseq
              %v1382 = vshrl.u32 %v1381, 7
              %v1383 = vsub.s32 3, %v1382
              %v1384 = vrot.slane %v1320, %v1383
              %v1397 = vunpack.c.l.b16 %v1328
              %v1398 = vunpack.c.l.b16 %v1329
              %v1399 = vunpack.c.l.b16 %v1330
              %v1400 = vunpack.c.l.b16 %v1331
              %v1401 = vunpack.c.l.b16 %v1332
              %v1402 = vunpack.c.l.b16 %v1333
              %v1403 = vunpack.c.l.b16 %v1334
              %v1404 = vunpack.c.l.b16 %v1335
              %v1405 = vpack.c.b16 %v1398, %v1397
              %v1406 = vpack.c.b16 %v1400, %v1399
              %v1407 = vpack.c.b16 %v1402, %v1401
              %v1408 = vpack.c.b16 %v1404, %v1403
              %v1445 = vunpack.c.l.b16 %v1336
              %v1446 = vunpack.c.h.b16 %v1336
              %v1447 = vunpack.c.l.b16 %v1337
              %v1448 = vunpack.c.h.b16 %v1337
              %v1449 = vunpack.c.l.b16 %v1338
              %v1450 = vunpack.c.h.b16 %v1338
              %v1451 = vunpack.c.l.b16 %v1339
              %v1452 = vunpack.c.h.b16 %v1339
              %v1453 = vunpack.c.l.b16 %v1340
              %v1454 = vunpack.c.h.b16 %v1340
              %v1455 = vunpack.c.l.b16 %v1341
              %v1456 = vunpack.c.h.b16 %v1341
              %v1457 = vunpack.c.l.b16 %v1342
              %v1458 = vunpack.c.h.b16 %v1342
              %v1459 = vunpack.c.l.b16 %v1343
              %v1460 = vunpack.c.h.b16 %v1343
              %v1461 = vunpack.c.l.b16 %v1344
              %v1462 = vunpack.c.h.b16 %v1344
              %v1463 = vunpack.c.l.b16 %v1345
              %v1464 = vunpack.c.h.b16 %v1345
              %v1465 = vunpack.c.l.b16 %v1346
              %v1466 = vunpack.c.h.b16 %v1346
              %v1467 = vunpack.c.l.b16 %v1347
              %v1468 = vunpack.c.h.b16 %v1347
              %v1469 = vunpack.c.l.b16 %v1348
              %v1470 = vunpack.c.h.b16 %v1348
              %v1471 = vunpack.c.l.b16 %v1349
              %v1472 = vunpack.c.h.b16 %v1349
              %v1473 = vunpack.c.l.b16 %v1350
              %v1474 = vunpack.c.h.b16 %v1350
              %v1475 = vunpack.c.l.b16 %v1351
              %v1476 = vunpack.c.h.b16 %v1351
              %v1477 = vunpack.c.l.b16 %v1352
              %v1478 = vunpack.c.h.b16 %v1352
              %v1479 = vunpack.c.l.b16 %v1353
              %v1480 = vunpack.c.h.b16 %v1353
              %v1481 = vunpack.c.l.b16 %v1354
              %v1482 = vunpack.c.h.b16 %v1354
              %v1483 = vunpack.c.l.b16 %v1355
              %v1484 = vunpack.c.h.b16 %v1355
              %v1485 = vunpack.c.l.b16 %v1356
              %v1486 = vunpack.c.h.b16 %v1356
              %v1487 = vunpack.c.l.b16 %v1357
              %v1488 = vunpack.c.h.b16 %v1357
              %v1489 = vunpack.c.l.b16 %v1358
              %v1490 = vunpack.c.h.b16 %v1358
              %v1491 = vunpack.c.l.b16 %v1359
              %v1492 = vunpack.c.h.b16 %v1359
              %v1493 = vunpack.c.l.b16 %v1360
              %v1494 = vunpack.c.h.b16 %v1360
              %v1495 = vunpack.c.l.b16 %v1361
              %v1496 = vunpack.c.h.b16 %v1361
              %v1497 = vunpack.c.l.b16 %v1362
              %v1498 = vunpack.c.h.b16 %v1362
              %v1499 = vunpack.c.l.b16 %v1363
              %v1500 = vunpack.c.h.b16 %v1363
              %v1501 = vunpack.c.l.b16 %v1364
              %v1502 = vunpack.c.h.b16 %v1364
              %v1503 = vunpack.c.l.b16 %v1365
              %v1504 = vunpack.c.h.b16 %v1365
              %v1505 = vunpack.c.l.b16 %v1366
              %v1506 = vunpack.c.h.b16 %v1366
              %v1507 = vunpack.c.l.b16 %v1367
              %v1508 = vunpack.c.h.b16 %v1367
              %v1509 = vpack.c.b16 %v1449, %v1445
              %v1510 = vpack.c.b16 %v1450, %v1446
              %v1511 = vpack.c.b16 %v1451, %v1447
              %v1512 = vpack.c.b16 %v1452, %v1448
              %v1513 = vpack.c.b16 %v1457, %v1453
              %v1514 = vpack.c.b16 %v1458, %v1454
              %v1515 = vpack.c.b16 %v1459, %v1455
              %v1516 = vpack.c.b16 %v1460, %v1456
              %v1517 = vpack.c.b16 %v1465, %v1461
              %v1518 = vpack.c.b16 %v1466, %v1462
              %v1519 = vpack.c.b16 %v1467, %v1463
              %v1520 = vpack.c.b16 %v1468, %v1464
              %v1521 = vpack.c.b16 %v1473, %v1469
              %v1522 = vpack.c.b16 %v1474, %v1470
              %v1523 = vpack.c.b16 %v1475, %v1471
              %v1524 = vpack.c.b16 %v1476, %v1472
              %v1525 = vpack.c.b16 %v1481, %v1477
              %v1526 = vpack.c.b16 %v1482, %v1478
              %v1527 = vpack.c.b16 %v1483, %v1479
              %v1528 = vpack.c.b16 %v1484, %v1480
              %v1529 = vpack.c.b16 %v1489, %v1485
              %v1530 = vpack.c.b16 %v1490, %v1486
              %v1531 = vpack.c.b16 %v1491, %v1487
              %v1532 = vpack.c.b16 %v1492, %v1488
              %v1533 = vpack.c.b16 %v1497, %v1493
              %v1534 = vpack.c.b16 %v1498, %v1494
              %v1535 = vpack.c.b16 %v1499, %v1495
              %v1536 = vpack.c.b16 %v1500, %v1496
              %v1537 = vpack.c.b16 %v1505, %v1501
              %v1538 = vpack.c.b16 %v1506, %v1502
              %v1539 = vpack.c.b16 %v1507, %v1503
              %v1540 = vpack.c.b16 %v1508, %v1504
              %1573 = vmatprep.subr.bf16.mxu0 %v1538
              %1574 = vmatpush1.bf16.msra.mxu0 %v1537
              %1575 = vmatprep.subr.bf16.mxu0 %v1534
              %1576 = vmatpush1.bf16.msra.mxu0 %v1533
              %1577 = vmatprep.subr.bf16.mxu0 %v1530
              %1578 = vmatpush1.bf16.msra.mxu0 %v1529
              %1579 = vmatprep.subr.bf16.mxu0 %v1526
              %1580 = vmatpush1.bf16.msra.mxu0 %v1525
              %1581 = vmatprep.subr.bf16.mxu0 %v1522
              %1582 = vmatpush1.bf16.msra.mxu0 %v1521
              %1583 = vmatprep.subr.bf16.mxu0 %v1518
              %1584 = vmatpush1.bf16.msra.mxu0 %v1517
              %1585 = vmatprep.subr.bf16.mxu0 %v1514
              %1586 = vmatpush1.bf16.msra.mxu0 %v1513
              %1587 = vmatprep.subr.bf16.mxu0 %v1510
              %1588 = vmatpush1.bf16.msra.mxu0 %v1509
              %1589 = vmatprep.subr.bf16.mxu0 0
              %1590 = vmatpush2.bf16.msra.mxu0 0
              %1591 = vmatprep.subr.bf16.mxu0 0
              %1592 = vmatpush2.bf16.msra.mxu0 0
              %1593 = vmatprep.subr.bf16.mxu0 0
              %1594 = vmatpush2.bf16.msra.mxu0 0
              %1595 = vmatprep.subr.bf16.mxu0 0
              %1596 = vmatpush2.bf16.msra.mxu0 0
              %1597 = vmatprep.subr.bf16.mxu0 0
              %1598 = vmatpush2.bf16.msra.mxu0 0
              %1599 = vmatprep.subr.bf16.mxu0 0
              %1600 = vmatpush2.bf16.msra.mxu0 0
              %1601 = vmatprep.subr.bf16.mxu0 0
              %1602 = vmatpush2.bf16.msra.mxu0 0
              %1603 = vmatprep.subr.bf16.mxu0 0
              %1604 = vmatpush2.bf16.msra.mxu0 0
              %1605 = vmatprep.mubr.bf16.mxu0 0
              %1606 = vmatmul.mubr.bf16.gmra.mxu0 %v1405
              %v1607 = vpop.f32.mrf.mxu0
              %v1608 = vadd.f32 %v1372, %v1607
              %v1609 = vpop.f32.mrf.mxu0
              %v1610 = vadd.f32 %v1376, %v1609
              %v1611 = vpop.f32.mrf.mxu0
              %v1612 = vadd.f32 %v1372, %v1611
              %v1613 = vpop.f32.mrf.mxu0
              %v1614 = vadd.f32 %v1376, %v1613
              %1615 = vmatprep.mubr.bf16.mxu0 0
              %1616 = vmatmul.mubr.bf16.gmra.mxu0 %v1406
              %v1617 = vpop.f32.mrf.mxu0
              %v1618 = vadd.f32 %v1372, %v1617
              %v1619 = vpop.f32.mrf.mxu0
              %v1620 = vadd.f32 %v1376, %v1619
              %v1621 = vpop.f32.mrf.mxu0
              %v1622 = vadd.f32 %v1372, %v1621
              %v1623 = vpop.f32.mrf.mxu0
              %v1624 = vadd.f32 %v1376, %v1623
              %1625 = vmatprep.mubr.bf16.mxu0 0
              %1626 = vmatmul.mubr.bf16.gmra.mxu0 %v1407
              %v1627 = vpop.f32.mrf.mxu0
              %v1628 = vadd.f32 %v1372, %v1627
              %v1629 = vpop.f32.mrf.mxu0
              %v1630 = vadd.f32 %v1376, %v1629
              %v1631 = vpop.f32.mrf.mxu0
              %v1632 = vadd.f32 %v1372, %v1631
              %v1633 = vpop.f32.mrf.mxu0
              %v1634 = vadd.f32 %v1376, %v1633
              %1635 = vmatprep.mubr.bf16.mxu0 0
              %1636 = vmatmul.mubr.bf16.gmra.mxu0 %v1408
              %v1637 = vpop.f32.mrf.mxu0
              %v1638 = vadd.f32 %v1372, %v1637
              %v1639 = vpop.f32.mrf.mxu0
              %v1640 = vadd.f32 %v1376, %v1639
              %v1641 = vpop.f32.mrf.mxu0
              %v1642 = vadd.f32 %v1372, %v1641
              %v1643 = vpop.f32.mrf.mxu0
              %v1644 = vadd.f32 %v1376, %v1643
              %1645 = vdwg.mxu0
              %1646 = vmatprep.subr.bf16.mxu0 %v1540
              %1647 = vmatpush1.bf16.msra.mxu0 %v1539
              %1648 = vmatprep.subr.bf16.mxu0 %v1536
              %1649 = vmatpush1.bf16.msra.mxu0 %v1535
              %1650 = vmatprep.subr.bf16.mxu0 %v1532
              %1651 = vmatpush1.bf16.msra.mxu0 %v1531
              %1652 = vmatprep.subr.bf16.mxu0 %v1528
              %1653 = vmatpush1.bf16.msra.mxu0 %v1527
              %1654 = vmatprep.subr.bf16.mxu0 %v1524
              %1655 = vmatpush1.bf16.msra.mxu0 %v1523
              %1656 = vmatprep.subr.bf16.mxu0 %v1520
              %1657 = vmatpush1.bf16.msra.mxu0 %v1519
              %1658 = vmatprep.subr.bf16.mxu0 %v1516
              %1659 = vmatpush1.bf16.msra.mxu0 %v1515
              %1660 = vmatprep.subr.bf16.mxu0 %v1512
              %1661 = vmatpush1.bf16.msra.mxu0 %v1511
              %1662 = vmatprep.subr.bf16.mxu0 0
              %1663 = vmatpush2.bf16.msra.mxu0 0
              %1664 = vmatprep.subr.bf16.mxu0 0
              %1665 = vmatpush2.bf16.msra.mxu0 0
              %1666 = vmatprep.subr.bf16.mxu0 0
              %1667 = vmatpush2.bf16.msra.mxu0 0
              %1668 = vmatprep.subr.bf16.mxu0 0
              %1669 = vmatpush2.bf16.msra.mxu0 0
              %1670 = vmatprep.subr.bf16.mxu0 0
              %1671 = vmatpush2.bf16.msra.mxu0 0
              %1672 = vmatprep.subr.bf16.mxu0 0
              %1673 = vmatpush2.bf16.msra.mxu0 0
              %1674 = vmatprep.subr.bf16.mxu0 0
              %1675 = vmatpush2.bf16.msra.mxu0 0
              %1676 = vmatprep.subr.bf16.mxu0 0
              %1677 = vmatpush2.bf16.msra.mxu0 0
              %1678 = vmatprep.mubr.bf16.mxu0 0
              %1679 = vmatmul.mubr.bf16.gmra.mxu0 %v1405
              %v1680 = vpop.f32.mrf.mxu0
              %v1681 = vadd.f32 %v1380, %v1680
              %v1682 = vpop.f32.mrf.mxu0
              %v1683 = vadd.f32 %v1384, %v1682
              %v1684 = vpop.f32.mrf.mxu0
              %v1685 = vadd.f32 %v1380, %v1684
              %v1686 = vpop.f32.mrf.mxu0
              %v1687 = vadd.f32 %v1384, %v1686
              %1688 = vmatprep.mubr.bf16.mxu0 0
              %1689 = vmatmul.mubr.bf16.gmra.mxu0 %v1406
              %v1690 = vpop.f32.mrf.mxu0
              %v1691 = vadd.f32 %v1380, %v1690
              %v1692 = vpop.f32.mrf.mxu0
              %v1693 = vadd.f32 %v1384, %v1692
              %v1694 = vpop.f32.mrf.mxu0
              %v1695 = vadd.f32 %v1380, %v1694
              %v1696 = vpop.f32.mrf.mxu0
              %v1697 = vadd.f32 %v1384, %v1696
              %1698 = vmatprep.mubr.bf16.mxu0 0
              %1699 = vmatmul.mubr.bf16.gmra.mxu0 %v1407
              %v1700 = vpop.f32.mrf.mxu0
              %v1701 = vadd.f32 %v1380, %v1700
              %v1702 = vpop.f32.mrf.mxu0
              %v1703 = vadd.f32 %v1384, %v1702
              %v1704 = vpop.f32.mrf.mxu0
              %v1705 = vadd.f32 %v1380, %v1704
              %v1706 = vpop.f32.mrf.mxu0
              %v1707 = vadd.f32 %v1384, %v1706
              %1708 = vmatprep.mubr.bf16.mxu0 0
              %1709 = vmatmul.mubr.bf16.gmra.mxu0 %v1408
              %v1710 = vpop.f32.mrf.mxu0
              %v1711 = vadd.f32 %v1380, %v1710
              %v1712 = vpop.f32.mrf.mxu0
              %v1713 = vadd.f32 %v1384, %v1712
              %v1714 = vpop.f32.mrf.mxu0
              %v1715 = vadd.f32 %v1380, %v1714
              %v1716 = vpop.f32.mrf.mxu0
              %v1717 = vadd.f32 %v1384, %v1716
              %1718 = vdwg.mxu0
              %s1719 = smul.u32 %s1318, 32
              %s1720 = smul.addr %s1719, 8
              %s1721 = scalar_lea.vmem [#allocation2], %s1720
              %1722 = vst [vmem:[%s1721] sm:$0xff] %v1608
              %1723 = vst [vmem:[%s1721 + $0x8] sm:$0xff] %v1610
              %1724 = vst [vmem:[%s1721 + $0x10] sm:$0xff] %v1681
              %1725 = vst [vmem:[%s1721 + $0x18] sm:$0xff] %v1683
              %1726 = vst [vmem:[%s1721 + $0x20] sm:$0xff] %v1612
              %1727 = vst [vmem:[%s1721 + $0x28] sm:$0xff] %v1614
              %1728 = vst [vmem:[%s1721 + $0x30] sm:$0xff] %v1685
              %1729 = vst [vmem:[%s1721 + $0x38] sm:$0xff] %v1687
              %1730 = vst [vmem:[%s1721 + $0x40] sm:$0xff] %v1618
              %1731 = vst [vmem:[%s1721 + $0x48] sm:$0xff] %v1620
              %1732 = vst [vmem:[%s1721 + $0x50] sm:$0xff] %v1691
              %1733 = vst [vmem:[%s1721 + $0x58] sm:$0xff] %v1693
              %1734 = vst [vmem:[%s1721 + $0x60] sm:$0xff] %v1622
              %1735 = vst [vmem:[%s1721 + $0x68] sm:$0xff] %v1624
              %1736 = vst [vmem:[%s1721 + $0x70] sm:$0xff] %v1695
              %1737 = vst [vmem:[%s1721 + $0x78] sm:$0xff] %v1697
              %1738 = vst [vmem:[%s1721 + $0x80] sm:$0xff] %v1628
              %1739 = vst [vmem:[%s1721 + $0x88] sm:$0xff] %v1630
              %1740 = vst [vmem:[%s1721 + $0x90] sm:$0xff] %v1701
              %1741 = vst [vmem:[%s1721 + $0x98] sm:$0xff] %v1703
              %1742 = vst [vmem:[%s1721 + $0xa0] sm:$0xff] %v1632
              %1743 = vst [vmem:[%s1721 + $0xa8] sm:$0xff] %v1634
              %1744 = vst [vmem:[%s1721 + $0xb0] sm:$0xff] %v1705
              %1745 = vst [vmem:[%s1721 + $0xb8] sm:$0xff] %v1707
              %1746 = vst [vmem:[%s1721 + $0xc0] sm:$0xff] %v1638
              %1747 = vst [vmem:[%s1721 + $0xc8] sm:$0xff] %v1640
              %1748 = vst [vmem:[%s1721 + $0xd0] sm:$0xff] %v1711
              %1749 = vst [vmem:[%s1721 + $0xd8] sm:$0xff] %v1713
              %1750 = vst [vmem:[%s1721 + $0xe0] sm:$0xff] %v1642
              %1751 = vst [vmem:[%s1721 + $0xe8] sm:$0xff] %v1644
              %1752 = vst [vmem:[%s1721 + $0xf0] sm:$0xff] %v1715
              %1753 = vst [vmem:[%s1721 + $0xf8] sm:$0xff] %v1717
            $region83: #{tpu_custom_call.1} parent=78 // pred_fallthru
              _
            // Predicated region
            $region84: #{tpu_custom_call.1} parent=78 // pred_check
              %p1754 = pneg %p864
            $region85: #{tpu_custom_call.1} parent=78 // pred_check_branch
              %1756 = sbr.rel (%p1754) target = $region87
            $region86: #{tpu_custom_call.1} parent=78 // pred_region
              %s1757 = sshra.s32 %s1319, 3
              %s1758 = sand.u32 %s1319, 7
              %s1759 = smul.addr %s1757, 4
              %s1760 = scalar_lea.vmem [#allocation3], %s1759
              %v1761 = vld [vmem:[%s1760] sm:$0xf]
              %v1762 = vld [vmem:[%s1760 + $0x4] sm:$0xf]
              %v1763 = vld [vmem:[%s1760 + $0x8] sm:$0xf]
              %v1764 = vld [vmem:[%s1760 + $0xc] sm:$0xf]
              %v1765 = vld [vmem:[%s1760 + $0x10] sm:$0xf]
              %v1766 = vld [vmem:[%s1760 + $0x14] sm:$0xf]
              %v1767 = vld [vmem:[%s1760 + $0x18] sm:$0xf]
              %v1768 = vld [vmem:[%s1760 + $0x1c] sm:$0xf]
              %v1769 = vld [vmem:[%s363] sm:$0xff]
              %v1770 = vld [vmem:[%s363 + $0x8] sm:$0xff]
              %v1771 = vld [vmem:[%s363 + $0x10] sm:$0xff]
              %v1772 = vld [vmem:[%s363 + $0x18] sm:$0xff]
              %v1773 = vld [vmem:[%s363 + $0x20] sm:$0xff]
              %v1774 = vld [vmem:[%s363 + $0x28] sm:$0xff]
              %v1775 = vld [vmem:[%s363 + $0x30] sm:$0xff]
              %v1776 = vld [vmem:[%s363 + $0x38] sm:$0xff]
              %v1777 = vld [vmem:[%s363 + $0x40] sm:$0xff]
              %v1778 = vld [vmem:[%s363 + $0x48] sm:$0xff]
              %v1779 = vld [vmem:[%s363 + $0x50] sm:$0xff]
              %v1780 = vld [vmem:[%s363 + $0x58] sm:$0xff]
              %v1781 = vld [vmem:[%s363 + $0x60] sm:$0xff]
              %v1782 = vld [vmem:[%s363 + $0x68] sm:$0xff]
              %v1783 = vld [vmem:[%s363 + $0x70] sm:$0xff]
              %v1784 = vld [vmem:[%s363 + $0x78] sm:$0xff]
              %v1785 = vld [vmem:[%s363 + $0x80] sm:$0xff]
              %v1786 = vld [vmem:[%s363 + $0x88] sm:$0xff]
              %v1787 = vld [vmem:[%s363 + $0x90] sm:$0xff]
              %v1788 = vld [vmem:[%s363 + $0x98] sm:$0xff]
              %v1789 = vld [vmem:[%s363 + $0xa0] sm:$0xff]
              %v1790 = vld [vmem:[%s363 + $0xa8] sm:$0xff]
              %v1791 = vld [vmem:[%s363 + $0xb0] sm:$0xff]
              %v1792 = vld [vmem:[%s363 + $0xb8] sm:$0xff]
              %v1793 = vld [vmem:[%s363 + $0xc0] sm:$0xff]
              %v1794 = vld [vmem:[%s363 + $0xc8] sm:$0xff]
              %v1795 = vld [vmem:[%s363 + $0xd0] sm:$0xff]
              %v1796 = vld [vmem:[%s363 + $0xd8] sm:$0xff]
              %v1797 = vld [vmem:[%s363 + $0xe0] sm:$0xff]
              %v1798 = vld [vmem:[%s363 + $0xe8] sm:$0xff]
              %v1799 = vld [vmem:[%s363 + $0xf0] sm:$0xff]
              %v1800 = vld [vmem:[%s363 + $0xf8] sm:$0xff]
              %v1802 = vlaneseq
              %v1803 = vshrl.u32 %v1802, 7
              %v1804 = vsub.s32 0, %v1803
              %v1805 = vrot.slane %v1320, %v1804
              %v1806 = vlaneseq
              %v1807 = vshrl.u32 %v1806, 7
              %v1808 = vsub.s32 1, %v1807
              %v1809 = vrot.slane %v1320, %v1808
              %v1810 = vlaneseq
              %v1811 = vshrl.u32 %v1810, 7
              %v1812 = vsub.s32 2, %v1811
              %v1813 = vrot.slane %v1320, %v1812
              %v1814 = vlaneseq
              %v1815 = vshrl.u32 %v1814, 7
              %v1816 = vsub.s32 3, %v1815
              %v1817 = vrot.slane %v1320, %v1816
              %v1830 = vunpack.c.l.b16 %v1761
              %v1831 = vunpack.c.l.b16 %v1762
              %v1832 = vunpack.c.l.b16 %v1763
              %v1833 = vunpack.c.l.b16 %v1764
              %v1834 = vunpack.c.l.b16 %v1765
              %v1835 = vunpack.c.l.b16 %v1766
              %v1836 = vunpack.c.l.b16 %v1767
              %v1837 = vunpack.c.l.b16 %v1768
              %v1838 = vpack.c.b16 %v1831, %v1830
              %v1839 = vpack.c.b16 %v1833, %v1832
              %v1840 = vpack.c.b16 %v1835, %v1834
              %v1841 = vpack.c.b16 %v1837, %v1836
              %v1878 = vunpack.c.l.b16 %v1769
              %v1879 = vunpack.c.h.b16 %v1769
              %v1880 = vunpack.c.l.b16 %v1770
              %v1881 = vunpack.c.h.b16 %v1770
              %v1882 = vunpack.c.l.b16 %v1771
              %v1883 = vunpack.c.h.b16 %v1771
              %v1884 = vunpack.c.l.b16 %v1772
              %v1885 = vunpack.c.h.b16 %v1772
              %v1886 = vunpack.c.l.b16 %v1773
              %v1887 = vunpack.c.h.b16 %v1773
              %v1888 = vunpack.c.l.b16 %v1774
              %v1889 = vunpack.c.h.b16 %v1774
              %v1890 = vunpack.c.l.b16 %v1775
              %v1891 = vunpack.c.h.b16 %v1775
              %v1892 = vunpack.c.l.b16 %v1776
              %v1893 = vunpack.c.h.b16 %v1776
              %v1894 = vunpack.c.l.b16 %v1777
              %v1895 = vunpack.c.h.b16 %v1777
              %v1896 = vunpack.c.l.b16 %v1778
              %v1897 = vunpack.c.h.b16 %v1778
              %v1898 = vunpack.c.l.b16 %v1779
              %v1899 = vunpack.c.h.b16 %v1779
              %v1900 = vunpack.c.l.b16 %v1780
              %v1901 = vunpack.c.h.b16 %v1780
              %v1902 = vunpack.c.l.b16 %v1781
              %v1903 = vunpack.c.h.b16 %v1781
              %v1904 = vunpack.c.l.b16 %v1782
              %v1905 = vunpack.c.h.b16 %v1782
              %v1906 = vunpack.c.l.b16 %v1783
              %v1907 = vunpack.c.h.b16 %v1783
              %v1908 = vunpack.c.l.b16 %v1784
              %v1909 = vunpack.c.h.b16 %v1784
              %v1910 = vunpack.c.l.b16 %v1785
              %v1911 = vunpack.c.h.b16 %v1785
              %v1912 = vunpack.c.l.b16 %v1786
              %v1913 = vunpack.c.h.b16 %v1786
              %v1914 = vunpack.c.l.b16 %v1787
              %v1915 = vunpack.c.h.b16 %v1787
              %v1916 = vunpack.c.l.b16 %v1788
              %v1917 = vunpack.c.h.b16 %v1788
              %v1918 = vunpack.c.l.b16 %v1789
              %v1919 = vunpack.c.h.b16 %v1789
              %v1920 = vunpack.c.l.b16 %v1790
              %v1921 = vunpack.c.h.b16 %v1790
              %v1922 = vunpack.c.l.b16 %v1791
              %v1923 = vunpack.c.h.b16 %v1791
              %v1924 = vunpack.c.l.b16 %v1792
              %v1925 = vunpack.c.h.b16 %v1792
              %v1926 = vunpack.c.l.b16 %v1793
              %v1927 = vunpack.c.h.b16 %v1793
              %v1928 = vunpack.c.l.b16 %v1794
              %v1929 = vunpack.c.h.b16 %v1794
              %v1930 = vunpack.c.l.b16 %v1795
              %v1931 = vunpack.c.h.b16 %v1795
              %v1932 = vunpack.c.l.b16 %v1796
              %v1933 = vunpack.c.h.b16 %v1796
              %v1934 = vunpack.c.l.b16 %v1797
              %v1935 = vunpack.c.h.b16 %v1797
              %v1936 = vunpack.c.l.b16 %v1798
              %v1937 = vunpack.c.h.b16 %v1798
              %v1938 = vunpack.c.l.b16 %v1799
              %v1939 = vunpack.c.h.b16 %v1799
              %v1940 = vunpack.c.l.b16 %v1800
              %v1941 = vunpack.c.h.b16 %v1800
              %v1942 = vpack.c.b16 %v1882, %v1878
              %v1943 = vpack.c.b16 %v1883, %v1879
              %v1944 = vpack.c.b16 %v1884, %v1880
              %v1945 = vpack.c.b16 %v1885, %v1881
              %v1946 = vpack.c.b16 %v1890, %v1886
              %v1947 = vpack.c.b16 %v1891, %v1887
              %v1948 = vpack.c.b16 %v1892, %v1888
              %v1949 = vpack.c.b16 %v1893, %v1889
              %v1950 = vpack.c.b16 %v1898, %v1894
              %v1951 = vpack.c.b16 %v1899, %v1895
              %v1952 = vpack.c.b16 %v1900, %v1896
              %v1953 = vpack.c.b16 %v1901, %v1897
              %v1954 = vpack.c.b16 %v1906, %v1902
              %v1955 = vpack.c.b16 %v1907, %v1903
              %v1956 = vpack.c.b16 %v1908, %v1904
              %v1957 = vpack.c.b16 %v1909, %v1905
              %v1958 = vpack.c.b16 %v1914, %v1910
              %v1959 = vpack.c.b16 %v1915, %v1911
              %v1960 = vpack.c.b16 %v1916, %v1912
              %v1961 = vpack.c.b16 %v1917, %v1913
              %v1962 = vpack.c.b16 %v1922, %v1918
              %v1963 = vpack.c.b16 %v1923, %v1919
              %v1964 = vpack.c.b16 %v1924, %v1920
              %v1965 = vpack.c.b16 %v1925, %v1921
              %v1966 = vpack.c.b16 %v1930, %v1926
              %v1967 = vpack.c.b16 %v1931, %v1927
              %v1968 = vpack.c.b16 %v1932, %v1928
              %v1969 = vpack.c.b16 %v1933, %v1929
              %v1970 = vpack.c.b16 %v1938, %v1934
              %v1971 = vpack.c.b16 %v1939, %v1935
              %v1972 = vpack.c.b16 %v1940, %v1936
              %v1973 = vpack.c.b16 %v1941, %v1937
              %2006 = vmatprep.subr.bf16.mxu0 %v1971
              %2007 = vmatpush1.bf16.msra.mxu0 %v1970
              %2008 = vmatprep.subr.bf16.mxu0 %v1967
              %2009 = vmatpush1.bf16.msra.mxu0 %v1966
              %2010 = vmatprep.subr.bf16.mxu0 %v1963
              %2011 = vmatpush1.bf16.msra.mxu0 %v1962
              %2012 = vmatprep.subr.bf16.mxu0 %v1959
              %2013 = vmatpush1.bf16.msra.mxu0 %v1958
              %2014 = vmatprep.subr.bf16.mxu0 %v1955
              %2015 = vmatpush1.bf16.msra.mxu0 %v1954
              %2016 = vmatprep.subr.bf16.mxu0 %v1951
              %2017 = vmatpush1.bf16.msra.mxu0 %v1950
              %2018 = vmatprep.subr.bf16.mxu0 %v1947
              %2019 = vmatpush1.bf16.msra.mxu0 %v1946
              %2020 = vmatprep.subr.bf16.mxu0 %v1943
              %2021 = vmatpush1.bf16.msra.mxu0 %v1942
              %2022 = vmatprep.subr.bf16.mxu0 0
              %2023 = vmatpush2.bf16.msra.mxu0 0
              %2024 = vmatprep.subr.bf16.mxu0 0
              %2025 = vmatpush2.bf16.msra.mxu0 0
              %2026 = vmatprep.subr.bf16.mxu0 0
              %2027 = vmatpush2.bf16.msra.mxu0 0
              %2028 = vmatprep.subr.bf16.mxu0 0
              %2029 = vmatpush2.bf16.msra.mxu0 0
              %2030 = vmatprep.subr.bf16.mxu0 0
              %2031 = vmatpush2.bf16.msra.mxu0 0
              %2032 = vmatprep.subr.bf16.mxu0 0
              %2033 = vmatpush2.bf16.msra.mxu0 0
              %2034 = vmatprep.subr.bf16.mxu0 0
              %2035 = vmatpush2.bf16.msra.mxu0 0
              %2036 = vmatprep.subr.bf16.mxu0 0
              %2037 = vmatpush2.bf16.msra.mxu0 0
              %2038 = vmatprep.mubr.bf16.mxu0 0
              %2039 = vmatmul.mubr.bf16.gmra.mxu0 %v1838
              %v2040 = vpop.f32.mrf.mxu0
              %v2041 = vadd.f32 %v1805, %v2040
              %v2042 = vpop.f32.mrf.mxu0
              %v2043 = vadd.f32 %v1809, %v2042
              %v2044 = vpop.f32.mrf.mxu0
              %v2045 = vadd.f32 %v1805, %v2044
              %v2046 = vpop.f32.mrf.mxu0
              %v2047 = vadd.f32 %v1809, %v2046
              %2048 = vmatprep.mubr.bf16.mxu0 0
              %2049 = vmatmul.mubr.bf16.gmra.mxu0 %v1839
              %v2050 = vpop.f32.mrf.mxu0
              %v2051 = vadd.f32 %v1805, %v2050
              %v2052 = vpop.f32.mrf.mxu0
              %v2053 = vadd.f32 %v1809, %v2052
              %v2054 = vpop.f32.mrf.mxu0
              %v2055 = vadd.f32 %v1805, %v2054
              %v2056 = vpop.f32.mrf.mxu0
              %v2057 = vadd.f32 %v1809, %v2056
              %2058 = vmatprep.mubr.bf16.mxu0 0
              %2059 = vmatmul.mubr.bf16.gmra.mxu0 %v1840
              %v2060 = vpop.f32.mrf.mxu0
              %v2061 = vadd.f32 %v1805, %v2060
              %v2062 = vpop.f32.mrf.mxu0
              %v2063 = vadd.f32 %v1809, %v2062
              %v2064 = vpop.f32.mrf.mxu0
              %v2065 = vadd.f32 %v1805, %v2064
              %v2066 = vpop.f32.mrf.mxu0
              %v2067 = vadd.f32 %v1809, %v2066
              %2068 = vmatprep.mubr.bf16.mxu0 0
              %2069 = vmatmul.mubr.bf16.gmra.mxu0 %v1841
              %v2070 = vpop.f32.mrf.mxu0
              %v2071 = vadd.f32 %v1805, %v2070
              %v2072 = vpop.f32.mrf.mxu0
              %v2073 = vadd.f32 %v1809, %v2072
              %v2074 = vpop.f32.mrf.mxu0
              %v2075 = vadd.f32 %v1805, %v2074
              %v2076 = vpop.f32.mrf.mxu0
              %v2077 = vadd.f32 %v1809, %v2076
              %2078 = vdwg.mxu0
              %2079 = vmatprep.subr.bf16.mxu0 %v1973
              %2080 = vmatpush1.bf16.msra.mxu0 %v1972
              %2081 = vmatprep.subr.bf16.mxu0 %v1969
              %2082 = vmatpush1.bf16.msra.mxu0 %v1968
              %2083 = vmatprep.subr.bf16.mxu0 %v1965
              %2084 = vmatpush1.bf16.msra.mxu0 %v1964
              %2085 = vmatprep.subr.bf16.mxu0 %v1961
              %2086 = vmatpush1.bf16.msra.mxu0 %v1960
              %2087 = vmatprep.subr.bf16.mxu0 %v1957
              %2088 = vmatpush1.bf16.msra.mxu0 %v1956
              %2089 = vmatprep.subr.bf16.mxu0 %v1953
              %2090 = vmatpush1.bf16.msra.mxu0 %v1952
              %2091 = vmatprep.subr.bf16.mxu0 %v1949
              %2092 = vmatpush1.bf16.msra.mxu0 %v1948
              %2093 = vmatprep.subr.bf16.mxu0 %v1945
              %2094 = vmatpush1.bf16.msra.mxu0 %v1944
              %2095 = vmatprep.subr.bf16.mxu0 0
              %2096 = vmatpush2.bf16.msra.mxu0 0
              %2097 = vmatprep.subr.bf16.mxu0 0
              %2098 = vmatpush2.bf16.msra.mxu0 0
              %2099 = vmatprep.subr.bf16.mxu0 0
              %2100 = vmatpush2.bf16.msra.mxu0 0
              %2101 = vmatprep.subr.bf16.mxu0 0
              %2102 = vmatpush2.bf16.msra.mxu0 0
              %2103 = vmatprep.subr.bf16.mxu0 0
              %2104 = vmatpush2.bf16.msra.mxu0 0
              %2105 = vmatprep.subr.bf16.mxu0 0
              %2106 = vmatpush2.bf16.msra.mxu0 0
              %2107 = vmatprep.subr.bf16.mxu0 0
              %2108 = vmatpush2.bf16.msra.mxu0 0
              %2109 = vmatprep.subr.bf16.mxu0 0
              %2110 = vmatpush2.bf16.msra.mxu0 0
              %2111 = vmatprep.mubr.bf16.mxu0 0
              %2112 = vmatmul.mubr.bf16.gmra.mxu0 %v1838
              %v2113 = vpop.f32.mrf.mxu0
              %v2114 = vadd.f32 %v1813, %v2113
              %v2115 = vpop.f32.mrf.mxu0
              %v2116 = vadd.f32 %v1817, %v2115
              %v2117 = vpop.f32.mrf.mxu0
              %v2118 = vadd.f32 %v1813, %v2117
              %v2119 = vpop.f32.mrf.mxu0
              %v2120 = vadd.f32 %v1817, %v2119
              %2121 = vmatprep.mubr.bf16.mxu0 0
              %2122 = vmatmul.mubr.bf16.gmra.mxu0 %v1839
              %v2123 = vpop.f32.mrf.mxu0
              %v2124 = vadd.f32 %v1813, %v2123
              %v2125 = vpop.f32.mrf.mxu0
              %v2126 = vadd.f32 %v1817, %v2125
              %v2127 = vpop.f32.mrf.mxu0
              %v2128 = vadd.f32 %v1813, %v2127
              %v2129 = vpop.f32.mrf.mxu0
              %v2130 = vadd.f32 %v1817, %v2129
              %2131 = vmatprep.mubr.bf16.mxu0 0
              %2132 = vmatmul.mubr.bf16.gmra.mxu0 %v1840
              %v2133 = vpop.f32.mrf.mxu0
              %v2134 = vadd.f32 %v1813, %v2133
              %v2135 = vpop.f32.mrf.mxu0
              %v2136 = vadd.f32 %v1817, %v2135
              %v2137 = vpop.f32.mrf.mxu0
              %v2138 = vadd.f32 %v1813, %v2137
              %v2139 = vpop.f32.mrf.mxu0
              %v2140 = vadd.f32 %v1817, %v2139
              %2141 = vmatprep.mubr.bf16.mxu0 0
              %2142 = vmatmul.mubr.bf16.gmra.mxu0 %v1841
              %v2143 = vpop.f32.mrf.mxu0
              %v2144 = vadd.f32 %v1813, %v2143
              %v2145 = vpop.f32.mrf.mxu0
              %v2146 = vadd.f32 %v1817, %v2145
              %v2147 = vpop.f32.mrf.mxu0
              %v2148 = vadd.f32 %v1813, %v2147
              %v2149 = vpop.f32.mrf.mxu0
              %v2150 = vadd.f32 %v1817, %v2149
              %2151 = vdwg.mxu0
              %s2152 = smul.u32 %s1318, 32
              %s2153 = smul.addr %s2152, 8
              %s2154 = scalar_lea.vmem [#allocation2], %s2153
              %2155 = vst [vmem:[%s2154] sm:$0xff] %v2041
              %2156 = vst [vmem:[%s2154 + $0x8] sm:$0xff] %v2043
              %2157 = vst [vmem:[%s2154 + $0x10] sm:$0xff] %v2114
              %2158 = vst [vmem:[%s2154 + $0x18] sm:$0xff] %v2116
              %2159 = vst [vmem:[%s2154 + $0x20] sm:$0xff] %v2045
              %2160 = vst [vmem:[%s2154 + $0x28] sm:$0xff] %v2047
              %2161 = vst [vmem:[%s2154 + $0x30] sm:$0xff] %v2118
              %2162 = vst [vmem:[%s2154 + $0x38] sm:$0xff] %v2120
              %2163 = vst [vmem:[%s2154 + $0x40] sm:$0xff] %v2051
              %2164 = vst [vmem:[%s2154 + $0x48] sm:$0xff] %v2053
              %2165 = vst [vmem:[%s2154 + $0x50] sm:$0xff] %v2124
              %2166 = vst [vmem:[%s2154 + $0x58] sm:$0xff] %v2126
              %2167 = vst [vmem:[%s2154 + $0x60] sm:$0xff] %v2055
              %2168 = vst [vmem:[%s2154 + $0x68] sm:$0xff] %v2057
              %2169 = vst [vmem:[%s2154 + $0x70] sm:$0xff] %v2128
              %2170 = vst [vmem:[%s2154 + $0x78] sm:$0xff] %v2130
              %2171 = vst [vmem:[%s2154 + $0x80] sm:$0xff] %v2061
              %2172 = vst [vmem:[%s2154 + $0x88] sm:$0xff] %v2063
              %2173 = vst [vmem:[%s2154 + $0x90] sm:$0xff] %v2134
              %2174 = vst [vmem:[%s2154 + $0x98] sm:$0xff] %v2136
              %2175 = vst [vmem:[%s2154 + $0xa0] sm:$0xff] %v2065
              %2176 = vst [vmem:[%s2154 + $0xa8] sm:$0xff] %v2067
              %2177 = vst [vmem:[%s2154 + $0xb0] sm:$0xff] %v2138
              %2178 = vst [vmem:[%s2154 + $0xb8] sm:$0xff] %v2140
              %2179 = vst [vmem:[%s2154 + $0xc0] sm:$0xff] %v2071
              %2180 = vst [vmem:[%s2154 + $0xc8] sm:$0xff] %v2073
              %2181 = vst [vmem:[%s2154 + $0xd0] sm:$0xff] %v2144
              %2182 = vst [vmem:[%s2154 + $0xd8] sm:$0xff] %v2146
              %2183 = vst [vmem:[%s2154 + $0xe0] sm:$0xff] %v2075
              %2184 = vst [vmem:[%s2154 + $0xe8] sm:$0xff] %v2077
              %2185 = vst [vmem:[%s2154 + $0xf0] sm:$0xff] %v2148
              %2186 = vst [vmem:[%s2154 + $0xf8] sm:$0xff] %v2150
            $region87: #{tpu_custom_call.1} parent=78 // pred_fallthru
              _
          $region79: #{tpu_custom_call.1} parent=72 // pred_fallthru
            _
          %s2187 = smul.u32 0, 4
          %s2188 = smul.u32 %s1312, 32
          %s2189 = sadd.s32 %s2187, %s2188
          %s2190 = smul.addr %s2189, 8
          %s2191 = scalar_lea.vmem [#allocation2], %s2190
          %v2192 = vld [vmem:[%s2191] sm:$0xff]
          %v2193 = vld [vmem:[%s2191 + $0x8] sm:$0xff]
          %v2194 = vld [vmem:[%s2191 + $0x10] sm:$0xff]
          %v2195 = vld [vmem:[%s2191 + $0x18] sm:$0xff]
          %v2196 = vld [vmem:[%s2191 + $0x20] sm:$0xff]
          %v2197 = vld [vmem:[%s2191 + $0x28] sm:$0xff]
          %v2198 = vld [vmem:[%s2191 + $0x30] sm:$0xff]
          %v2199 = vld [vmem:[%s2191 + $0x38] sm:$0xff]
          %v2200 = vpack.c.bf16 %v1298, %v1297
          %v2201 = vld [vmem:[%s372] sm:$0xff]
          %v2202 = vld [vmem:[%s372 + $0x8] sm:$0xff]
          %v2203 = vld [vmem:[%s372 + $0x10] sm:$0xff]
          %v2204 = vld [vmem:[%s372 + $0x18] sm:$0xff]
          %v2205 = vld [vmem:[%s372 + $0x20] sm:$0xff]
          %v2206 = vld [vmem:[%s372 + $0x28] sm:$0xff]
          %v2207 = vld [vmem:[%s372 + $0x30] sm:$0xff]
          %v2208 = vld [vmem:[%s372 + $0x38] sm:$0xff]
          %v2209 = vld [vmem:[%s372 + $0x40] sm:$0xff]
          %v2210 = vld [vmem:[%s372 + $0x48] sm:$0xff]
          %v2211 = vld [vmem:[%s372 + $0x50] sm:$0xff]
          %v2212 = vld [vmem:[%s372 + $0x58] sm:$0xff]
          %v2213 = vld [vmem:[%s372 + $0x60] sm:$0xff]
          %v2214 = vld [vmem:[%s372 + $0x68] sm:$0xff]
          %v2215 = vld [vmem:[%s372 + $0x70] sm:$0xff]
          %v2216 = vld [vmem:[%s372 + $0x78] sm:$0xff]
          %v2217 = vld [vmem:[%s372 + $0x80] sm:$0xff]
          %v2218 = vld [vmem:[%s372 + $0x88] sm:$0xff]
          %v2219 = vld [vmem:[%s372 + $0x90] sm:$0xff]
          %v2220 = vld [vmem:[%s372 + $0x98] sm:$0xff]
          %v2221 = vld [vmem:[%s372 + $0xa0] sm:$0xff]
          %v2222 = vld [vmem:[%s372 + $0xa8] sm:$0xff]
          %v2223 = vld [vmem:[%s372 + $0xb0] sm:$0xff]
          %v2224 = vld [vmem:[%s372 + $0xb8] sm:$0xff]
          %v2225 = vld [vmem:[%s372 + $0xc0] sm:$0xff]
          %v2226 = vld [vmem:[%s372 + $0xc8] sm:$0xff]
          %v2227 = vld [vmem:[%s372 + $0xd0] sm:$0xff]
          %v2228 = vld [vmem:[%s372 + $0xd8] sm:$0xff]
          %v2229 = vld [vmem:[%s372 + $0xe0] sm:$0xff]
          %v2230 = vld [vmem:[%s372 + $0xe8] sm:$0xff]
          %v2231 = vld [vmem:[%s372 + $0xf0] sm:$0xff]
          %v2232 = vld [vmem:[%s372 + $0xf8] sm:$0xff]
          %v2265 = vunpack.c.l.b16 %v2201
          %v2266 = vunpack.c.h.b16 %v2201
          %v2267 = vunpack.c.l.b16 %v2202
          %v2268 = vunpack.c.h.b16 %v2202
          %v2269 = vunpack.c.l.b16 %v2203
          %v2270 = vunpack.c.h.b16 %v2203
          %v2271 = vunpack.c.l.b16 %v2204
          %v2272 = vunpack.c.h.b16 %v2204
          %v2273 = vunpack.c.l.b16 %v2205
          %v2274 = vunpack.c.h.b16 %v2205
          %v2275 = vunpack.c.l.b16 %v2206
          %v2276 = vunpack.c.h.b16 %v2206
          %v2277 = vunpack.c.l.b16 %v2207
          %v2278 = vunpack.c.h.b16 %v2207
          %v2279 = vunpack.c.l.b16 %v2208
          %v2280 = vunpack.c.h.b16 %v2208
          %v2281 = vunpack.c.l.b16 %v2209
          %v2282 = vunpack.c.h.b16 %v2209
          %v2283 = vunpack.c.l.b16 %v2210
          %v2284 = vunpack.c.h.b16 %v2210
          %v2285 = vunpack.c.l.b16 %v2211
          %v2286 = vunpack.c.h.b16 %v2211
          %v2287 = vunpack.c.l.b16 %v2212
          %v2288 = vunpack.c.h.b16 %v2212
          %v2289 = vunpack.c.l.b16 %v2213
          %v2290 = vunpack.c.h.b16 %v2213
          %v2291 = vunpack.c.l.b16 %v2214
          %v2292 = vunpack.c.h.b16 %v2214
          %v2293 = vunpack.c.l.b16 %v2215
          %v2294 = vunpack.c.h.b16 %v2215
          %v2295 = vunpack.c.l.b16 %v2216
          %v2296 = vunpack.c.h.b16 %v2216
          %v2297 = vunpack.c.l.b16 %v2217
          %v2298 = vunpack.c.h.b16 %v2217
          %v2299 = vunpack.c.l.b16 %v2218
          %v2300 = vunpack.c.h.b16 %v2218
          %v2301 = vunpack.c.l.b16 %v2219
          %v2302 = vunpack.c.h.b16 %v2219
          %v2303 = vunpack.c.l.b16 %v2220
          %v2304 = vunpack.c.h.b16 %v2220
          %v2305 = vunpack.c.l.b16 %v2221
          %v2306 = vunpack.c.h.b16 %v2221
          %v2307 = vunpack.c.l.b16 %v2222
          %v2308 = vunpack.c.h.b16 %v2222
          %v2309 = vunpack.c.l.b16 %v2223
          %v2310 = vunpack.c.h.b16 %v2223
          %v2311 = vunpack.c.l.b16 %v2224
          %v2312 = vunpack.c.h.b16 %v2224
          %v2313 = vunpack.c.l.b16 %v2225
          %v2314 = vunpack.c.h.b16 %v2225
          %v2315 = vunpack.c.l.b16 %v2226
          %v2316 = vunpack.c.h.b16 %v2226
          %v2317 = vunpack.c.l.b16 %v2227
          %v2318 = vunpack.c.h.b16 %v2227
          %v2319 = vunpack.c.l.b16 %v2228
          %v2320 = vunpack.c.h.b16 %v2228
          %v2321 = vunpack.c.l.b16 %v2229
          %v2322 = vunpack.c.h.b16 %v2229
          %v2323 = vunpack.c.l.b16 %v2230
          %v2324 = vunpack.c.h.b16 %v2230
          %v2325 = vunpack.c.l.b16 %v2231
          %v2326 = vunpack.c.h.b16 %v2231
          %v2327 = vunpack.c.l.b16 %v2232
          %v2328 = vunpack.c.h.b16 %v2232
          %v2329 = vpack.c.b16 %v2269, %v2265
          %v2330 = vpack.c.b16 %v2270, %v2266
          %v2331 = vpack.c.b16 %v2271, %v2267
          %v2332 = vpack.c.b16 %v2272, %v2268
          %v2333 = vpack.c.b16 %v2277, %v2273
          %v2334 = vpack.c.b16 %v2278, %v2274
          %v2335 = vpack.c.b16 %v2279, %v2275
          %v2336 = vpack.c.b16 %v2280, %v2276
          %v2337 = vpack.c.b16 %v2285, %v2281
          %v2338 = vpack.c.b16 %v2286, %v2282
          %v2339 = vpack.c.b16 %v2287, %v2283
          %v2340 = vpack.c.b16 %v2288, %v2284
          %v2341 = vpack.c.b16 %v2293, %v2289
          %v2342 = vpack.c.b16 %v2294, %v2290
          %v2343 = vpack.c.b16 %v2295, %v2291
          %v2344 = vpack.c.b16 %v2296, %v2292
          %v2345 = vpack.c.b16 %v2301, %v2297
          %v2346 = vpack.c.b16 %v2302, %v2298
          %v2347 = vpack.c.b16 %v2303, %v2299
          %v2348 = vpack.c.b16 %v2304, %v2300
          %v2349 = vpack.c.b16 %v2309, %v2305
          %v2350 = vpack.c.b16 %v2310, %v2306
          %v2351 = vpack.c.b16 %v2311, %v2307
          %v2352 = vpack.c.b16 %v2312, %v2308
          %v2353 = vpack.c.b16 %v2317, %v2313
          %v2354 = vpack.c.b16 %v2318, %v2314
          %v2355 = vpack.c.b16 %v2319, %v2315
          %v2356 = vpack.c.b16 %v2320, %v2316
          %v2357 = vpack.c.b16 %v2325, %v2321
          %v2358 = vpack.c.b16 %v2326, %v2322
          %v2359 = vpack.c.b16 %v2327, %v2323
          %v2360 = vpack.c.b16 %v2328, %v2324
          %2393 = vmatprep.subr.bf16.mxu0 %v2358
          %2394 = vmatpush1.bf16.msra.mxu0 %v2357
          %2395 = vmatprep.subr.bf16.mxu0 %v2354
          %2396 = vmatpush1.bf16.msra.mxu0 %v2353
          %2397 = vmatprep.subr.bf16.mxu0 %v2350
          %2398 = vmatpush1.bf16.msra.mxu0 %v2349
          %2399 = vmatprep.subr.bf16.mxu0 %v2346
          %2400 = vmatpush1.bf16.msra.mxu0 %v2345
          %2401 = vmatprep.subr.bf16.mxu0 %v2342
          %2402 = vmatpush1.bf16.msra.mxu0 %v2341
          %2403 = vmatprep.subr.bf16.mxu0 %v2338
          %2404 = vmatpush1.bf16.msra.mxu0 %v2337
          %2405 = vmatprep.subr.bf16.mxu0 %v2334
          %2406 = vmatpush1.bf16.msra.mxu0 %v2333
          %2407 = vmatprep.subr.bf16.mxu0 %v2330
          %2408 = vmatpush1.bf16.msra.mxu0 %v2329
          %2409 = vmatprep.subr.bf16.mxu0 0
          %2410 = vmatpush2.bf16.msra.mxu0 0
          %2411 = vmatprep.subr.bf16.mxu0 0
          %2412 = vmatpush2.bf16.msra.mxu0 0
          %2413 = vmatprep.subr.bf16.mxu0 0
          %2414 = vmatpush2.bf16.msra.mxu0 0
          %2415 = vmatprep.subr.bf16.mxu0 0
          %2416 = vmatpush2.bf16.msra.mxu0 0
          %2417 = vmatprep.subr.bf16.mxu0 0
          %2418 = vmatpush2.bf16.msra.mxu0 0
          %2419 = vmatprep.subr.bf16.mxu0 0
          %2420 = vmatpush2.bf16.msra.mxu0 0
          %2421 = vmatprep.subr.bf16.mxu0 0
          %2422 = vmatpush2.bf16.msra.mxu0 0
          %2423 = vmatprep.subr.bf16.mxu0 0
          %2424 = vmatpush2.bf16.msra.mxu0 0
          %2425 = vmatprep.mubr.bf16.mxu0 0
          %2426 = vmatmul.mubr.bf16.gmra.mxu0 %v2200
          %v2427 = vpop.f32.mrf.mxu0
          %v2428 = vadd.f32 0.0, %v2427
          %v2429 = vpop.f32.mrf.mxu0
          %v2430 = vadd.f32 0.0, %v2429
          %v2431 = vpop.f32.mrf.mxu0
          %v2432 = vadd.f32 0.0, %v2431
          %v2433 = vpop.f32.mrf.mxu0
          %v2434 = vadd.f32 0.0, %v2433
          %2435 = vdwg.mxu0
          %2436 = vmatprep.subr.bf16.mxu0 %v2360
          %2437 = vmatpush1.bf16.msra.mxu0 %v2359
          %2438 = vmatprep.subr.bf16.mxu0 %v2356
          %2439 = vmatpush1.bf16.msra.mxu0 %v2355
          %2440 = vmatprep.subr.bf16.mxu0 %v2352
          %2441 = vmatpush1.bf16.msra.mxu0 %v2351
          %2442 = vmatprep.subr.bf16.mxu0 %v2348
          %2443 = vmatpush1.bf16.msra.mxu0 %v2347
          %2444 = vmatprep.subr.bf16.mxu0 %v2344
          %2445 = vmatpush1.bf16.msra.mxu0 %v2343
          %2446 = vmatprep.subr.bf16.mxu0 %v2340
          %2447 = vmatpush1.bf16.msra.mxu0 %v2339
          %2448 = vmatprep.subr.bf16.mxu0 %v2336
          %2449 = vmatpush1.bf16.msra.mxu0 %v2335
          %2450 = vmatprep.subr.bf16.mxu0 %v2332
          %2451 = vmatpush1.bf16.msra.mxu0 %v2331
          %2452 = vmatprep.subr.bf16.mxu0 0
          %2453 = vmatpush2.bf16.msra.mxu0 0
          %2454 = vmatprep.subr.bf16.mxu0 0
          %2455 = vmatpush2.bf16.msra.mxu0 0
          %2456 = vmatprep.subr.bf16.mxu0 0
          %2457 = vmatpush2.bf16.msra.mxu0 0
          %2458 = vmatprep.subr.bf16.mxu0 0
          %2459 = vmatpush2.bf16.msra.mxu0 0
          %2460 = vmatprep.subr.bf16.mxu0 0
          %2461 = vmatpush2.bf16.msra.mxu0 0
          %2462 = vmatprep.subr.bf16.mxu0 0
          %2463 = vmatpush2.bf16.msra.mxu0 0
          %2464 = vmatprep.subr.bf16.mxu0 0
          %2465 = vmatpush2.bf16.msra.mxu0 0
          %2466 = vmatprep.subr.bf16.mxu0 0
          %2467 = vmatpush2.bf16.msra.mxu0 0
          %2468 = vmatprep.mubr.bf16.mxu0 0
          %2469 = vmatmul.mubr.bf16.gmra.mxu0 %v2200
          %v2470 = vpop.f32.mrf.mxu0
          %v2471 = vadd.f32 0.0, %v2470
          %v2472 = vpop.f32.mrf.mxu0
          %v2473 = vadd.f32 0.0, %v2472
          %v2474 = vpop.f32.mrf.mxu0
          %v2475 = vadd.f32 0.0, %v2474
          %v2476 = vpop.f32.mrf.mxu0
          %v2477 = vadd.f32 0.0, %v2476
          %2478 = vdwg.mxu0
          %v2479 = vadd.f32 %v2192, %v2428
          %v2480 = vadd.f32 %v2193, %v2430
          %v2481 = vadd.f32 %v2194, %v2471
          %v2482 = vadd.f32 %v2195, %v2473
          %v2483 = vadd.f32 %v2196, %v2432
          %v2484 = vadd.f32 %v2197, %v2434
          %v2485 = vadd.f32 %v2198, %v2475
          %v2486 = vadd.f32 %v2199, %v2477
          %v2487 = vxor.u32 %v2479, 2147483648
          %v2488 = vxor.u32 %v2480, 2147483648
          %v2489 = vxor.u32 %v2481, 2147483648
          %v2490 = vxor.u32 %v2483, 2147483648
          %v2491 = vxor.u32 %v2484, 2147483648
          %v2492 = vxor.u32 %v2485, 2147483648
          %v2493 = vmul.f32 %v2487, 1.442695
          %v2494 = vpow.pop %v2493
          %v2495 = vmul.f32 %v2488, 1.442695
          %v2496 = vpow.pop %v2495
          %v2497 = vmul.f32 %v2489, 1.442695
          %v2498 = vpow.pop %v2497
          %v2499 = vmul.f32 %v2490, 1.442695
          %v2500 = vpow.pop %v2499
          %v2501 = vmul.f32 %v2491, 1.442695
          %v2502 = vpow.pop %v2501
          %v2503 = vmul.f32 %v2492, 1.442695
          %v2504 = vpow.pop %v2503
          %v2505 = vadd.f32 %v2494, 1.0
          %v2506 = vadd.f32 %v2496, 1.0
          %v2507 = vadd.f32 %v2498, 1.0
          %v2508 = vadd.f32 %v2500, 1.0
          %v2509 = vadd.f32 %v2502, 1.0
          %v2510 = vadd.f32 %v2504, 1.0
          %v2511 = vrcp.pop %v2505
          %v2512 = vmul.f32 1.0, %v2511
          %v2513 = vrcp.pop %v2506
          %v2514 = vmul.f32 1.0, %v2513
          %v2515 = vrcp.pop %v2507
          %v2516 = vmul.f32 1.0, %v2515
          %v2517 = vrcp.pop %v2508
          %v2518 = vmul.f32 1.0, %v2517
          %v2519 = vrcp.pop %v2509
          %v2520 = vmul.f32 1.0, %v2519
          %v2521 = vrcp.pop %v2510
          %v2522 = vmul.f32 1.0, %v2521
          %v2523 = vtanh.pop %v2482
          %v2524 = vtanh.pop %v2486
          %v2525 = vmul.f32 %v2514, %v1299
          %v2526 = vmul.f32 %v2520, %v1300
          %v2527 = vmul.f32 %v2512, %v2523
          %v2528 = vmul.f32 %v2518, %v2524
          %v2529 = vadd.f32 %v2525, %v2527
          %v2530 = vadd.f32 %v2526, %v2528
          %v2531 = vtanh.pop %v2529
          %v2532 = vtanh.pop %v2530
          %v2533 = vmul.f32 %v2516, %v2531
          %v2534 = vmul.f32 %v2522, %v2532
          %s2535 = smul.u32 %s1292, 64
          %v2536 = vpack.c.bf16 %v2534, %v2533
          %v2538 = vunpack.c.l.b16 %v2536
          %v2539 = vunpack.c.h.b16 %v2536
          %v2540 = vpack.c.b16 %v2538, %v2538
          %v2541 = vpack.c.b16 %v2539, %v2539
          %s2544 = sshra.s32 %s2535, 3
          %s2545 = sand.u32 %s2535, 7
          %s2546 = smul.addr %s2544, 4
          %s2547 = scalar_lea.vmem [#allocation3], %s2546
          %2548 = vst [vmem:[%s2547] sm:$0xf] %v2540
          %2549 = vst [vmem:[%s2547 + $0x4] sm:$0xf] %v2541
          %s2550 = smul.u32 2, 4
          %s2551 = sadd.s32 %s2550, %s2188
          %s2552 = smul.addr %s2551, 8
          %s2553 = scalar_lea.vmem [#allocation2], %s2552
          %v2554 = vld [vmem:[%s2553] sm:$0xff]
          %v2555 = vld [vmem:[%s2553 + $0x8] sm:$0xff]
          %v2556 = vld [vmem:[%s2553 + $0x10] sm:$0xff]
          %v2557 = vld [vmem:[%s2553 + $0x18] sm:$0xff]
          %v2558 = vld [vmem:[%s2553 + $0x20] sm:$0xff]
          %v2559 = vld [vmem:[%s2553 + $0x28] sm:$0xff]
          %v2560 = vld [vmem:[%s2553 + $0x30] sm:$0xff]
          %v2561 = vld [vmem:[%s2553 + $0x38] sm:$0xff]
          %v2562 = vld [vmem:[%s372] sm:$0xff]
          %v2563 = vld [vmem:[%s372 + $0x8] sm:$0xff]
          %v2564 = vld [vmem:[%s372 + $0x10] sm:$0xff]
          %v2565 = vld [vmem:[%s372 + $0x18] sm:$0xff]
          %v2566 = vld [vmem:[%s372 + $0x20] sm:$0xff]
          %v2567 = vld [vmem:[%s372 + $0x28] sm:$0xff]
          %v2568 = vld [vmem:[%s372 + $0x30] sm:$0xff]
          %v2569 = vld [vmem:[%s372 + $0x38] sm:$0xff]
          %v2570 = vld [vmem:[%s372 + $0x40] sm:$0xff]
          %v2571 = vld [vmem:[%s372 + $0x48] sm:$0xff]
          %v2572 = vld [vmem:[%s372 + $0x50] sm:$0xff]
          %v2573 = vld [vmem:[%s372 + $0x58] sm:$0xff]
          %v2574 = vld [vmem:[%s372 + $0x60] sm:$0xff]
          %v2575 = vld [vmem:[%s372 + $0x68] sm:$0xff]
          %v2576 = vld [vmem:[%s372 + $0x70] sm:$0xff]
          %v2577 = vld [vmem:[%s372 + $0x78] sm:$0xff]
          %v2578 = vld [vmem:[%s372 + $0x80] sm:$0xff]
          %v2579 = vld [vmem:[%s372 + $0x88] sm:$0xff]
          %v2580 = vld [vmem:[%s372 + $0x90] sm:$0xff]
          %v2581 = vld [vmem:[%s372 + $0x98] sm:$0xff]
          %v2582 = vld [vmem:[%s372 + $0xa0] sm:$0xff]
          %v2583 = vld [vmem:[%s372 + $0xa8] sm:$0xff]
          %v2584 = vld [vmem:[%s372 + $0xb0] sm:$0xff]
          %v2585 = vld [vmem:[%s372 + $0xb8] sm:$0xff]
          %v2586 = vld [vmem:[%s372 + $0xc0] sm:$0xff]
          %v2587 = vld [vmem:[%s372 + $0xc8] sm:$0xff]
          %v2588 = vld [vmem:[%s372 + $0xd0] sm:$0xff]
          %v2589 = vld [vmem:[%s372 + $0xd8] sm:$0xff]
          %v2590 = vld [vmem:[%s372 + $0xe0] sm:$0xff]
          %v2591 = vld [vmem:[%s372 + $0xe8] sm:$0xff]
          %v2592 = vld [vmem:[%s372 + $0xf0] sm:$0xff]
          %v2593 = vld [vmem:[%s372 + $0xf8] sm:$0xff]
          %v2626 = vunpack.c.l.b16 %v2562
          %v2627 = vunpack.c.h.b16 %v2562
          %v2628 = vunpack.c.l.b16 %v2563
          %v2629 = vunpack.c.h.b16 %v2563
          %v2630 = vunpack.c.l.b16 %v2564
          %v2631 = vunpack.c.h.b16 %v2564
          %v2632 = vunpack.c.l.b16 %v2565
          %v2633 = vunpack.c.h.b16 %v2565
          %v2634 = vunpack.c.l.b16 %v2566
          %v2635 = vunpack.c.h.b16 %v2566
          %v2636 = vunpack.c.l.b16 %v2567
          %v2637 = vunpack.c.h.b16 %v2567
          %v2638 = vunpack.c.l.b16 %v2568
          %v2639 = vunpack.c.h.b16 %v2568
          %v2640 = vunpack.c.l.b16 %v2569
          %v2641 = vunpack.c.h.b16 %v2569
          %v2642 = vunpack.c.l.b16 %v2570
          %v2643 = vunpack.c.h.b16 %v2570
          %v2644 = vunpack.c.l.b16 %v2571
          %v2645 = vunpack.c.h.b16 %v2571
          %v2646 = vunpack.c.l.b16 %v2572
          %v2647 = vunpack.c.h.b16 %v2572
          %v2648 = vunpack.c.l.b16 %v2573
          %v2649 = vunpack.c.h.b16 %v2573
          %v2650 = vunpack.c.l.b16 %v2574
          %v2651 = vunpack.c.h.b16 %v2574
          %v2652 = vunpack.c.l.b16 %v2575
          %v2653 = vunpack.c.h.b16 %v2575
          %v2654 = vunpack.c.l.b16 %v2576
          %v2655 = vunpack.c.h.b16 %v2576
          %v2656 = vunpack.c.l.b16 %v2577
          %v2657 = vunpack.c.h.b16 %v2577
          %v2658 = vunpack.c.l.b16 %v2578
          %v2659 = vunpack.c.h.b16 %v2578
          %v2660 = vunpack.c.l.b16 %v2579
          %v2661 = vunpack.c.h.b16 %v2579
          %v2662 = vunpack.c.l.b16 %v2580
          %v2663 = vunpack.c.h.b16 %v2580
          %v2664 = vunpack.c.l.b16 %v2581
          %v2665 = vunpack.c.h.b16 %v2581
          %v2666 = vunpack.c.l.b16 %v2582
          %v2667 = vunpack.c.h.b16 %v2582
          %v2668 = vunpack.c.l.b16 %v2583
          %v2669 = vunpack.c.h.b16 %v2583
          %v2670 = vunpack.c.l.b16 %v2584
          %v2671 = vunpack.c.h.b16 %v2584
          %v2672 = vunpack.c.l.b16 %v2585
          %v2673 = vunpack.c.h.b16 %v2585
          %v2674 = vunpack.c.l.b16 %v2586
          %v2675 = vunpack.c.h.b16 %v2586
          %v2676 = vunpack.c.l.b16 %v2587
          %v2677 = vunpack.c.h.b16 %v2587
          %v2678 = vunpack.c.l.b16 %v2588
          %v2679 = vunpack.c.h.b16 %v2588
          %v2680 = vunpack.c.l.b16 %v2589
          %v2681 = vunpack.c.h.b16 %v2589
          %v2682 = vunpack.c.l.b16 %v2590
          %v2683 = vunpack.c.h.b16 %v2590
          %v2684 = vunpack.c.l.b16 %v2591
          %v2685 = vunpack.c.h.b16 %v2591
          %v2686 = vunpack.c.l.b16 %v2592
          %v2687 = vunpack.c.h.b16 %v2592
          %v2688 = vunpack.c.l.b16 %v2593
          %v2689 = vunpack.c.h.b16 %v2593
          %v2690 = vpack.c.b16 %v2630, %v2626
          %v2691 = vpack.c.b16 %v2631, %v2627
          %v2692 = vpack.c.b16 %v2632, %v2628
          %v2693 = vpack.c.b16 %v2633, %v2629
          %v2694 = vpack.c.b16 %v2638, %v2634
          %v2695 = vpack.c.b16 %v2639, %v2635
          %v2696 = vpack.c.b16 %v2640, %v2636
          %v2697 = vpack.c.b16 %v2641, %v2637
          %v2698 = vpack.c.b16 %v2646, %v2642
          %v2699 = vpack.c.b16 %v2647, %v2643
          %v2700 = vpack.c.b16 %v2648, %v2644
          %v2701 = vpack.c.b16 %v2649, %v2645
          %v2702 = vpack.c.b16 %v2654, %v2650
          %v2703 = vpack.c.b16 %v2655, %v2651
          %v2704 = vpack.c.b16 %v2656, %v2652
          %v2705 = vpack.c.b16 %v2657, %v2653
          %v2706 = vpack.c.b16 %v2662, %v2658
          %v2707 = vpack.c.b16 %v2663, %v2659
          %v2708 = vpack.c.b16 %v2664, %v2660
          %v2709 = vpack.c.b16 %v2665, %v2661
          %v2710 = vpack.c.b16 %v2670, %v2666
          %v2711 = vpack.c.b16 %v2671, %v2667
          %v2712 = vpack.c.b16 %v2672, %v2668
          %v2713 = vpack.c.b16 %v2673, %v2669
          %v2714 = vpack.c.b16 %v2678, %v2674
          %v2715 = vpack.c.b16 %v2679, %v2675
          %v2716 = vpack.c.b16 %v2680, %v2676
          %v2717 = vpack.c.b16 %v2681, %v2677
          %v2718 = vpack.c.b16 %v2686, %v2682
          %v2719 = vpack.c.b16 %v2687, %v2683
          %v2720 = vpack.c.b16 %v2688, %v2684
          %v2721 = vpack.c.b16 %v2689, %v2685
          %2754 = vmatprep.subr.bf16.mxu0 %v2719
          %2755 = vmatpush1.bf16.msra.mxu0 %v2718
          %2756 = vmatprep.subr.bf16.mxu0 %v2715
          %2757 = vmatpush1.bf16.msra.mxu0 %v2714
          %2758 = vmatprep.subr.bf16.mxu0 %v2711
          %2759 = vmatpush1.bf16.msra.mxu0 %v2710
          %2760 = vmatprep.subr.bf16.mxu0 %v2707
          %2761 = vmatpush1.bf16.msra.mxu0 %v2706
          %2762 = vmatprep.subr.bf16.mxu0 %v2703
          %2763 = vmatpush1.bf16.msra.mxu0 %v2702
          %2764 = vmatprep.subr.bf16.mxu0 %v2699
          %2765 = vmatpush1.bf16.msra.mxu0 %v2698
          %2766 = vmatprep.subr.bf16.mxu0 %v2695
          %2767 = vmatpush1.bf16.msra.mxu0 %v2694
          %2768 = vmatprep.subr.bf16.mxu0 %v2691
          %2769 = vmatpush1.bf16.msra.mxu0 %v2690
          %2770 = vmatprep.subr.bf16.mxu0 0
          %2771 = vmatpush2.bf16.msra.mxu0 0
          %2772 = vmatprep.subr.bf16.mxu0 0
          %2773 = vmatpush2.bf16.msra.mxu0 0
          %2774 = vmatprep.subr.bf16.mxu0 0
          %2775 = vmatpush2.bf16.msra.mxu0 0
          %2776 = vmatprep.subr.bf16.mxu0 0
          %2777 = vmatpush2.bf16.msra.mxu0 0
          %2778 = vmatprep.subr.bf16.mxu0 0
          %2779 = vmatpush2.bf16.msra.mxu0 0
          %2780 = vmatprep.subr.bf16.mxu0 0
          %2781 = vmatpush2.bf16.msra.mxu0 0
          %2782 = vmatprep.subr.bf16.mxu0 0
          %2783 = vmatpush2.bf16.msra.mxu0 0
          %2784 = vmatprep.subr.bf16.mxu0 0
          %2785 = vmatpush2.bf16.msra.mxu0 0
          %2786 = vmatprep.mubr.bf16.mxu0 0
          %2787 = vmatmul.mubr.bf16.gmra.mxu0 %v2536
          %v2788 = vpop.f32.mrf.mxu0
          %v2789 = vadd.f32 0.0, %v2788
          %v2790 = vpop.f32.mrf.mxu0
          %v2791 = vadd.f32 0.0, %v2790
          %v2792 = vpop.f32.mrf.mxu0
          %v2793 = vadd.f32 0.0, %v2792
          %v2794 = vpop.f32.mrf.mxu0
          %v2795 = vadd.f32 0.0, %v2794
          %2796 = vdwg.mxu0
          %2797 = vmatprep.subr.bf16.mxu0 %v2721
          %2798 = vmatpush1.bf16.msra.mxu0 %v2720
          %2799 = vmatprep.subr.bf16.mxu0 %v2717
          %2800 = vmatpush1.bf16.msra.mxu0 %v2716
          %2801 = vmatprep.subr.bf16.mxu0 %v2713
          %2802 = vmatpush1.bf16.msra.mxu0 %v2712
          %2803 = vmatprep.subr.bf16.mxu0 %v2709
          %2804 = vmatpush1.bf16.msra.mxu0 %v2708
          %2805 = vmatprep.subr.bf16.mxu0 %v2705
          %2806 = vmatpush1.bf16.msra.mxu0 %v2704
          %2807 = vmatprep.subr.bf16.mxu0 %v2701
          %2808 = vmatpush1.bf16.msra.mxu0 %v2700
          %2809 = vmatprep.subr.bf16.mxu0 %v2697
          %2810 = vmatpush1.bf16.msra.mxu0 %v2696
          %2811 = vmatprep.subr.bf16.mxu0 %v2693
          %2812 = vmatpush1.bf16.msra.mxu0 %v2692
          %2813 = vmatprep.subr.bf16.mxu0 0
          %2814 = vmatpush2.bf16.msra.mxu0 0
          %2815 = vmatprep.subr.bf16.mxu0 0
          %2816 = vmatpush2.bf16.msra.mxu0 0
          %2817 = vmatprep.subr.bf16.mxu0 0
          %2818 = vmatpush2.bf16.msra.mxu0 0
          %2819 = vmatprep.subr.bf16.mxu0 0
          %2820 = vmatpush2.bf16.msra.mxu0 0
          %2821 = vmatprep.subr.bf16.mxu0 0
          %2822 = vmatpush2.bf16.msra.mxu0 0
          %2823 = vmatprep.subr.bf16.mxu0 0
          %2824 = vmatpush2.bf16.msra.mxu0 0
          %2825 = vmatprep.subr.bf16.mxu0 0
          %2826 = vmatpush2.bf16.msra.mxu0 0
          %2827 = vmatprep.subr.bf16.mxu0 0
          %2828 = vmatpush2.bf16.msra.mxu0 0
          %2829 = vmatprep.mubr.bf16.mxu0 0
          %2830 = vmatmul.mubr.bf16.gmra.mxu0 %v2536
          %v2831 = vpop.f32.mrf.mxu0
          %v2832 = vadd.f32 0.0, %v2831
          %v2833 = vpop.f32.mrf.mxu0
          %v2834 = vadd.f32 0.0, %v2833
          %v2835 = vpop.f32.mrf.mxu0
          %v2836 = vadd.f32 0.0, %v2835
          %v2837 = vpop.f32.mrf.mxu0
          %v2838 = vadd.f32 0.0, %v2837
          %2839 = vdwg.mxu0
          %v2840 = vadd.f32 %v2554, %v2789
          %v2841 = vadd.f32 %v2555, %v2791
          %v2842 = vadd.f32 %v2556, %v2832
          %v2843 = vadd.f32 %v2557, %v2834
          %v2844 = vadd.f32 %v2558, %v2793
          %v2845 = vadd.f32 %v2559, %v2795
          %v2846 = vadd.f32 %v2560, %v2836
          %v2847 = vadd.f32 %v2561, %v2838
          %v2848 = vxor.u32 %v2840, 2147483648
          %v2849 = vxor.u32 %v2841, 2147483648
          %v2850 = vxor.u32 %v2842, 2147483648
          %v2851 = vxor.u32 %v2844, 2147483648
          %v2852 = vxor.u32 %v2845, 2147483648
          %v2853 = vxor.u32 %v2846, 2147483648
          %v2854 = vmul.f32 %v2848, 1.442695
          %v2855 = vpow.pop %v2854
          %v2856 = vmul.f32 %v2849, 1.442695
          %v2857 = vpow.pop %v2856
          %v2858 = vmul.f32 %v2850, 1.442695
          %v2859 = vpow.pop %v2858
          %v2860 = vmul.f32 %v2851, 1.442695
          %v2861 = vpow.pop %v2860
          %v2862 = vmul.f32 %v2852, 1.442695
          %v2863 = vpow.pop %v2862
          %v2864 = vmul.f32 %v2853, 1.442695
          %v2865 = vpow.pop %v2864
          %v2866 = vadd.f32 %v2855, 1.0
          %v2867 = vadd.f32 %v2857, 1.0
          %v2868 = vadd.f32 %v2859, 1.0
          %v2869 = vadd.f32 %v2861, 1.0
          %v2870 = vadd.f32 %v2863, 1.0
          %v2871 = vadd.f32 %v2865, 1.0
          %v2872 = vrcp.pop %v2866
          %v2873 = vmul.f32 1.0, %v2872
          %v2874 = vrcp.pop %v2867
          %v2875 = vmul.f32 1.0, %v2874
          %v2876 = vrcp.pop %v2868
          %v2877 = vmul.f32 1.0, %v2876
          %v2878 = vrcp.pop %v2869
          %v2879 = vmul.f32 1.0, %v2878
          %v2880 = vrcp.pop %v2870
          %v2881 = vmul.f32 1.0, %v2880
          %v2882 = vrcp.pop %v2871
          %v2883 = vmul.f32 1.0, %v2882
          %v2884 = vtanh.pop %v2843
          %v2885 = vtanh.pop %v2847
          %v2886 = vmul.f32 %v2875, %v2529
          %v2887 = vmul.f32 %v2881, %v2530
          %v2888 = vmul.f32 %v2873, %v2884
          %v2889 = vmul.f32 %v2879, %v2885
          %v2890 = vadd.f32 %v2886, %v2888
          %v2891 = vadd.f32 %v2887, %v2889
          %v2892 = vtanh.pop %v2890
          %v2893 = vtanh.pop %v2891
          %v2894 = vmul.f32 %v2877, %v2892
          %v2895 = vmul.f32 %v2883, %v2893
          %s2896 = sadd.s32 %s2535, 16
          %v2897 = vpack.c.bf16 %v2895, %v2894
          %v2899 = vunpack.c.l.b16 %v2897
          %v2900 = vunpack.c.h.b16 %v2897
          %v2901 = vpack.c.b16 %v2899, %v2899
          %v2902 = vpack.c.b16 %v2900, %v2900
          %s2905 = sshra.s32 %s2896, 3
          %s2906 = sand.u32 %s2896, 7
          %s2907 = smul.addr %s2905, 4
          %s2908 = scalar_lea.vmem [#allocation3], %s2907
          %2909 = vst [vmem:[%s2908] sm:$0xf] %v2901
          %2910 = vst [vmem:[%s2908 + $0x4] sm:$0xf] %v2902
          %s2911 = smul.u32 4, 4
          %s2912 = sadd.s32 %s2911, %s2188
          %s2913 = smul.addr %s2912, 8
          %s2914 = scalar_lea.vmem [#allocation2], %s2913
          %v2915 = vld [vmem:[%s2914] sm:$0xff]
          %v2916 = vld [vmem:[%s2914 + $0x8] sm:$0xff]
          %v2917 = vld [vmem:[%s2914 + $0x10] sm:$0xff]
          %v2918 = vld [vmem:[%s2914 + $0x18] sm:$0xff]
          %v2919 = vld [vmem:[%s2914 + $0x20] sm:$0xff]
          %v2920 = vld [vmem:[%s2914 + $0x28] sm:$0xff]
          %v2921 = vld [vmem:[%s2914 + $0x30] sm:$0xff]
          %v2922 = vld [vmem:[%s2914 + $0x38] sm:$0xff]
          %v2923 = vld [vmem:[%s372] sm:$0xff]
          %v2924 = vld [vmem:[%s372 + $0x8] sm:$0xff]
          %v2925 = vld [vmem:[%s372 + $0x10] sm:$0xff]
          %v2926 = vld [vmem:[%s372 + $0x18] sm:$0xff]
          %v2927 = vld [vmem:[%s372 + $0x20] sm:$0xff]
          %v2928 = vld [vmem:[%s372 + $0x28] sm:$0xff]
          %v2929 = vld [vmem:[%s372 + $0x30] sm:$0xff]
          %v2930 = vld [vmem:[%s372 + $0x38] sm:$0xff]
          %v2931 = vld [vmem:[%s372 + $0x40] sm:$0xff]
          %v2932 = vld [vmem:[%s372 + $0x48] sm:$0xff]
          %v2933 = vld [vmem:[%s372 + $0x50] sm:$0xff]
          %v2934 = vld [vmem:[%s372 + $0x58] sm:$0xff]
          %v2935 = vld [vmem:[%s372 + $0x60] sm:$0xff]
          %v2936 = vld [vmem:[%s372 + $0x68] sm:$0xff]
          %v2937 = vld [vmem:[%s372 + $0x70] sm:$0xff]
          %v2938 = vld [vmem:[%s372 + $0x78] sm:$0xff]
          %v2939 = vld [vmem:[%s372 + $0x80] sm:$0xff]
          %v2940 = vld [vmem:[%s372 + $0x88] sm:$0xff]
          %v2941 = vld [vmem:[%s372 + $0x90] sm:$0xff]
          %v2942 = vld [vmem:[%s372 + $0x98] sm:$0xff]
          %v2943 = vld [vmem:[%s372 + $0xa0] sm:$0xff]
          %v2944 = vld [vmem:[%s372 + $0xa8] sm:$0xff]
          %v2945 = vld [vmem:[%s372 + $0xb0] sm:$0xff]
          %v2946 = vld [vmem:[%s372 + $0xb8] sm:$0xff]
          %v2947 = vld [vmem:[%s372 + $0xc0] sm:$0xff]
          %v2948 = vld [vmem:[%s372 + $0xc8] sm:$0xff]
          %v2949 = vld [vmem:[%s372 + $0xd0] sm:$0xff]
          %v2950 = vld [vmem:[%s372 + $0xd8] sm:$0xff]
          %v2951 = vld [vmem:[%s372 + $0xe0] sm:$0xff]
          %v2952 = vld [vmem:[%s372 + $0xe8] sm:$0xff]
          %v2953 = vld [vmem:[%s372 + $0xf0] sm:$0xff]
          %v2954 = vld [vmem:[%s372 + $0xf8] sm:$0xff]
          %v2987 = vunpack.c.l.b16 %v2923
          %v2988 = vunpack.c.h.b16 %v2923
          %v2989 = vunpack.c.l.b16 %v2924
          %v2990 = vunpack.c.h.b16 %v2924
          %v2991 = vunpack.c.l.b16 %v2925
          %v2992 = vunpack.c.h.b16 %v2925
          %v2993 = vunpack.c.l.b16 %v2926
          %v2994 = vunpack.c.h.b16 %v2926
          %v2995 = vunpack.c.l.b16 %v2927
          %v2996 = vunpack.c.h.b16 %v2927
          %v2997 = vunpack.c.l.b16 %v2928
          %v2998 = vunpack.c.h.b16 %v2928
          %v2999 = vunpack.c.l.b16 %v2929
          %v3000 = vunpack.c.h.b16 %v2929
          %v3001 = vunpack.c.l.b16 %v2930
          %v3002 = vunpack.c.h.b16 %v2930
          %v3003 = vunpack.c.l.b16 %v2931
          %v3004 = vunpack.c.h.b16 %v2931
          %v3005 = vunpack.c.l.b16 %v2932
          %v3006 = vunpack.c.h.b16 %v2932
          %v3007 = vunpack.c.l.b16 %v2933
          %v3008 = vunpack.c.h.b16 %v2933
          %v3009 = vunpack.c.l.b16 %v2934
          %v3010 = vunpack.c.h.b16 %v2934
          %v3011 = vunpack.c.l.b16 %v2935
          %v3012 = vunpack.c.h.b16 %v2935
          %v3013 = vunpack.c.l.b16 %v2936
          %v3014 = vunpack.c.h.b16 %v2936
          %v3015 = vunpack.c.l.b16 %v2937
          %v3016 = vunpack.c.h.b16 %v2937
          %v3017 = vunpack.c.l.b16 %v2938
          %v3018 = vunpack.c.h.b16 %v2938
          %v3019 = vunpack.c.l.b16 %v2939
          %v3020 = vunpack.c.h.b16 %v2939
          %v3021 = vunpack.c.l.b16 %v2940
          %v3022 = vunpack.c.h.b16 %v2940
          %v3023 = vunpack.c.l.b16 %v2941
          %v3024 = vunpack.c.h.b16 %v2941
          %v3025 = vunpack.c.l.b16 %v2942
          %v3026 = vunpack.c.h.b16 %v2942
          %v3027 = vunpack.c.l.b16 %v2943
          %v3028 = vunpack.c.h.b16 %v2943
          %v3029 = vunpack.c.l.b16 %v2944
          %v3030 = vunpack.c.h.b16 %v2944
          %v3031 = vunpack.c.l.b16 %v2945
          %v3032 = vunpack.c.h.b16 %v2945
          %v3033 = vunpack.c.l.b16 %v2946
          %v3034 = vunpack.c.h.b16 %v2946
          %v3035 = vunpack.c.l.b16 %v2947
          %v3036 = vunpack.c.h.b16 %v2947
          %v3037 = vunpack.c.l.b16 %v2948
          %v3038 = vunpack.c.h.b16 %v2948
          %v3039 = vunpack.c.l.b16 %v2949
          %v3040 = vunpack.c.h.b16 %v2949
          %v3041 = vunpack.c.l.b16 %v2950
          %v3042 = vunpack.c.h.b16 %v2950
          %v3043 = vunpack.c.l.b16 %v2951
          %v3044 = vunpack.c.h.b16 %v2951
          %v3045 = vunpack.c.l.b16 %v2952
          %v3046 = vunpack.c.h.b16 %v2952
          %v3047 = vunpack.c.l.b16 %v2953
          %v3048 = vunpack.c.h.b16 %v2953
          %v3049 = vunpack.c.l.b16 %v2954
          %v3050 = vunpack.c.h.b16 %v2954
          %v3051 = vpack.c.b16 %v2991, %v2987
          %v3052 = vpack.c.b16 %v2992, %v2988
          %v3053 = vpack.c.b16 %v2993, %v2989
          %v3054 = vpack.c.b16 %v2994, %v2990
          %v3055 = vpack.c.b16 %v2999, %v2995
          %v3056 = vpack.c.b16 %v3000, %v2996
          %v3057 = vpack.c.b16 %v3001, %v2997
          %v3058 = vpack.c.b16 %v3002, %v2998
          %v3059 = vpack.c.b16 %v3007, %v3003
          %v3060 = vpack.c.b16 %v3008, %v3004
          %v3061 = vpack.c.b16 %v3009, %v3005
          %v3062 = vpack.c.b16 %v3010, %v3006
          %v3063 = vpack.c.b16 %v3015, %v3011
          %v3064 = vpack.c.b16 %v3016, %v3012
          %v3065 = vpack.c.b16 %v3017, %v3013
          %v3066 = vpack.c.b16 %v3018, %v3014
          %v3067 = vpack.c.b16 %v3023, %v3019
          %v3068 = vpack.c.b16 %v3024, %v3020
          %v3069 = vpack.c.b16 %v3025, %v3021
          %v3070 = vpack.c.b16 %v3026, %v3022
          %v3071 = vpack.c.b16 %v3031, %v3027
          %v3072 = vpack.c.b16 %v3032, %v3028
          %v3073 = vpack.c.b16 %v3033, %v3029
          %v3074 = vpack.c.b16 %v3034, %v3030
          %v3075 = vpack.c.b16 %v3039, %v3035
          %v3076 = vpack.c.b16 %v3040, %v3036
          %v3077 = vpack.c.b16 %v3041, %v3037
          %v3078 = vpack.c.b16 %v3042, %v3038
          %v3079 = vpack.c.b16 %v3047, %v3043
          %v3080 = vpack.c.b16 %v3048, %v3044
          %v3081 = vpack.c.b16 %v3049, %v3045
          %v3082 = vpack.c.b16 %v3050, %v3046
          %3115 = vmatprep.subr.bf16.mxu0 %v3080
          %3116 = vmatpush1.bf16.msra.mxu0 %v3079
          %3117 = vmatprep.subr.bf16.mxu0 %v3076
          %3118 = vmatpush1.bf16.msra.mxu0 %v3075
          %3119 = vmatprep.subr.bf16.mxu0 %v3072
          %3120 = vmatpush1.bf16.msra.mxu0 %v3071
          %3121 = vmatprep.subr.bf16.mxu0 %v3068
          %3122 = vmatpush1.bf16.msra.mxu0 %v3067
          %3123 = vmatprep.subr.bf16.mxu0 %v3064
          %3124 = vmatpush1.bf16.msra.mxu0 %v3063
          %3125 = vmatprep.subr.bf16.mxu0 %v3060
          %3126 = vmatpush1.bf16.msra.mxu0 %v3059
          %3127 = vmatprep.subr.bf16.mxu0 %v3056
          %3128 = vmatpush1.bf16.msra.mxu0 %v3055
          %3129 = vmatprep.subr.bf16.mxu0 %v3052
          %3130 = vmatpush1.bf16.msra.mxu0 %v3051
          %3131 = vmatprep.subr.bf16.mxu0 0
          %3132 = vmatpush2.bf16.msra.mxu0 0
          %3133 = vmatprep.subr.bf16.mxu0 0
          %3134 = vmatpush2.bf16.msra.mxu0 0
          %3135 = vmatprep.subr.bf16.mxu0 0
          %3136 = vmatpush2.bf16.msra.mxu0 0
          %3137 = vmatprep.subr.bf16.mxu0 0
          %3138 = vmatpush2.bf16.msra.mxu0 0
          %3139 = vmatprep.subr.bf16.mxu0 0
          %3140 = vmatpush2.bf16.msra.mxu0 0
          %3141 = vmatprep.subr.bf16.mxu0 0
          %3142 = vmatpush2.bf16.msra.mxu0 0
          %3143 = vmatprep.subr.bf16.mxu0 0
          %3144 = vmatpush2.bf16.msra.mxu0 0
          %3145 = vmatprep.subr.bf16.mxu0 0
          %3146 = vmatpush2.bf16.msra.mxu0 0
          %3147 = vmatprep.mubr.bf16.mxu0 0
          %3148 = vmatmul.mubr.bf16.gmra.mxu0 %v2897
          %v3149 = vpop.f32.mrf.mxu0
          %v3150 = vadd.f32 0.0, %v3149
          %v3151 = vpop.f32.mrf.mxu0
          %v3152 = vadd.f32 0.0, %v3151
          %v3153 = vpop.f32.mrf.mxu0
          %v3154 = vadd.f32 0.0, %v3153
          %v3155 = vpop.f32.mrf.mxu0
          %v3156 = vadd.f32 0.0, %v3155
          %3157 = vdwg.mxu0
          %3158 = vmatprep.subr.bf16.mxu0 %v3082
          %3159 = vmatpush1.bf16.msra.mxu0 %v3081
          %3160 = vmatprep.subr.bf16.mxu0 %v3078
          %3161 = vmatpush1.bf16.msra.mxu0 %v3077
          %3162 = vmatprep.subr.bf16.mxu0 %v3074
          %3163 = vmatpush1.bf16.msra.mxu0 %v3073
          %3164 = vmatprep.subr.bf16.mxu0 %v3070
          %3165 = vmatpush1.bf16.msra.mxu0 %v3069
          %3166 = vmatprep.subr.bf16.mxu0 %v3066
          %3167 = vmatpush1.bf16.msra.mxu0 %v3065
          %3168 = vmatprep.subr.bf16.mxu0 %v3062
          %3169 = vmatpush1.bf16.msra.mxu0 %v3061
          %3170 = vmatprep.subr.bf16.mxu0 %v3058
          %3171 = vmatpush1.bf16.msra.mxu0 %v3057
          %3172 = vmatprep.subr.bf16.mxu0 %v3054
          %3173 = vmatpush1.bf16.msra.mxu0 %v3053
          %3174 = vmatprep.subr.bf16.mxu0 0
          %3175 = vmatpush2.bf16.msra.mxu0 0
          %3176 = vmatprep.subr.bf16.mxu0 0
          %3177 = vmatpush2.bf16.msra.mxu0 0
          %3178 = vmatprep.subr.bf16.mxu0 0
          %3179 = vmatpush2.bf16.msra.mxu0 0
          %3180 = vmatprep.subr.bf16.mxu0 0
          %3181 = vmatpush2.bf16.msra.mxu0 0
          %3182 = vmatprep.subr.bf16.mxu0 0
          %3183 = vmatpush2.bf16.msra.mxu0 0
          %3184 = vmatprep.subr.bf16.mxu0 0
          %3185 = vmatpush2.bf16.msra.mxu0 0
          %3186 = vmatprep.subr.bf16.mxu0 0
          %3187 = vmatpush2.bf16.msra.mxu0 0
          %3188 = vmatprep.subr.bf16.mxu0 0
          %3189 = vmatpush2.bf16.msra.mxu0 0
          %3190 = vmatprep.mubr.bf16.mxu0 0
          %3191 = vmatmul.mubr.bf16.gmra.mxu0 %v2897
          %v3192 = vpop.f32.mrf.mxu0
          %v3193 = vadd.f32 0.0, %v3192
          %v3194 = vpop.f32.mrf.mxu0
          %v3195 = vadd.f32 0.0, %v3194
          %v3196 = vpop.f32.mrf.mxu0
          %v3197 = vadd.f32 0.0, %v3196
          %v3198 = vpop.f32.mrf.mxu0
          %v3199 = vadd.f32 0.0, %v3198
          %3200 = vdwg.mxu0
          %v3201 = vadd.f32 %v2915, %v3150
          %v3202 = vadd.f32 %v2916, %v3152
          %v3203 = vadd.f32 %v2917, %v3193
          %v3204 = vadd.f32 %v2918, %v3195
          %v3205 = vadd.f32 %v2919, %v3154
          %v3206 = vadd.f32 %v2920, %v3156
          %v3207 = vadd.f32 %v2921, %v3197
          %v3208 = vadd.f32 %v2922, %v3199
          %v3209 = vxor.u32 %v3201, 2147483648
          %v3210 = vxor.u32 %v3202, 2147483648
          %v3211 = vxor.u32 %v3203, 2147483648
          %v3212 = vxor.u32 %v3205, 2147483648
          %v3213 = vxor.u32 %v3206, 2147483648
          %v3214 = vxor.u32 %v3207, 2147483648
          %v3215 = vmul.f32 %v3209, 1.442695
          %v3216 = vpow.pop %v3215
          %v3217 = vmul.f32 %v3210, 1.442695
          %v3218 = vpow.pop %v3217
          %v3219 = vmul.f32 %v3211, 1.442695
          %v3220 = vpow.pop %v3219
          %v3221 = vmul.f32 %v3212, 1.442695
          %v3222 = vpow.pop %v3221
          %v3223 = vmul.f32 %v3213, 1.442695
          %v3224 = vpow.pop %v3223
          %v3225 = vmul.f32 %v3214, 1.442695
          %v3226 = vpow.pop %v3225
          %v3227 = vadd.f32 %v3216, 1.0
          %v3228 = vadd.f32 %v3218, 1.0
          %v3229 = vadd.f32 %v3220, 1.0
          %v3230 = vadd.f32 %v3222, 1.0
          %v3231 = vadd.f32 %v3224, 1.0
          %v3232 = vadd.f32 %v3226, 1.0
          %v3233 = vrcp.pop %v3227
          %v3234 = vmul.f32 1.0, %v3233
          %v3235 = vrcp.pop %v3228
          %v3236 = vmul.f32 1.0, %v3235
          %v3237 = vrcp.pop %v3229
          %v3238 = vmul.f32 1.0, %v3237
          %v3239 = vrcp.pop %v3230
          %v3240 = vmul.f32 1.0, %v3239
          %v3241 = vrcp.pop %v3231
          %v3242 = vmul.f32 1.0, %v3241
          %v3243 = vrcp.pop %v3232
          %v3244 = vmul.f32 1.0, %v3243
          %v3245 = vtanh.pop %v3204
          %v3246 = vtanh.pop %v3208
          %v3247 = vmul.f32 %v3236, %v2890
          %v3248 = vmul.f32 %v3242, %v2891
          %v3249 = vmul.f32 %v3234, %v3245
          %v3250 = vmul.f32 %v3240, %v3246
          %v3251 = vadd.f32 %v3247, %v3249
          %v3252 = vadd.f32 %v3248, %v3250
          %v3253 = vtanh.pop %v3251
          %v3254 = vtanh.pop %v3252
          %v3255 = vmul.f32 %v3238, %v3253
          %v3256 = vmul.f32 %v3244, %v3254
          %s3257 = sadd.s32 %s2535, 32
          %v3258 = vpack.c.bf16 %v3256, %v3255
          %v3260 = vunpack.c.l.b16 %v3258
          %v3261 = vunpack.c.h.b16 %v3258
          %v3262 = vpack.c.b16 %v3260, %v3260
          %v3263 = vpack.c.b16 %v3261, %v3261
          %s3266 = sshra.s32 %s3257, 3
          %s3267 = sand.u32 %s3257, 7
          %s3268 = smul.addr %s3266, 4
          %s3269 = scalar_lea.vmem [#allocation3], %s3268
          %3270 = vst [vmem:[%s3269] sm:$0xf] %v3262
          %3271 = vst [vmem:[%s3269 + $0x4] sm:$0xf] %v3263
          %s3272 = smul.u32 6, 4
          %s3273 = sadd.s32 %s3272, %s2188
          %s3274 = smul.addr %s3273, 8
          %s3275 = scalar_lea.vmem [#allocation2], %s3274
          %v3276 = vld [vmem:[%s3275] sm:$0xff]
          %v3277 = vld [vmem:[%s3275 + $0x8] sm:$0xff]
          %v3278 = vld [vmem:[%s3275 + $0x10] sm:$0xff]
          %v3279 = vld [vmem:[%s3275 + $0x18] sm:$0xff]
          %v3280 = vld [vmem:[%s3275 + $0x20] sm:$0xff]
          %v3281 = vld [vmem:[%s3275 + $0x28] sm:$0xff]
          %v3282 = vld [vmem:[%s3275 + $0x30] sm:$0xff]
          %v3283 = vld [vmem:[%s3275 + $0x38] sm:$0xff]
          %v3284 = vld [vmem:[%s372] sm:$0xff]
          %v3285 = vld [vmem:[%s372 + $0x8] sm:$0xff]
          %v3286 = vld [vmem:[%s372 + $0x10] sm:$0xff]
          %v3287 = vld [vmem:[%s372 + $0x18] sm:$0xff]
          %v3288 = vld [vmem:[%s372 + $0x20] sm:$0xff]
          %v3289 = vld [vmem:[%s372 + $0x28] sm:$0xff]
          %v3290 = vld [vmem:[%s372 + $0x30] sm:$0xff]
          %v3291 = vld [vmem:[%s372 + $0x38] sm:$0xff]
          %v3292 = vld [vmem:[%s372 + $0x40] sm:$0xff]
          %v3293 = vld [vmem:[%s372 + $0x48] sm:$0xff]
          %v3294 = vld [vmem:[%s372 + $0x50] sm:$0xff]
          %v3295 = vld [vmem:[%s372 + $0x58] sm:$0xff]
          %v3296 = vld [vmem:[%s372 + $0x60] sm:$0xff]
          %v3297 = vld [vmem:[%s372 + $0x68] sm:$0xff]
          %v3298 = vld [vmem:[%s372 + $0x70] sm:$0xff]
          %v3299 = vld [vmem:[%s372 + $0x78] sm:$0xff]
          %v3300 = vld [vmem:[%s372 + $0x80] sm:$0xff]
          %v3301 = vld [vmem:[%s372 + $0x88] sm:$0xff]
          %v3302 = vld [vmem:[%s372 + $0x90] sm:$0xff]
          %v3303 = vld [vmem:[%s372 + $0x98] sm:$0xff]
          %v3304 = vld [vmem:[%s372 + $0xa0] sm:$0xff]
          %v3305 = vld [vmem:[%s372 + $0xa8] sm:$0xff]
          %v3306 = vld [vmem:[%s372 + $0xb0] sm:$0xff]
          %v3307 = vld [vmem:[%s372 + $0xb8] sm:$0xff]
          %v3308 = vld [vmem:[%s372 + $0xc0] sm:$0xff]
          %v3309 = vld [vmem:[%s372 + $0xc8] sm:$0xff]
          %v3310 = vld [vmem:[%s372 + $0xd0] sm:$0xff]
          %v3311 = vld [vmem:[%s372 + $0xd8] sm:$0xff]
          %v3312 = vld [vmem:[%s372 + $0xe0] sm:$0xff]
          %v3313 = vld [vmem:[%s372 + $0xe8] sm:$0xff]
          %v3314 = vld [vmem:[%s372 + $0xf0] sm:$0xff]
          %v3315 = vld [vmem:[%s372 + $0xf8] sm:$0xff]
          %v3348 = vunpack.c.l.b16 %v3284
          %v3349 = vunpack.c.h.b16 %v3284
          %v3350 = vunpack.c.l.b16 %v3285
          %v3351 = vunpack.c.h.b16 %v3285
          %v3352 = vunpack.c.l.b16 %v3286
          %v3353 = vunpack.c.h.b16 %v3286
          %v3354 = vunpack.c.l.b16 %v3287
          %v3355 = vunpack.c.h.b16 %v3287
          %v3356 = vunpack.c.l.b16 %v3288
          %v3357 = vunpack.c.h.b16 %v3288
          %v3358 = vunpack.c.l.b16 %v3289
          %v3359 = vunpack.c.h.b16 %v3289
          %v3360 = vunpack.c.l.b16 %v3290
          %v3361 = vunpack.c.h.b16 %v3290
          %v3362 = vunpack.c.l.b16 %v3291
          %v3363 = vunpack.c.h.b16 %v3291
          %v3364 = vunpack.c.l.b16 %v3292
          %v3365 = vunpack.c.h.b16 %v3292
          %v3366 = vunpack.c.l.b16 %v3293
          %v3367 = vunpack.c.h.b16 %v3293
          %v3368 = vunpack.c.l.b16 %v3294
          %v3369 = vunpack.c.h.b16 %v3294
          %v3370 = vunpack.c.l.b16 %v3295
          %v3371 = vunpack.c.h.b16 %v3295
          %v3372 = vunpack.c.l.b16 %v3296
          %v3373 = vunpack.c.h.b16 %v3296
          %v3374 = vunpack.c.l.b16 %v3297
          %v3375 = vunpack.c.h.b16 %v3297
          %v3376 = vunpack.c.l.b16 %v3298
          %v3377 = vunpack.c.h.b16 %v3298
          %v3378 = vunpack.c.l.b16 %v3299
          %v3379 = vunpack.c.h.b16 %v3299
          %v3380 = vunpack.c.l.b16 %v3300
          %v3381 = vunpack.c.h.b16 %v3300
          %v3382 = vunpack.c.l.b16 %v3301
          %v3383 = vunpack.c.h.b16 %v3301
          %v3384 = vunpack.c.l.b16 %v3302
          %v3385 = vunpack.c.h.b16 %v3302
          %v3386 = vunpack.c.l.b16 %v3303
          %v3387 = vunpack.c.h.b16 %v3303
          %v3388 = vunpack.c.l.b16 %v3304
          %v3389 = vunpack.c.h.b16 %v3304
          %v3390 = vunpack.c.l.b16 %v3305
          %v3391 = vunpack.c.h.b16 %v3305
          %v3392 = vunpack.c.l.b16 %v3306
          %v3393 = vunpack.c.h.b16 %v3306
          %v3394 = vunpack.c.l.b16 %v3307
          %v3395 = vunpack.c.h.b16 %v3307
          %v3396 = vunpack.c.l.b16 %v3308
          %v3397 = vunpack.c.h.b16 %v3308
          %v3398 = vunpack.c.l.b16 %v3309
          %v3399 = vunpack.c.h.b16 %v3309
          %v3400 = vunpack.c.l.b16 %v3310
          %v3401 = vunpack.c.h.b16 %v3310
          %v3402 = vunpack.c.l.b16 %v3311
          %v3403 = vunpack.c.h.b16 %v3311
          %v3404 = vunpack.c.l.b16 %v3312
          %v3405 = vunpack.c.h.b16 %v3312
          %v3406 = vunpack.c.l.b16 %v3313
          %v3407 = vunpack.c.h.b16 %v3313
          %v3408 = vunpack.c.l.b16 %v3314
          %v3409 = vunpack.c.h.b16 %v3314
          %v3410 = vunpack.c.l.b16 %v3315
          %v3411 = vunpack.c.h.b16 %v3315
          %v3412 = vpack.c.b16 %v3352, %v3348
          %v3413 = vpack.c.b16 %v3353, %v3349
          %v3414 = vpack.c.b16 %v3354, %v3350
          %v3415 = vpack.c.b16 %v3355, %v3351
          %v3416 = vpack.c.b16 %v3360, %v3356
          %v3417 = vpack.c.b16 %v3361, %v3357
          %v3418 = vpack.c.b16 %v3362, %v3358
          %v3419 = vpack.c.b16 %v3363, %v3359
          %v3420 = vpack.c.b16 %v3368, %v3364
          %v3421 = vpack.c.b16 %v3369, %v3365
          %v3422 = vpack.c.b16 %v3370, %v3366
          %v3423 = vpack.c.b16 %v3371, %v3367
          %v3424 = vpack.c.b16 %v3376, %v3372
          %v3425 = vpack.c.b16 %v3377, %v3373
          %v3426 = vpack.c.b16 %v3378, %v3374
          %v3427 = vpack.c.b16 %v3379, %v3375
          %v3428 = vpack.c.b16 %v3384, %v3380
          %v3429 = vpack.c.b16 %v3385, %v3381
          %v3430 = vpack.c.b16 %v3386, %v3382
          %v3431 = vpack.c.b16 %v3387, %v3383
          %v3432 = vpack.c.b16 %v3392, %v3388
          %v3433 = vpack.c.b16 %v3393, %v3389
          %v3434 = vpack.c.b16 %v3394, %v3390
          %v3435 = vpack.c.b16 %v3395, %v3391
          %v3436 = vpack.c.b16 %v3400, %v3396
          %v3437 = vpack.c.b16 %v3401, %v3397
          %v3438 = vpack.c.b16 %v3402, %v3398
          %v3439 = vpack.c.b16 %v3403, %v3399
          %v3440 = vpack.c.b16 %v3408, %v3404
          %v3441 = vpack.c.b16 %v3409, %v3405
          %v3442 = vpack.c.b16 %v3410, %v3406
          %v3443 = vpack.c.b16 %v3411, %v3407
          %3476 = vmatprep.subr.bf16.mxu0 %v3441
          %3477 = vmatpush1.bf16.msra.mxu0 %v3440
          %3478 = vmatprep.subr.bf16.mxu0 %v3437
          %3479 = vmatpush1.bf16.msra.mxu0 %v3436
          %3480 = vmatprep.subr.bf16.mxu0 %v3433
          %3481 = vmatpush1.bf16.msra.mxu0 %v3432
          %3482 = vmatprep.subr.bf16.mxu0 %v3429
          %3483 = vmatpush1.bf16.msra.mxu0 %v3428
          %3484 = vmatprep.subr.bf16.mxu0 %v3425
          %3485 = vmatpush1.bf16.msra.mxu0 %v3424
          %3486 = vmatprep.subr.bf16.mxu0 %v3421
          %3487 = vmatpush1.bf16.msra.mxu0 %v3420
          %3488 = vmatprep.subr.bf16.mxu0 %v3417
          %3489 = vmatpush1.bf16.msra.mxu0 %v3416
          %3490 = vmatprep.subr.bf16.mxu0 %v3413
          %3491 = vmatpush1.bf16.msra.mxu0 %v3412
          %3492 = vmatprep.subr.bf16.mxu0 0
          %3493 = vmatpush2.bf16.msra.mxu0 0
          %3494 = vmatprep.subr.bf16.mxu0 0
          %3495 = vmatpush2.bf16.msra.mxu0 0
          %3496 = vmatprep.subr.bf16.mxu0 0
          %3497 = vmatpush2.bf16.msra.mxu0 0
          %3498 = vmatprep.subr.bf16.mxu0 0
          %3499 = vmatpush2.bf16.msra.mxu0 0
          %3500 = vmatprep.subr.bf16.mxu0 0
          %3501 = vmatpush2.bf16.msra.mxu0 0
          %3502 = vmatprep.subr.bf16.mxu0 0
          %3503 = vmatpush2.bf16.msra.mxu0 0
          %3504 = vmatprep.subr.bf16.mxu0 0
          %3505 = vmatpush2.bf16.msra.mxu0 0
          %3506 = vmatprep.subr.bf16.mxu0 0
          %3507 = vmatpush2.bf16.msra.mxu0 0
          %3508 = vmatprep.mubr.bf16.mxu0 0
          %3509 = vmatmul.mubr.bf16.gmra.mxu0 %v3258
          %v3510 = vpop.f32.mrf.mxu0
          %v3511 = vadd.f32 0.0, %v3510
          %v3512 = vpop.f32.mrf.mxu0
          %v3513 = vadd.f32 0.0, %v3512
          %v3514 = vpop.f32.mrf.mxu0
          %v3515 = vadd.f32 0.0, %v3514
          %v3516 = vpop.f32.mrf.mxu0
          %v3517 = vadd.f32 0.0, %v3516
          %3518 = vdwg.mxu0
          %3519 = vmatprep.subr.bf16.mxu0 %v3443
          %3520 = vmatpush1.bf16.msra.mxu0 %v3442
          %3521 = vmatprep.subr.bf16.mxu0 %v3439
          %3522 = vmatpush1.bf16.msra.mxu0 %v3438
          %3523 = vmatprep.subr.bf16.mxu0 %v3435
          %3524 = vmatpush1.bf16.msra.mxu0 %v3434
          %3525 = vmatprep.subr.bf16.mxu0 %v3431
          %3526 = vmatpush1.bf16.msra.mxu0 %v3430
          %3527 = vmatprep.subr.bf16.mxu0 %v3427
          %3528 = vmatpush1.bf16.msra.mxu0 %v3426
          %3529 = vmatprep.subr.bf16.mxu0 %v3423
          %3530 = vmatpush1.bf16.msra.mxu0 %v3422
          %3531 = vmatprep.subr.bf16.mxu0 %v3419
          %3532 = vmatpush1.bf16.msra.mxu0 %v3418
          %3533 = vmatprep.subr.bf16.mxu0 %v3415
          %3534 = vmatpush1.bf16.msra.mxu0 %v3414
          %3535 = vmatprep.subr.bf16.mxu0 0
          %3536 = vmatpush2.bf16.msra.mxu0 0
          %3537 = vmatprep.subr.bf16.mxu0 0
          %3538 = vmatpush2.bf16.msra.mxu0 0
          %3539 = vmatprep.subr.bf16.mxu0 0
          %3540 = vmatpush2.bf16.msra.mxu0 0
          %3541 = vmatprep.subr.bf16.mxu0 0
          %3542 = vmatpush2.bf16.msra.mxu0 0
          %3543 = vmatprep.subr.bf16.mxu0 0
          %3544 = vmatpush2.bf16.msra.mxu0 0
          %3545 = vmatprep.subr.bf16.mxu0 0
          %3546 = vmatpush2.bf16.msra.mxu0 0
          %3547 = vmatprep.subr.bf16.mxu0 0
          %3548 = vmatpush2.bf16.msra.mxu0 0
          %3549 = vmatprep.subr.bf16.mxu0 0
          %3550 = vmatpush2.bf16.msra.mxu0 0
          %3551 = vmatprep.mubr.bf16.mxu0 0
          %3552 = vmatmul.mubr.bf16.gmra.mxu0 %v3258
          %v3553 = vpop.f32.mrf.mxu0
          %v3554 = vadd.f32 0.0, %v3553
          %v3555 = vpop.f32.mrf.mxu0
          %v3556 = vadd.f32 0.0, %v3555
          %v3557 = vpop.f32.mrf.mxu0
          %v3558 = vadd.f32 0.0, %v3557
          %v3559 = vpop.f32.mrf.mxu0
          %v3560 = vadd.f32 0.0, %v3559
          %3561 = vdwg.mxu0
          %v3562 = vadd.f32 %v3276, %v3511
          %v3563 = vadd.f32 %v3277, %v3513
          %v3564 = vadd.f32 %v3278, %v3554
          %v3565 = vadd.f32 %v3279, %v3556
          %v3566 = vadd.f32 %v3280, %v3515
          %v3567 = vadd.f32 %v3281, %v3517
          %v3568 = vadd.f32 %v3282, %v3558
          %v3569 = vadd.f32 %v3283, %v3560
          %v3570 = vxor.u32 %v3562, 2147483648
          %v3571 = vxor.u32 %v3563, 2147483648
          %v3572 = vxor.u32 %v3564, 2147483648
          %v3573 = vxor.u32 %v3566, 2147483648
          %v3574 = vxor.u32 %v3567, 2147483648
          %v3575 = vxor.u32 %v3568, 2147483648
          %v3576 = vmul.f32 %v3570, 1.442695
          %v3577 = vpow.pop %v3576
          %v3578 = vmul.f32 %v3571, 1.442695
          %v3579 = vpow.pop %v3578
          %v3580 = vmul.f32 %v3572, 1.442695
          %v3581 = vpow.pop %v3580
          %v3582 = vmul.f32 %v3573, 1.442695
          %v3583 = vpow.pop %v3582
          %v3584 = vmul.f32 %v3574, 1.442695
          %v3585 = vpow.pop %v3584
          %v3586 = vmul.f32 %v3575, 1.442695
          %v3587 = vpow.pop %v3586
          %v3588 = vadd.f32 %v3577, 1.0
          %v3589 = vadd.f32 %v3579, 1.0
          %v3590 = vadd.f32 %v3581, 1.0
          %v3591 = vadd.f32 %v3583, 1.0
          %v3592 = vadd.f32 %v3585, 1.0
          %v3593 = vadd.f32 %v3587, 1.0
          %v3594 = vrcp.pop %v3588
          %v3595 = vmul.f32 1.0, %v3594
          %v3596 = vrcp.pop %v3589
          %v3597 = vmul.f32 1.0, %v3596
          %v3598 = vrcp.pop %v3590
          %v3599 = vmul.f32 1.0, %v3598
          %v3600 = vrcp.pop %v3591
          %v3601 = vmul.f32 1.0, %v3600
          %v3602 = vrcp.pop %v3592
          %v3603 = vmul.f32 1.0, %v3602
          %v3604 = vrcp.pop %v3593
          %v3605 = vmul.f32 1.0, %v3604
          %v3606 = vtanh.pop %v3565
          %v3607 = vtanh.pop %v3569
          %v3608 = vmul.f32 %v3597, %v3251
          %v3609 = vmul.f32 %v3603, %v3252
          %v3610 = vmul.f32 %v3595, %v3606
          %v3611 = vmul.f32 %v3601, %v3607
          %v3612 = vadd.f32 %v3608, %v3610
          %v3613 = vadd.f32 %v3609, %v3611
          %v3614 = vtanh.pop %v3612
          %v3615 = vtanh.pop %v3613
          %v3616 = vmul.f32 %v3599, %v3614
          %v3617 = vmul.f32 %v3605, %v3615
          %s3618 = sadd.s32 %s2535, 48
          %v3619 = vpack.c.bf16 %v3617, %v3616
          %v3621 = vunpack.c.l.b16 %v3619
          %v3622 = vunpack.c.h.b16 %v3619
          %v3623 = vpack.c.b16 %v3621, %v3621
          %v3624 = vpack.c.b16 %v3622, %v3622
          %s3627 = sshra.s32 %s3618, 3
          %s3628 = sand.u32 %s3618, 7
          %s3629 = smul.addr %s3627, 4
          %s3630 = scalar_lea.vmem [#allocation3], %s3629
          %3631 = vst [vmem:[%s3630] sm:$0xf] %v3623
          %3632 = vst [vmem:[%s3630 + $0x4] sm:$0xf] %v3624
        $region73: #{tpu_custom_call.1} parent=39 // loop_footer
          %s1296 = sadd.s32 1, %s1292
        $region74: #{tpu_custom_call.1} parent=39 // loop_footer_branch
          %1291 = sbr.rel target = $region70
        $region75: #{tpu_custom_call.1} parent=39 // loop_exit
          _
        %3633 = vst [vmem:[%s422] sm:$0xff] %v1297
        %3634 = vst [vmem:[%s422 + $0x8] sm:$0xff] %v1298
        %3635 = vst [vmem:[%s429] sm:$0xff] %v1299
        %3636 = vst [vmem:[%s429 + $0x8] sm:$0xff] %v1300
        %s3637 = sand.u32 %s181, 1
        %s3638 = scalar_lea.sflag [#allocation6], %s3637
        %s3639 = sand.u32 %s181, 1
        %s3640 = smul.addr %s3639, 16
        %s3641 = scalar_lea.vmem [#allocation12], %s3640
        %s3642 = sand.u32 %s209, 1
        %s3643 = scalar_lea.sflag [#allocation14], %s3642
        %s3644 = sand.u32 %s209, 1
        %s3645 = smul.addr %s3644, 16
        %s3646 = scalar_lea.vmem [#allocation13], %s3645
        // Predicated region
        $region88: #{tpu_custom_call.1} parent=39 // pred_check
          %p3647 = pneg %p191
        $region89: #{tpu_custom_call.1} parent=39 // pred_check_branch
          %3649 = sbr.rel (%p3647) target = $region91
        $region90: #{tpu_custom_call.1} parent=39 // pred_region
          %s3650 = smul.u32 2, %s32
          %s3652 = ssub.s32 256, 256
          %3653 = vsyncadd %s3638, %s3652
          %s3654 = smul.addr %s33, 4
          %s3655 = sadd.s32 %s3650, %s3654
          %s3656 = smul.addr %s3655, 128
          %s3657 = scalar_lea.hbm %s5, %s3656
          %s3658 = sshll.u32 %s3641, 4
          %s3659 = int_to_ptr.vmem [resolvable:$true] %s3658
          %3664 = dma.vmem_to_hbm [thread:$0]  %s3659, 256, %s3657, %s3638, 128, 128, 8
        $region91: #{tpu_custom_call.1} parent=39 // pred_fallthru
          _
        // Predicated region
        $region92: #{tpu_custom_call.1} parent=39 // pred_check
          %p3665 = pneg %p219
        $region93: #{tpu_custom_call.1} parent=39 // pred_check_branch
          %3667 = sbr.rel (%p3665) target = $region95
        $region94: #{tpu_custom_call.1} parent=39 // pred_region
          %s3668 = smul.u32 2, %s32
          %s3670 = ssub.s32 256, 256
          %3671 = vsyncadd %s3643, %s3670
          %s3672 = smul.addr %s33, 4
          %s3673 = sadd.s32 %s3668, %s3672
          %s3674 = smul.addr %s3673, 128
          %s3675 = scalar_lea.hbm %s6, %s3674
          %s3676 = sshll.u32 %s3646, 4
          %s3677 = int_to_ptr.vmem [resolvable:$true] %s3676
          %3682 = dma.vmem_to_hbm [thread:$0]  %s3677, 256, %s3675, %s3643, 128, 128, 8
        $region95: #{tpu_custom_call.1} parent=39 // pred_fallthru
          _
      $region40: #{tpu_custom_call.1} parent=5 // pred_fallthru
        _
      %p3683 = scmp.le.s32.totalorder 2, %s23
      // Predicated region
      $region96: #{tpu_custom_call.1} parent=5 // pred_check
        %p3684 = pneg %p3683
      $region97: #{tpu_custom_call.1} parent=5 // pred_check_branch
        %3686 = sbr.rel (%p3684) target = $region99
      $region98: #{tpu_custom_call.1} parent=5 // pred_region
        %s3687 = ssub.s32 %s23, 2
        // Predicated region
        $region100: #{tpu_custom_call.1} parent=98 // pred_check
          %p3688 = pneg %p197
        $region101: #{tpu_custom_call.1} parent=98 // pred_check_branch
          %3690 = sbr.rel (%p3688) target = $region103
        $region102: #{tpu_custom_call.1} parent=98 // pred_region
          %s3691 = sand.u32 %s182, 1
          %s3692 = scalar_lea.sflag [#allocation6], %s3691
          %s3693 = sand.u32 %s182, 1
          %s3694 = smul.addr %s3693, 16
          %s3695 = scalar_lea.vmem [#allocation12], %s3694
          %3696 = dma.done %s3692, 256
        $region103: #{tpu_custom_call.1} parent=98 // pred_fallthru
          _
        // Predicated region
        $region104: #{tpu_custom_call.1} parent=98 // pred_check
          %p3697 = pneg %p225
        $region105: #{tpu_custom_call.1} parent=98 // pred_check_branch
          %3699 = sbr.rel (%p3697) target = $region107
        $region106: #{tpu_custom_call.1} parent=98 // pred_region
          %s3700 = sand.u32 %s210, 1
          %s3701 = scalar_lea.sflag [#allocation14], %s3700
          %s3702 = sand.u32 %s210, 1
          %s3703 = smul.addr %s3702, 16
          %s3704 = scalar_lea.vmem [#allocation13], %s3703
          %3705 = dma.done %s3701, 256
        $region107: #{tpu_custom_call.1} parent=98 // pred_fallthru
          _
      $region99: #{tpu_custom_call.1} parent=5 // pred_fallthru
        _
    $region6: #{tpu_custom_call.1} parent=1 // loop_footer
      %s27 = sadd.s32 1, %s23
    $region7: #{tpu_custom_call.1} parent=1 // loop_footer_branch
      %22 = sbr.rel target = $region3
    $region8: #{tpu_custom_call.1} parent=1 // loop_exit
      _
    %3706 = vsyncpa [#allocation5], 1
    %s3707 = scalar_lea.sflag [#allocation5], 1
    %3708 = vsyncpa %s3707, 1
    %3709 = vsyncpa [#allocation8], 1
    %3710 = vsyncpa [#allocation6], 1
    %s3711 = scalar_lea.sflag [#allocation6], 1
    %3712 = vsyncpa %s3711, 1
    %3713 = vsyncpa [#allocation14], 1
    %s3714 = scalar_lea.sflag [#allocation14], 1
    %3715 = vsyncpa %s3714, 1

</llo_original>
